<compile_context>
chip_gen: v7x
topology: tpu7x:2x2x1
jax: 0.10.0
libtpu: 0.0.40
codegen_flags: <defaults>
</compile_context>

<pallas_src>
import functools

import jax
import jax.numpy as jnp
from jax import lax
from jax.experimental import pallas as pl
from jax.experimental.pallas import tpu as pltpu

_HI = lax.Precision.HIGHEST


# -----------------------------------------------------------------------------
# Pallas kernel: LSTM recurrence + LayerNorm + ReLU + FC  (single grid point)
# -----------------------------------------------------------------------------
def _eye_state_lstm32_kernel(
    xg_ref,      # (T, Bp, 4H) f32  precomputed x@W_ih + (b_ih+b_hh), gates (i,f,o,g)
    whh_ref,     # (4H, 4H)    f32  recurrent weights, rows >= H are zero (padded K)
    pblk_ref,    # (PR, 128)   f32  packed: row0 gamma, row1 beta, row2 fc_b,
                 #                  rows 3..3+C-1 = fc_w (C, H)
    out_ref,     # (Bp, C)     f32
    *, T, H, C,
):
    Bp = out_ref.shape[0]
    G = 4 * H

    whh = whh_ref[...]                                   # hoisted weight load

    # Lane mask for the fused activation pass:
    #   lanes [0,3H)  -> i,f,o : sigmoid(x) = 0.5*tanh(0.5x) + 0.5
    #   lanes [3H,4H) -> g     : tanh(x)
    lane = lax.broadcasted_iota(jnp.int32, (Bp, G), 1)
    halfm = jnp.where(lane < 3 * H, 0.5, 1.0).astype(jnp.float32)
    offs = 1.0 - halfm                                    # 0.5 on sigmoid lanes

    c = jnp.zeros((Bp, G), jnp.float32)
    h = jnp.zeros((Bp, G), jnp.float32)

    # Fully unrolled recurrence; one (Bp,4H)x(4H,4H) matmul per step on the chain.
    for t in range(T):
        if t == 0:
            gates = xg_ref[0]                             # h == 0: skip matmul
        else:
            gates = xg_ref[t] + jnp.dot(
                h, whh, preferred_element_type=jnp.float32, precision=_HI)
        # Single full-vreg transcendental pass (EUP) covering all 4 gates.
        ga = jnp.tanh(gates * halfm) * halfm + offs       # i|f|o sigmoid, g tanh
        # Realign f/o/g chunks onto lanes [0,H) via XLU rolls (no lane slices).
        f_g = pltpu.roll(ga, 3 * H, 1)                    # f chunk -> lanes [0,H)
        o_g = pltpu.roll(ga, 2 * H, 1)                    # o chunk -> lanes [0,H)
        g_g = pltpu.roll(ga, 1 * H, 1)                    # g chunk -> lanes [0,H)
        c = f_g * c + ga * g_g                            # lanes [0,H) are real
        h = o_g * jnp.tanh(c)                             # padded lanes bounded

    # --- Head: only the real H lanes of the final hidden state --------------
    hH = h[:, :H]                                         # one-time lane extract
    mean = jnp.mean(hH, axis=-1, keepdims=True)
    var = jnp.mean((hH - mean) ** 2, axis=-1, keepdims=True)
    gamma = pblk_ref[0:1, :H]
    beta = pblk_ref[1:2, :H]
    ln = (hH - mean) * lax.rsqrt(var + 1e-5) * gamma + beta
    relu = jnp.maximum(ln, 0.0)

    fcw = pblk_ref[3:3 + C, :H]                           # (C, H) torch layout
    fcb = pblk_ref[2:3, :C]                               # (1, C)
    out_ref[...] = lax.dot_general(
        relu, fcw, (((1,), (1,)), ((), ())),              # relu @ fcw.T
        precision=_HI, preferred_element_type=jnp.float32) + fcb


# -----------------------------------------------------------------------------
# Wrapper
# -----------------------------------------------------------------------------
@functools.partial(jax.jit, static_argnames=("num_classes",))
def eye_state_lstm_32(x, kp, *, num_classes):
    """x: (B, T, input_size) float32 (batch_first, PyTorch convention)."""
    B, T, _ = x.shape
    G = kp["whh_pad"].shape[0]
    H = G // 4
    C = num_classes
    Bp = max(8, ((B + 7) // 8) * 8)                       # sublane-aligned batch

    # One fused matmul for the input projection of ALL timesteps (time-major).
    xg = jnp.einsum("bti,ig->tbg", x.astype(jnp.float32), kp["wih"],
                    precision=_HI) + kp["b"]              # (T, B, 4H)
    xg = jnp.pad(xg, ((0, 0), (0, Bp - B), (0, 0)))       # (T, Bp, 4H)

    kernel = functools.partial(_eye_state_lstm32_kernel, T=T, H=H, C=C)
    vmem = pl.BlockSpec(memory_space=pltpu.MemorySpace.VMEM)
    out = pl.pallas_call(
        kernel,
        out_shape=jax.ShapeDtypeStruct((Bp, C), jnp.float32),
        in_specs=[vmem, vmem, vmem],
        out_specs=vmem,
    )(xg, kp["whh_pad"], kp["pblk"])
    return out[:B]


# -----------------------------------------------------------------------------
# PyTorch-layout parameter init (uniform(-1/sqrt(H),1/sqrt(H)), gate order ifgo)
# -----------------------------------------------------------------------------
def init_torch_params(key, input_size, hidden, num_classes):
    H = hidden
    bound = 1.0 / float(H) ** 0.5
    k = jax.random.split(key, 6)

    def u(kk, shape, bnd):
        return jax.random.uniform(kk, shape, jnp.float32, -bnd, bnd)

    return dict(
        w_ih=u(k[0], (4 * H, input_size), bound),   # (4H, I), rows = i,f,g,o
        w_hh=u(k[1], (4 * H, H), bound),            # (4H, H)
        b_ih=u(k[2], (4 * H,), bound),
        b_hh=u(k[3], (4 * H,), bound),
        gamma=jnp.ones((H,), jnp.float32),          # LayerNorm weight
        beta=jnp.zeros((H,), jnp.float32),          # LayerNorm bias
        fc_w=u(k[4], (num_classes, H), bound),      # (C, H)
        fc_b=u(k[5], (num_classes,), bound),
    )


def prepare_kernel_params(p):
    """x@W layout, folded biases, gate perm (i,f,g,o)->(i,f,o,g), padded W_hh,
    and a single packed (8,128)-aligned block for the small head parameters."""
    H = p["w_hh"].shape[1]
    C = p["fc_w"].shape[0]
    G = 4 * H
    assert H <= 128 and C <= 128

    perm = jnp.concatenate([
        jnp.arange(0, H),            # i
        jnp.arange(H, 2 * H),        # f
        jnp.arange(3 * H, 4 * H),    # o
        jnp.arange(2 * H, 3 * H),    # g
    ])

    wih = p["w_ih"].T[:, perm]                           # (I, 4H)
    b = (p["b_ih"] + p["b_hh"])[perm]                    # (4H,)
    whh = p["w_hh"].T[:, perm]                           # (H, 4H)
    whh_pad = jnp.zeros((G, G), jnp.float32).at[:H, :].set(whh)   # padded K

    PR = ((3 + C + 7) // 8) * 8
    pblk = jnp.zeros((PR, 128), jnp.float32)
    pblk = pblk.at[0, :H].set(p["gamma"])
    pblk = pblk.at[1, :H].set(p["beta"])
    pblk = pblk.at[2, :C].set(p["fc_b"])
    pblk = pblk.at[3:3 + C, :H].set(p["fc_w"])

    return dict(wih=wih, b=b, whh_pad=whh_pad, pblk=pblk)


# -----------------------------------------------------------------------------
# Pure-JAX reference in PyTorch layout / gate order (numerical sanity check)
# -----------------------------------------------------------------------------
def reference_forward(x, p):
    B, T, _ = x.shape
    H = p["w_hh"].shape[1]
    wih = p["w_ih"].T
    whh = p["w_hh"].T
    b = p["b_ih"] + p["b_hh"]

    def cell(carry, xt):
        h, c = carry
        gates = (jnp.dot(xt, wih, precision=_HI)
                 + jnp.dot(h, whh, precision=_HI) + b)
        i = jax.nn.sigmoid(gates[:, 0 * H:1 * H])
        f = jax.nn.sigmoid(gates[:, 1 * H:2 * H])
        g = jnp.tanh(gates[:, 2 * H:3 * H])
        o = jax.nn.sigmoid(gates[:, 3 * H:4 * H])
        c = f * c + i * g
        h = o * jnp.tanh(c)
        return (h, c), None

    z = jnp.zeros((B, H), jnp.float32)
    (h, _), _ = lax.scan(cell, (z, z), jnp.transpose(x, (1, 0, 2)))

    mean = jnp.mean(h, axis=-1, keepdims=True)
    var = jnp.mean((h - mean) ** 2, axis=-1, keepdims=True)
    ln = (h - mean) * lax.rsqrt(var + 1e-5) * p["gamma"] + p["beta"]
    act = jnp.maximum(ln, 0.0)
    return jnp.dot(act, p["fc_w"].T, precision=_HI) + p["fc_b"]


if __name__ == "__main__":
    B, T = 2, 8
    INPUT_SIZE = 16
    HIDDEN_SIZE = 128            # module: LSTM hidden = hidden_size - 96 = 32
    NUM_CLASSES = 2
    H = HIDDEN_SIZE - 96

    key = jax.random.PRNGKey(0)
    k_x, k_p = jax.random.split(key)
    x = jax.random.normal(k_x, (B, T, INPUT_SIZE), jnp.float32)

    torch_params = init_torch_params(k_p, INPUT_SIZE, H, NUM_CLASSES)
    kparams = prepare_kernel_params(torch_params)

    out = eye_state_lstm_32(x, kparams, num_classes=NUM_CLASSES)
    out = jax.block_until_ready(out)

    ref = reference_forward(x, torch_params)
    assert out.shape == (B, NUM_CLASSES)
    assert jnp.allclose(out, ref, rtol=1e-3, atol=1e-3), (out, ref)

    print("KERNEL_OK")
</pallas_src>

<mosaic_0001>
module attributes {stable_mosaic.version = 11 : i64} {
  func.func @_eye_state_lstm32_kernel(%arg0: memref<8x8x128xf32, #tpu.memory_space<vmem>>, %arg1: memref<128x128xf32, #tpu.memory_space<vmem>>, %arg2: memref<8x128xf32, #tpu.memory_space<vmem>>, %arg3: memref<8x2xf32, #tpu.memory_space<vmem>>) attributes {dimension_semantics = [], scalar_prefetch = 0 : i64, scratch_operands = 0 : i64, tpu.core_type = #tpu.core_type<tc>} {
    %c0 = arith.constant 0 : index
    %c0_0 = arith.constant 0 : index
    %0 = vector.load %arg1[%c0, %c0_0] : memref<128x128xf32, #tpu.memory_space<vmem>>, vector<128x128xf32>
    %1 = tpu.iota {dimensions = array<i32: 1>} : vector<8x128xi32>
    %c96_i32 = arith.constant 96 : i32
    %2 = vector.broadcast %c96_i32 : i32 to vector<8x128xi32>
    %3 = arith.cmpi slt, %1, %2 : vector<8x128xi32>
    %cst = arith.constant 5.000000e-01 : f32
    %cst_1 = arith.constant 1.000000e+00 : f32
    %4 = vector.broadcast %cst : f32 to vector<8x128xf32>
    %5 = vector.broadcast %cst_1 : f32 to vector<8x128xf32>
    %6 = arith.select %3, %4, %5 : vector<8x128xi1>, vector<8x128xf32>
    %cst_2 = arith.constant 1.000000e+00 : f32
    %7 = vector.broadcast %cst_2 : f32 to vector<8x128xf32>
    %8 = arith.subf %7, %6 : vector<8x128xf32>
    %cst_3 = arith.constant 0.000000e+00 : f32
    %9 = vector.broadcast %cst_3 : f32 to vector<8x128xf32>
    %c0_4 = arith.constant 0 : index
    %c0_5 = arith.constant 0 : index
    %c0_6 = arith.constant 0 : index
    %10 = vector.load %arg0[%c0_4, %c0_5, %c0_6] : memref<8x8x128xf32, #tpu.memory_space<vmem>>, vector<1x8x128xf32>
    %11 = vector.shape_cast %10 : vector<1x8x128xf32> to vector<8x128xf32>
    %12 = arith.mulf %11, %6 : vector<8x128xf32>
    %13 = math.tanh %12 : vector<8x128xf32>
    %14 = arith.mulf %13, %6 : vector<8x128xf32>
    %15 = arith.addf %14, %8 : vector<8x128xf32>
    %c96_i32_7 = arith.constant 96 : i32
    %16 = tpu.dynamic_rotate %15 by %c96_i32_7 dim 1 : vector<8x128xf32>, i32 -> vector<8x128xf32>
    %c64_i32 = arith.constant 64 : i32
    %17 = tpu.dynamic_rotate %15 by %c64_i32 dim 1 : vector<8x128xf32>, i32 -> vector<8x128xf32>
    %c32_i32 = arith.constant 32 : i32
    %18 = tpu.dynamic_rotate %15 by %c32_i32 dim 1 : vector<8x128xf32>, i32 -> vector<8x128xf32>
    %19 = arith.mulf %16, %9 : vector<8x128xf32>
    %20 = arith.mulf %15, %18 : vector<8x128xf32>
    %21 = arith.addf %19, %20 : vector<8x128xf32>
    %22 = math.tanh %21 : vector<8x128xf32>
    %23 = arith.mulf %17, %22 : vector<8x128xf32>
    %c1 = arith.constant 1 : index
    %c0_8 = arith.constant 0 : index
    %c0_9 = arith.constant 0 : index
    %24 = vector.load %arg0[%c1, %c0_8, %c0_9] : memref<8x8x128xf32, #tpu.memory_space<vmem>>, vector<1x8x128xf32>
    %25 = vector.shape_cast %24 : vector<1x8x128xf32> to vector<8x128xf32>
    %cst_10 = arith.constant dense<0.000000e+00> : vector<8x128xf32>
    %26 = tpu.matmul %23, %0, %cst_10 {dimension_numbers = #tpu.dot_dimension_numbers<[1], [0], [0], [1], [0, 0, 1, 1], [], []>, precision = #tpu.contract_precision<fp32>} : vector<8x128xf32>, vector<128x128xf32>, vector<8x128xf32> -> vector<8x128xf32>
    %27 = arith.addf %25, %26 : vector<8x128xf32>
    %28 = arith.mulf %27, %6 : vector<8x128xf32>
    %29 = math.tanh %28 : vector<8x128xf32>
    %30 = arith.mulf %29, %6 : vector<8x128xf32>
    %31 = arith.addf %30, %8 : vector<8x128xf32>
    %c96_i32_11 = arith.constant 96 : i32
    %32 = tpu.dynamic_rotate %31 by %c96_i32_11 dim 1 : vector<8x128xf32>, i32 -> vector<8x128xf32>
    %c64_i32_12 = arith.constant 64 : i32
    %33 = tpu.dynamic_rotate %31 by %c64_i32_12 dim 1 : vector<8x128xf32>, i32 -> vector<8x128xf32>
    %c32_i32_13 = arith.constant 32 : i32
    %34 = tpu.dynamic_rotate %31 by %c32_i32_13 dim 1 : vector<8x128xf32>, i32 -> vector<8x128xf32>
    %35 = arith.mulf %32, %21 : vector<8x128xf32>
    %36 = arith.mulf %31, %34 : vector<8x128xf32>
    %37 = arith.addf %35, %36 : vector<8x128xf32>
    %38 = math.tanh %37 : vector<8x128xf32>
    %39 = arith.mulf %33, %38 : vector<8x128xf32>
    %c2 = arith.constant 2 : index
    %c0_14 = arith.constant 0 : index
    %c0_15 = arith.constant 0 : index
    %40 = vector.load %arg0[%c2, %c0_14, %c0_15] : memref<8x8x128xf32, #tpu.memory_space<vmem>>, vector<1x8x128xf32>
    %41 = vector.shape_cast %40 : vector<1x8x128xf32> to vector<8x128xf32>
    %cst_16 = arith.constant dense<0.000000e+00> : vector<8x128xf32>
    %42 = tpu.matmul %39, %0, %cst_16 {dimension_numbers = #tpu.dot_dimension_numbers<[1], [0], [0], [1], [0, 0, 1, 1], [], []>, precision = #tpu.contract_precision<fp32>} : vector<8x128xf32>, vector<128x128xf32>, vector<8x128xf32> -> vector<8x128xf32>
    %43 = arith.addf %41, %42 : vector<8x128xf32>
    %44 = arith.mulf %43, %6 : vector<8x128xf32>
    %45 = math.tanh %44 : vector<8x128xf32>
    %46 = arith.mulf %45, %6 : vector<8x128xf32>
    %47 = arith.addf %46, %8 : vector<8x128xf32>
    %c96_i32_17 = arith.constant 96 : i32
    %48 = tpu.dynamic_rotate %47 by %c96_i32_17 dim 1 : vector<8x128xf32>, i32 -> vector<8x128xf32>
    %c64_i32_18 = arith.constant 64 : i32
    %49 = tpu.dynamic_rotate %47 by %c64_i32_18 dim 1 : vector<8x128xf32>, i32 -> vector<8x128xf32>
    %c32_i32_19 = arith.constant 32 : i32
    %50 = tpu.dynamic_rotate %47 by %c32_i32_19 dim 1 : vector<8x128xf32>, i32 -> vector<8x128xf32>
    %51 = arith.mulf %48, %37 : vector<8x128xf32>
    %52 = arith.mulf %47, %50 : vector<8x128xf32>
    %53 = arith.addf %51, %52 : vector<8x128xf32>
    %54 = math.tanh %53 : vector<8x128xf32>
    %55 = arith.mulf %49, %54 : vector<8x128xf32>
    %c3 = arith.constant 3 : index
    %c0_20 = arith.constant 0 : index
    %c0_21 = arith.constant 0 : index
    %56 = vector.load %arg0[%c3, %c0_20, %c0_21] : memref<8x8x128xf32, #tpu.memory_space<vmem>>, vector<1x8x128xf32>
    %57 = vector.shape_cast %56 : vector<1x8x128xf32> to vector<8x128xf32>
    %cst_22 = arith.constant dense<0.000000e+00> : vector<8x128xf32>
    %58 = tpu.matmul %55, %0, %cst_22 {dimension_numbers = #tpu.dot_dimension_numbers<[1], [0], [0], [1], [0, 0, 1, 1], [], []>, precision = #tpu.contract_precision<fp32>} : vector<8x128xf32>, vector<128x128xf32>, vector<8x128xf32> -> vector<8x128xf32>
    %59 = arith.addf %57, %58 : vector<8x128xf32>
    %60 = arith.mulf %59, %6 : vector<8x128xf32>
    %61 = math.tanh %60 : vector<8x128xf32>
    %62 = arith.mulf %61, %6 : vector<8x128xf32>
    %63 = arith.addf %62, %8 : vector<8x128xf32>
    %c96_i32_23 = arith.constant 96 : i32
    %64 = tpu.dynamic_rotate %63 by %c96_i32_23 dim 1 : vector<8x128xf32>, i32 -> vector<8x128xf32>
    %c64_i32_24 = arith.constant 64 : i32
    %65 = tpu.dynamic_rotate %63 by %c64_i32_24 dim 1 : vector<8x128xf32>, i32 -> vector<8x128xf32>
    %c32_i32_25 = arith.constant 32 : i32
    %66 = tpu.dynamic_rotate %63 by %c32_i32_25 dim 1 : vector<8x128xf32>, i32 -> vector<8x128xf32>
    %67 = arith.mulf %64, %53 : vector<8x128xf32>
    %68 = arith.mulf %63, %66 : vector<8x128xf32>
    %69 = arith.addf %67, %68 : vector<8x128xf32>
    %70 = math.tanh %69 : vector<8x128xf32>
    %71 = arith.mulf %65, %70 : vector<8x128xf32>
    %c4 = arith.constant 4 : index
    %c0_26 = arith.constant 0 : index
    %c0_27 = arith.constant 0 : index
    %72 = vector.load %arg0[%c4, %c0_26, %c0_27] : memref<8x8x128xf32, #tpu.memory_space<vmem>>, vector<1x8x128xf32>
    %73 = vector.shape_cast %72 : vector<1x8x128xf32> to vector<8x128xf32>
    %cst_28 = arith.constant dense<0.000000e+00> : vector<8x128xf32>
    %74 = tpu.matmul %71, %0, %cst_28 {dimension_numbers = #tpu.dot_dimension_numbers<[1], [0], [0], [1], [0, 0, 1, 1], [], []>, precision = #tpu.contract_precision<fp32>} : vector<8x128xf32>, vector<128x128xf32>, vector<8x128xf32> -> vector<8x128xf32>
    %75 = arith.addf %73, %74 : vector<8x128xf32>
    %76 = arith.mulf %75, %6 : vector<8x128xf32>
    %77 = math.tanh %76 : vector<8x128xf32>
    %78 = arith.mulf %77, %6 : vector<8x128xf32>
    %79 = arith.addf %78, %8 : vector<8x128xf32>
    %c96_i32_29 = arith.constant 96 : i32
    %80 = tpu.dynamic_rotate %79 by %c96_i32_29 dim 1 : vector<8x128xf32>, i32 -> vector<8x128xf32>
    %c64_i32_30 = arith.constant 64 : i32
    %81 = tpu.dynamic_rotate %79 by %c64_i32_30 dim 1 : vector<8x128xf32>, i32 -> vector<8x128xf32>
    %c32_i32_31 = arith.constant 32 : i32
    %82 = tpu.dynamic_rotate %79 by %c32_i32_31 dim 1 : vector<8x128xf32>, i32 -> vector<8x128xf32>
    %83 = arith.mulf %80, %69 : vector<8x128xf32>
    %84 = arith.mulf %79, %82 : vector<8x128xf32>
    %85 = arith.addf %83, %84 : vector<8x128xf32>
    %86 = math.tanh %85 : vector<8x128xf32>
    %87 = arith.mulf %81, %86 : vector<8x128xf32>
    %c5 = arith.constant 5 : index
    %c0_32 = arith.constant 0 : index
    %c0_33 = arith.constant 0 : index
    %88 = vector.load %arg0[%c5, %c0_32, %c0_33] : memref<8x8x128xf32, #tpu.memory_space<vmem>>, vector<1x8x128xf32>
    %89 = vector.shape_cast %88 : vector<1x8x128xf32> to vector<8x128xf32>
    %cst_34 = arith.constant dense<0.000000e+00> : vector<8x128xf32>
    %90 = tpu.matmul %87, %0, %cst_34 {dimension_numbers = #tpu.dot_dimension_numbers<[1], [0], [0], [1], [0, 0, 1, 1], [], []>, precision = #tpu.contract_precision<fp32>} : vector<8x128xf32>, vector<128x128xf32>, vector<8x128xf32> -> vector<8x128xf32>
    %91 = arith.addf %89, %90 : vector<8x128xf32>
    %92 = arith.mulf %91, %6 : vector<8x128xf32>
    %93 = math.tanh %92 : vector<8x128xf32>
    %94 = arith.mulf %93, %6 : vector<8x128xf32>
    %95 = arith.addf %94, %8 : vector<8x128xf32>
    %c96_i32_35 = arith.constant 96 : i32
    %96 = tpu.dynamic_rotate %95 by %c96_i32_35 dim 1 : vector<8x128xf32>, i32 -> vector<8x128xf32>
    %c64_i32_36 = arith.constant 64 : i32
    %97 = tpu.dynamic_rotate %95 by %c64_i32_36 dim 1 : vector<8x128xf32>, i32 -> vector<8x128xf32>
    %c32_i32_37 = arith.constant 32 : i32
    %98 = tpu.dynamic_rotate %95 by %c32_i32_37 dim 1 : vector<8x128xf32>, i32 -> vector<8x128xf32>
    %99 = arith.mulf %96, %85 : vector<8x128xf32>
    %100 = arith.mulf %95, %98 : vector<8x128xf32>
    %101 = arith.addf %99, %100 : vector<8x128xf32>
    %102 = math.tanh %101 : vector<8x128xf32>
    %103 = arith.mulf %97, %102 : vector<8x128xf32>
    %c6 = arith.constant 6 : index
    %c0_38 = arith.constant 0 : index
    %c0_39 = arith.constant 0 : index
    %104 = vector.load %arg0[%c6, %c0_38, %c0_39] : memref<8x8x128xf32, #tpu.memory_space<vmem>>, vector<1x8x128xf32>
    %105 = vector.shape_cast %104 : vector<1x8x128xf32> to vector<8x128xf32>
    %cst_40 = arith.constant dense<0.000000e+00> : vector<8x128xf32>
    %106 = tpu.matmul %103, %0, %cst_40 {dimension_numbers = #tpu.dot_dimension_numbers<[1], [0], [0], [1], [0, 0, 1, 1], [], []>, precision = #tpu.contract_precision<fp32>} : vector<8x128xf32>, vector<128x128xf32>, vector<8x128xf32> -> vector<8x128xf32>
    %107 = arith.addf %105, %106 : vector<8x128xf32>
    %108 = arith.mulf %107, %6 : vector<8x128xf32>
    %109 = math.tanh %108 : vector<8x128xf32>
    %110 = arith.mulf %109, %6 : vector<8x128xf32>
    %111 = arith.addf %110, %8 : vector<8x128xf32>
    %c96_i32_41 = arith.constant 96 : i32
    %112 = tpu.dynamic_rotate %111 by %c96_i32_41 dim 1 : vector<8x128xf32>, i32 -> vector<8x128xf32>
    %c64_i32_42 = arith.constant 64 : i32
    %113 = tpu.dynamic_rotate %111 by %c64_i32_42 dim 1 : vector<8x128xf32>, i32 -> vector<8x128xf32>
    %c32_i32_43 = arith.constant 32 : i32
    %114 = tpu.dynamic_rotate %111 by %c32_i32_43 dim 1 : vector<8x128xf32>, i32 -> vector<8x128xf32>
    %115 = arith.mulf %112, %101 : vector<8x128xf32>
    %116 = arith.mulf %111, %114 : vector<8x128xf32>
    %117 = arith.addf %115, %116 : vector<8x128xf32>
    %118 = math.tanh %117 : vector<8x128xf32>
    %119 = arith.mulf %113, %118 : vector<8x128xf32>
    %c7 = arith.constant 7 : index
    %c0_44 = arith.constant 0 : index
    %c0_45 = arith.constant 0 : index
    %120 = vector.load %arg0[%c7, %c0_44, %c0_45] : memref<8x8x128xf32, #tpu.memory_space<vmem>>, vector<1x8x128xf32>
    %121 = vector.shape_cast %120 : vector<1x8x128xf32> to vector<8x128xf32>
    %cst_46 = arith.constant dense<0.000000e+00> : vector<8x128xf32>
    %122 = tpu.matmul %119, %0, %cst_46 {dimension_numbers = #tpu.dot_dimension_numbers<[1], [0], [0], [1], [0, 0, 1, 1], [], []>, precision = #tpu.contract_precision<fp32>} : vector<8x128xf32>, vector<128x128xf32>, vector<8x128xf32> -> vector<8x128xf32>
    %123 = arith.addf %121, %122 : vector<8x128xf32>
    %124 = arith.mulf %123, %6 : vector<8x128xf32>
    %125 = math.tanh %124 : vector<8x128xf32>
    %126 = arith.mulf %125, %6 : vector<8x128xf32>
    %127 = arith.addf %126, %8 : vector<8x128xf32>
    %c96_i32_47 = arith.constant 96 : i32
    %128 = tpu.dynamic_rotate %127 by %c96_i32_47 dim 1 : vector<8x128xf32>, i32 -> vector<8x128xf32>
    %c64_i32_48 = arith.constant 64 : i32
    %129 = tpu.dynamic_rotate %127 by %c64_i32_48 dim 1 : vector<8x128xf32>, i32 -> vector<8x128xf32>
    %c32_i32_49 = arith.constant 32 : i32
    %130 = tpu.dynamic_rotate %127 by %c32_i32_49 dim 1 : vector<8x128xf32>, i32 -> vector<8x128xf32>
    %131 = arith.mulf %128, %117 : vector<8x128xf32>
    %132 = arith.mulf %127, %130 : vector<8x128xf32>
    %133 = arith.addf %131, %132 : vector<8x128xf32>
    %134 = math.tanh %133 : vector<8x128xf32>
    %135 = arith.mulf %129, %134 : vector<8x128xf32>
    %136 = vector.extract_strided_slice %135 {offsets = [0, 0], sizes = [8, 32], strides = [1, 1]} : vector<8x128xf32> to vector<8x32xf32>
    %cst_50 = arith.constant dense<0.000000e+00> : vector<8xf32>
    %137 = vector.multi_reduction <add>, %136, %cst_50 [1] : vector<8x32xf32> to vector<8xf32>
    %138 = vector.shape_cast %137 : vector<8xf32> to vector<8x1xf32>
    %cst_51 = arith.constant 3.200000e+01 : f32
    %139 = vector.broadcast %cst_51 : f32 to vector<8x1xf32>
    %140 = arith.divf %138, %139 : vector<8x1xf32>
    %141 = vector.broadcast %140 : vector<8x1xf32> to vector<8x32xf32>
    %142 = arith.subf %136, %141 : vector<8x32xf32>
    %143 = arith.mulf %142, %142 : vector<8x32xf32>
    %cst_52 = arith.constant dense<0.000000e+00> : vector<8xf32>
    %144 = vector.multi_reduction <add>, %143, %cst_52 [1] : vector<8x32xf32> to vector<8xf32>
    %145 = vector.shape_cast %144 : vector<8xf32> to vector<8x1xf32>
    %cst_53 = arith.constant 3.200000e+01 : f32
    %146 = vector.broadcast %cst_53 : f32 to vector<8x1xf32>
    %147 = arith.divf %145, %146 : vector<8x1xf32>
    %c0_54 = arith.constant 0 : index
    %c0_55 = arith.constant 0 : index
    %148 = vector.load %arg2[%c0_54, %c0_55] : memref<8x128xf32, #tpu.memory_space<vmem>>, vector<1x32xf32>
    %c1_56 = arith.constant 1 : index
    %c0_57 = arith.constant 0 : index
    %149 = vector.load %arg2[%c1_56, %c0_57] : memref<8x128xf32, #tpu.memory_space<vmem>>, vector<1x32xf32>
    %150 = vector.broadcast %140 : vector<8x1xf32> to vector<8x32xf32>
    %151 = arith.subf %136, %150 : vector<8x32xf32>
    %cst_58 = arith.constant 9.99999974E-6 : f32
    %152 = vector.broadcast %cst_58 : f32 to vector<8x1xf32>
    %153 = arith.addf %147, %152 : vector<8x1xf32>
    %154 = math.rsqrt %153 : vector<8x1xf32>
    %155 = vector.broadcast %154 : vector<8x1xf32> to vector<8x32xf32>
    %156 = arith.mulf %151, %155 : vector<8x32xf32>
    %157 = vector.broadcast %148 : vector<1x32xf32> to vector<8x32xf32>
    %158 = arith.mulf %156, %157 : vector<8x32xf32>
    %159 = vector.broadcast %149 : vector<1x32xf32> to vector<8x32xf32>
    %160 = arith.addf %158, %159 : vector<8x32xf32>
    %cst_59 = arith.constant 0.000000e+00 : f32
    %161 = vector.broadcast %cst_59 : f32 to vector<8x32xf32>
    %162 = arith.maximumf %160, %161 : vector<8x32xf32>
    %c3_60 = arith.constant 3 : index
    %c0_61 = arith.constant 0 : index
    %163 = vector.load %arg2[%c3_60, %c0_61] : memref<8x128xf32, #tpu.memory_space<vmem>>, vector<2x32xf32>
    %c2_62 = arith.constant 2 : index
    %c0_63 = arith.constant 0 : index
    %164 = vector.load %arg2[%c2_62, %c0_63] : memref<8x128xf32, #tpu.memory_space<vmem>>, vector<1x2xf32>
    %cst_64 = arith.constant dense<0.000000e+00> : vector<8x2xf32>
    %165 = tpu.matmul %162, %163, %cst_64 {dimension_numbers = #tpu.dot_dimension_numbers<[1], [1], [0], [0], [0, 0, 1, 0], [], []>, precision = #tpu.contract_precision<fp32>} : vector<8x32xf32>, vector<2x32xf32>, vector<8x2xf32> -> vector<8x2xf32>
    %166 = vector.broadcast %164 : vector<1x2xf32> to vector<8x2xf32>
    %167 = arith.addf %165, %166 : vector<8x2xf32>
    %c0_65 = arith.constant 0 : index
    %c0_66 = arith.constant 0 : index
    %168 = vector.load %arg3[%c0_65, %c0_66] : memref<8x2xf32, #tpu.memory_space<vmem>>, vector<8x2xf32>
    tpu.vector_store %arg3[%c0_65, %c0_66], %167 {strides = array<i32>} : memref<8x2xf32, #tpu.memory_space<vmem>>, vector<8x2xf32>,
    return
  }
}

</mosaic_0001>

<llo_original>
// kernel: eye_state_lstm_32.1
$region0: #{eye_state_lstm_32.1}
  #allocation0 [shape = 'u32[]', space=smem, size = 0x4, offset = 0x4, fixed_abs, tag = 'smem constant byte address 0x4 - core index']
  #allocation1 [shape = 'u32[144,128]{1,0:T(1,128)}', space=vmem, size = 0x12000, scoped, tag = 'internal scratch']
  %s0 = inlined_call_operand.vmem [shape: f32[8,8,128], index: 0, kind: input, shape index: {}]
  %s1 = inlined_call_operand.vmem [shape: f32[128,128], index: 1, kind: input, shape index: {}]
  %s2 = inlined_call_operand.vmem [shape: f32[8,128], index: 2, kind: input, shape index: {}]
  %s3 = inlined_call_operand.vmem [shape: f32[8,2], index: 3, kind: output, shape index: {}]
  %s4 = sld [smem:[#allocation0]]
  $region22: #{eye_state_lstm_32.1} parent=0
    _
  %s6 = ssub.s32 1, %s4
  %s7 = scalar_select 0, %s6, %s4
  // Predicated region
  $region2: #{eye_state_lstm_32.1} parent=0 // pred_check
    _
  $region3: #{eye_state_lstm_32.1} parent=0 // pred_check_branch
    %9 = sbr.rel (0) target = $region5
  $region4: #{eye_state_lstm_32.1} parent=0 // pred_region
    _
  $region5: #{eye_state_lstm_32.1} parent=0 // pred_fallthru
    _
  // Predicated region
  $region6: #{eye_state_lstm_32.1} parent=0 // pred_check
    _
  $region7: #{eye_state_lstm_32.1} parent=0 // pred_check_branch
    %11 = sbr.rel (0) target = $region9
  $region8: #{eye_state_lstm_32.1} parent=0 // pred_region
    _
  $region9: #{eye_state_lstm_32.1} parent=0 // pred_fallthru
    _
  // Predicated region
  $region10: #{eye_state_lstm_32.1} parent=0 // pred_check
    _
  $region11: #{eye_state_lstm_32.1} parent=0 // pred_check_branch
    %13 = sbr.rel (0) target = $region13
  $region12: #{eye_state_lstm_32.1} parent=0 // pred_region
    _
  $region13: #{eye_state_lstm_32.1} parent=0 // pred_fallthru
    _
  %v14 = vld [vmem:[%s1] sm:$0xff]
  %v15 = vld [vmem:[%s1 + $0x8] sm:$0xff]
  %v16 = vld [vmem:[%s1 + $0x10] sm:$0xff]
  %v17 = vld [vmem:[%s1 + $0x18] sm:$0xff]
  %v18 = vld [vmem:[%s1 + $0x20] sm:$0xff]
  %v19 = vld [vmem:[%s1 + $0x28] sm:$0xff]
  %v20 = vld [vmem:[%s1 + $0x30] sm:$0xff]
  %v21 = vld [vmem:[%s1 + $0x38] sm:$0xff]
  %v22 = vld [vmem:[%s1 + $0x40] sm:$0xff]
  %v23 = vld [vmem:[%s1 + $0x48] sm:$0xff]
  %v24 = vld [vmem:[%s1 + $0x50] sm:$0xff]
  %v25 = vld [vmem:[%s1 + $0x58] sm:$0xff]
  %v26 = vld [vmem:[%s1 + $0x60] sm:$0xff]
  %v27 = vld [vmem:[%s1 + $0x68] sm:$0xff]
  %v28 = vld [vmem:[%s1 + $0x70] sm:$0xff]
  %v29 = vld [vmem:[%s1 + $0x78] sm:$0xff]
  %v30 = vlaneseq
  %v31 = vand.u32 %v30, 127
  %vm32 = vcmp.lt.s32.totalorder %v31, 96
  %v33 = vsel %vm32, 0.5, 1.0
  %v34 = vsub.f32 1.0, %v33
  %v35 = vld [vmem:[%s0] sm:$0xff]
  %v36 = vmul.f32 %v35, %v33
  %v37 = vtanh.pop %v36
  %v38 = vmul.f32 %v37, %v33
  %v39 = vadd.f32 %v38, %v34
  %40 = vrot.lane.b32.xlu0 %v39, 96
  %v41 = vpop.permute.xlu0 %40
  %42 = vrot.lane.b32.xlu0 %v39, 64
  %v43 = vpop.permute.xlu0 %42
  %44 = vrot.lane.b32.xlu0 %v39, 32
  %v45 = vpop.permute.xlu0 %44
  %v46 = vmul.f32 %v41, 0.0
  %v47 = vmul.f32 %v39, %v45
  %v48 = vadd.f32 %v46, %v47
  %v49 = vtanh.pop %v48
  %v50 = vmul.f32 %v43, %v49
  %s51 = scalar_lea.vmem %s0, 8
  %v52 = vld [vmem:[%s51] sm:$0xff]
  %53 = vmatprep.subr.mxu0 0.0
  %v54 = vand.u32 %v14, 4294901760
  %55 = vmatpush1.msra.mxu0 %v54
  %56 = vmatprep.subr.mxu0 0.0
  %v57 = vand.u32 %v15, 4294901760
  %58 = vmatpush1.msra.mxu0 %v57
  %59 = vmatprep.subr.mxu0 0.0
  %v60 = vand.u32 %v16, 4294901760
  %61 = vmatpush1.msra.mxu0 %v60
  %62 = vmatprep.subr.mxu0 0.0
  %v63 = vand.u32 %v17, 4294901760
  %64 = vmatpush1.msra.mxu0 %v63
  %65 = vmatprep.subr.mxu0 0.0
  %v66 = vand.u32 %v18, 4294901760
  %67 = vmatpush1.msra.mxu0 %v66
  %68 = vmatprep.subr.mxu0 0.0
  %v69 = vand.u32 %v19, 4294901760
  %70 = vmatpush1.msra.mxu0 %v69
  %71 = vmatprep.subr.mxu0 0.0
  %v72 = vand.u32 %v20, 4294901760
  %73 = vmatpush1.msra.mxu0 %v72
  %74 = vmatprep.subr.mxu0 0.0
  %v75 = vand.u32 %v21, 4294901760
  %76 = vmatpush1.msra.mxu0 %v75
  %77 = vmatprep.subr.mxu0 0.0
  %v78 = vand.u32 %v22, 4294901760
  %79 = vmatpush1.msra.mxu0 %v78
  %80 = vmatprep.subr.mxu0 0.0
  %v81 = vand.u32 %v23, 4294901760
  %82 = vmatpush1.msra.mxu0 %v81
  %83 = vmatprep.subr.mxu0 0.0
  %v84 = vand.u32 %v24, 4294901760
  %85 = vmatpush1.msra.mxu0 %v84
  %86 = vmatprep.subr.mxu0 0.0
  %v87 = vand.u32 %v25, 4294901760
  %88 = vmatpush1.msra.mxu0 %v87
  %89 = vmatprep.subr.mxu0 0.0
  %v90 = vand.u32 %v26, 4294901760
  %91 = vmatpush1.msra.mxu0 %v90
  %92 = vmatprep.subr.mxu0 0.0
  %v93 = vand.u32 %v27, 4294901760
  %94 = vmatpush1.msra.mxu0 %v93
  %95 = vmatprep.subr.mxu0 0.0
  %v96 = vand.u32 %v28, 4294901760
  %97 = vmatpush1.msra.mxu0 %v96
  %98 = vmatprep.subr.mxu0 0.0
  %v99 = vand.u32 %v29, 4294901760
  %100 = vmatpush1.msra.mxu0 %v99
  %101 = vmatprep.subr.mxu0 0.0
  %102 = vmatpush1.msra.mxu0 0.0
  %103 = vmatprep.subr.mxu0 0.0
  %104 = vmatpush1.msra.mxu0 0.0
  %105 = vmatprep.subr.mxu0 0.0
  %106 = vmatpush1.msra.mxu0 0.0
  %107 = vmatprep.subr.mxu0 0.0
  %108 = vmatpush1.msra.mxu0 0.0
  %109 = vmatprep.subr.mxu0 0.0
  %110 = vmatpush1.msra.mxu0 0.0
  %111 = vmatprep.subr.mxu0 0.0
  %112 = vmatpush1.msra.mxu0 0.0
  %113 = vmatprep.subr.mxu0 0.0
  %114 = vmatpush1.msra.mxu0 0.0
  %115 = vmatprep.subr.mxu0 0.0
  %116 = vmatpush1.msra.mxu0 0.0
  %117 = vmatprep.subr.mxu0 0.0
  %118 = vmatpush1.msra.mxu0 0.0
  %119 = vmatprep.subr.mxu0 0.0
  %120 = vmatpush1.msra.mxu0 0.0
  %121 = vmatprep.subr.mxu0 0.0
  %122 = vmatpush1.msra.mxu0 0.0
  %123 = vmatprep.subr.mxu0 0.0
  %124 = vmatpush1.msra.mxu0 0.0
  %125 = vmatprep.subr.mxu0 0.0
  %126 = vmatpush1.msra.mxu0 0.0
  %127 = vmatprep.subr.mxu0 0.0
  %128 = vmatpush1.msra.mxu0 0.0
  %129 = vmatprep.subr.mxu0 0.0
  %130 = vmatpush1.msra.mxu0 0.0
  %131 = vmatprep.subr.mxu0 0.0
  %132 = vmatpush1.msra.mxu0 0.0
  %133 = vmatprep.mubr.f32.mxu0 0.0
  %v134 = vand.u32 %v50, 4294901760
  %v135 = vsub.f32 %v50, %v134
  %v136 = vand.u32 %v135, 4294901760
  %v137 = vsub.f32 %v135, %v136
  %v138 = vand.u32 %v137, 4294901760
  %139 = vmatmul.mubr.f32.gmra.mrb[0].mxu0 %v138
  %v140 = vpop.f32.mrb[0].mxu0
  %v141 = vadd.f32 0.0, %v140
  %v142 = vpop.f32.mrb[0].mxu0
  %143 = vdwg.mxu0
  %144 = vmatprep.subr.mxu0 0.0
  %v145 = vand.u32 %v14, 4294901760
  %v146 = vsub.f32 %v14, %v145
  %v147 = vand.u32 %v146, 4294901760
  %v148 = vsub.f32 %v146, %v147
  %v149 = vand.u32 %v148, 4294901760
  %150 = vmatpush1.msra.mxu0 %v149
  %151 = vmatprep.subr.mxu0 0.0
  %v152 = vand.u32 %v15, 4294901760
  %v153 = vsub.f32 %v15, %v152
  %v154 = vand.u32 %v153, 4294901760
  %v155 = vsub.f32 %v153, %v154
  %v156 = vand.u32 %v155, 4294901760
  %157 = vmatpush1.msra.mxu0 %v156
  %158 = vmatprep.subr.mxu0 0.0
  %v159 = vand.u32 %v16, 4294901760
  %v160 = vsub.f32 %v16, %v159
  %v161 = vand.u32 %v160, 4294901760
  %v162 = vsub.f32 %v160, %v161
  %v163 = vand.u32 %v162, 4294901760
  %164 = vmatpush1.msra.mxu0 %v163
  %165 = vmatprep.subr.mxu0 0.0
  %v166 = vand.u32 %v17, 4294901760
  %v167 = vsub.f32 %v17, %v166
  %v168 = vand.u32 %v167, 4294901760
  %v169 = vsub.f32 %v167, %v168
  %v170 = vand.u32 %v169, 4294901760
  %171 = vmatpush1.msra.mxu0 %v170
  %172 = vmatprep.subr.mxu0 0.0
  %v173 = vand.u32 %v18, 4294901760
  %v174 = vsub.f32 %v18, %v173
  %v175 = vand.u32 %v174, 4294901760
  %v176 = vsub.f32 %v174, %v175
  %v177 = vand.u32 %v176, 4294901760
  %178 = vmatpush1.msra.mxu0 %v177
  %179 = vmatprep.subr.mxu0 0.0
  %v180 = vand.u32 %v19, 4294901760
  %v181 = vsub.f32 %v19, %v180
  %v182 = vand.u32 %v181, 4294901760
  %v183 = vsub.f32 %v181, %v182
  %v184 = vand.u32 %v183, 4294901760
  %185 = vmatpush1.msra.mxu0 %v184
  %186 = vmatprep.subr.mxu0 0.0
  %v187 = vand.u32 %v20, 4294901760
  %v188 = vsub.f32 %v20, %v187
  %v189 = vand.u32 %v188, 4294901760
  %v190 = vsub.f32 %v188, %v189
  %v191 = vand.u32 %v190, 4294901760
  %192 = vmatpush1.msra.mxu0 %v191
  %193 = vmatprep.subr.mxu0 0.0
  %v194 = vand.u32 %v21, 4294901760
  %v195 = vsub.f32 %v21, %v194
  %v196 = vand.u32 %v195, 4294901760
  %v197 = vsub.f32 %v195, %v196
  %v198 = vand.u32 %v197, 4294901760
  %199 = vmatpush1.msra.mxu0 %v198
  %200 = vmatprep.subr.mxu0 0.0
  %v201 = vand.u32 %v22, 4294901760
  %v202 = vsub.f32 %v22, %v201
  %v203 = vand.u32 %v202, 4294901760
  %v204 = vsub.f32 %v202, %v203
  %v205 = vand.u32 %v204, 4294901760
  %206 = vmatpush1.msra.mxu0 %v205
  %207 = vmatprep.subr.mxu0 0.0
  %v208 = vand.u32 %v23, 4294901760
  %v209 = vsub.f32 %v23, %v208
  %v210 = vand.u32 %v209, 4294901760
  %v211 = vsub.f32 %v209, %v210
  %v212 = vand.u32 %v211, 4294901760
  %213 = vmatpush1.msra.mxu0 %v212
  %214 = vmatprep.subr.mxu0 0.0
  %v215 = vand.u32 %v24, 4294901760
  %v216 = vsub.f32 %v24, %v215
  %v217 = vand.u32 %v216, 4294901760
  %v218 = vsub.f32 %v216, %v217
  %v219 = vand.u32 %v218, 4294901760
  %220 = vmatpush1.msra.mxu0 %v219
  %221 = vmatprep.subr.mxu0 0.0
  %v222 = vand.u32 %v25, 4294901760
  %v223 = vsub.f32 %v25, %v222
  %v224 = vand.u32 %v223, 4294901760
  %v225 = vsub.f32 %v223, %v224
  %v226 = vand.u32 %v225, 4294901760
  %227 = vmatpush1.msra.mxu0 %v226
  %228 = vmatprep.subr.mxu0 0.0
  %v229 = vand.u32 %v26, 4294901760
  %v230 = vsub.f32 %v26, %v229
  %v231 = vand.u32 %v230, 4294901760
  %v232 = vsub.f32 %v230, %v231
  %v233 = vand.u32 %v232, 4294901760
  %234 = vmatpush1.msra.mxu0 %v233
  %235 = vmatprep.subr.mxu0 0.0
  %v236 = vand.u32 %v27, 4294901760
  %v237 = vsub.f32 %v27, %v236
  %v238 = vand.u32 %v237, 4294901760
  %v239 = vsub.f32 %v237, %v238
  %v240 = vand.u32 %v239, 4294901760
  %241 = vmatpush1.msra.mxu0 %v240
  %242 = vmatprep.subr.mxu0 0.0
  %v243 = vand.u32 %v28, 4294901760
  %v244 = vsub.f32 %v28, %v243
  %v245 = vand.u32 %v244, 4294901760
  %v246 = vsub.f32 %v244, %v245
  %v247 = vand.u32 %v246, 4294901760
  %248 = vmatpush1.msra.mxu0 %v247
  %249 = vmatprep.subr.mxu0 0.0
  %v250 = vand.u32 %v29, 4294901760
  %v251 = vsub.f32 %v29, %v250
  %v252 = vand.u32 %v251, 4294901760
  %v253 = vsub.f32 %v251, %v252
  %v254 = vand.u32 %v253, 4294901760
  %255 = vmatpush1.msra.mxu0 %v254
  %256 = vmatprep.subr.mxu0 0.0
  %257 = vmatpush1.msra.mxu0 0.0
  %258 = vmatprep.subr.mxu0 0.0
  %259 = vmatpush1.msra.mxu0 0.0
  %260 = vmatprep.subr.mxu0 0.0
  %261 = vmatpush1.msra.mxu0 0.0
  %262 = vmatprep.subr.mxu0 0.0
  %263 = vmatpush1.msra.mxu0 0.0
  %264 = vmatprep.subr.mxu0 0.0
  %265 = vmatpush1.msra.mxu0 0.0
  %266 = vmatprep.subr.mxu0 0.0
  %267 = vmatpush1.msra.mxu0 0.0
  %268 = vmatprep.subr.mxu0 0.0
  %269 = vmatpush1.msra.mxu0 0.0
  %270 = vmatprep.subr.mxu0 0.0
  %271 = vmatpush1.msra.mxu0 0.0
  %272 = vmatprep.subr.mxu0 0.0
  %273 = vmatpush1.msra.mxu0 0.0
  %274 = vmatprep.subr.mxu0 0.0
  %275 = vmatpush1.msra.mxu0 0.0
  %276 = vmatprep.subr.mxu0 0.0
  %277 = vmatpush1.msra.mxu0 0.0
  %278 = vmatprep.subr.mxu0 0.0
  %279 = vmatpush1.msra.mxu0 0.0
  %280 = vmatprep.subr.mxu0 0.0
  %281 = vmatpush1.msra.mxu0 0.0
  %282 = vmatprep.subr.mxu0 0.0
  %283 = vmatpush1.msra.mxu0 0.0
  %284 = vmatprep.subr.mxu0 0.0
  %285 = vmatpush1.msra.mxu0 0.0
  %286 = vmatprep.subr.mxu0 0.0
  %287 = vmatpush1.msra.mxu0 0.0
  %288 = vmatprep.mubr.f32.mxu0 0.0
  %v289 = vand.u32 %v50, 4294901760
  %290 = vmatmul.mubr.f32.gmra.mrb[0].mxu0 %v289
  %v291 = vpop.f32.mrb[0].mxu0
  %v292 = vadd.f32 %v141, %v291
  %v293 = vpop.f32.mrb[0].mxu0
  %294 = vdwg.mxu0
  %295 = vmatprep.subr.mxu0 0.0
  %v296 = vand.u32 %v14, 4294901760
  %v297 = vsub.f32 %v14, %v296
  %298 = vmatpush1.msra.mxu0 %v297
  %299 = vmatprep.subr.mxu0 0.0
  %v300 = vand.u32 %v15, 4294901760
  %v301 = vsub.f32 %v15, %v300
  %302 = vmatpush1.msra.mxu0 %v301
  %303 = vmatprep.subr.mxu0 0.0
  %v304 = vand.u32 %v16, 4294901760
  %v305 = vsub.f32 %v16, %v304
  %306 = vmatpush1.msra.mxu0 %v305
  %307 = vmatprep.subr.mxu0 0.0
  %v308 = vand.u32 %v17, 4294901760
  %v309 = vsub.f32 %v17, %v308
  %310 = vmatpush1.msra.mxu0 %v309
  %311 = vmatprep.subr.mxu0 0.0
  %v312 = vand.u32 %v18, 4294901760
  %v313 = vsub.f32 %v18, %v312
  %314 = vmatpush1.msra.mxu0 %v313
  %315 = vmatprep.subr.mxu0 0.0
  %v316 = vand.u32 %v19, 4294901760
  %v317 = vsub.f32 %v19, %v316
  %318 = vmatpush1.msra.mxu0 %v317
  %319 = vmatprep.subr.mxu0 0.0
  %v320 = vand.u32 %v20, 4294901760
  %v321 = vsub.f32 %v20, %v320
  %322 = vmatpush1.msra.mxu0 %v321
  %323 = vmatprep.subr.mxu0 0.0
  %v324 = vand.u32 %v21, 4294901760
  %v325 = vsub.f32 %v21, %v324
  %326 = vmatpush1.msra.mxu0 %v325
  %327 = vmatprep.subr.mxu0 0.0
  %v328 = vand.u32 %v22, 4294901760
  %v329 = vsub.f32 %v22, %v328
  %330 = vmatpush1.msra.mxu0 %v329
  %331 = vmatprep.subr.mxu0 0.0
  %v332 = vand.u32 %v23, 4294901760
  %v333 = vsub.f32 %v23, %v332
  %334 = vmatpush1.msra.mxu0 %v333
  %335 = vmatprep.subr.mxu0 0.0
  %v336 = vand.u32 %v24, 4294901760
  %v337 = vsub.f32 %v24, %v336
  %338 = vmatpush1.msra.mxu0 %v337
  %339 = vmatprep.subr.mxu0 0.0
  %v340 = vand.u32 %v25, 4294901760
  %v341 = vsub.f32 %v25, %v340
  %342 = vmatpush1.msra.mxu0 %v341
  %343 = vmatprep.subr.mxu0 0.0
  %v344 = vand.u32 %v26, 4294901760
  %v345 = vsub.f32 %v26, %v344
  %346 = vmatpush1.msra.mxu0 %v345
  %347 = vmatprep.subr.mxu0 0.0
  %v348 = vand.u32 %v27, 4294901760
  %v349 = vsub.f32 %v27, %v348
  %350 = vmatpush1.msra.mxu0 %v349
  %351 = vmatprep.subr.mxu0 0.0
  %v352 = vand.u32 %v28, 4294901760
  %v353 = vsub.f32 %v28, %v352
  %354 = vmatpush1.msra.mxu0 %v353
  %355 = vmatprep.subr.mxu0 0.0
  %v356 = vand.u32 %v29, 4294901760
  %v357 = vsub.f32 %v29, %v356
  %358 = vmatpush1.msra.mxu0 %v357
  %359 = vmatprep.subr.mxu0 0.0
  %360 = vmatpush1.msra.mxu0 0.0
  %361 = vmatprep.subr.mxu0 0.0
  %362 = vmatpush1.msra.mxu0 0.0
  %363 = vmatprep.subr.mxu0 0.0
  %364 = vmatpush1.msra.mxu0 0.0
  %365 = vmatprep.subr.mxu0 0.0
  %366 = vmatpush1.msra.mxu0 0.0
  %367 = vmatprep.subr.mxu0 0.0
  %368 = vmatpush1.msra.mxu0 0.0
  %369 = vmatprep.subr.mxu0 0.0
  %370 = vmatpush1.msra.mxu0 0.0
  %371 = vmatprep.subr.mxu0 0.0
  %372 = vmatpush1.msra.mxu0 0.0
  %373 = vmatprep.subr.mxu0 0.0
  %374 = vmatpush1.msra.mxu0 0.0
  %375 = vmatprep.subr.mxu0 0.0
  %376 = vmatpush1.msra.mxu0 0.0
  %377 = vmatprep.subr.mxu0 0.0
  %378 = vmatpush1.msra.mxu0 0.0
  %379 = vmatprep.subr.mxu0 0.0
  %380 = vmatpush1.msra.mxu0 0.0
  %381 = vmatprep.subr.mxu0 0.0
  %382 = vmatpush1.msra.mxu0 0.0
  %383 = vmatprep.subr.mxu0 0.0
  %384 = vmatpush1.msra.mxu0 0.0
  %385 = vmatprep.subr.mxu0 0.0
  %386 = vmatpush1.msra.mxu0 0.0
  %387 = vmatprep.subr.mxu0 0.0
  %388 = vmatpush1.msra.mxu0 0.0
  %389 = vmatprep.subr.mxu0 0.0
  %390 = vmatpush1.msra.mxu0 0.0
  %391 = vmatprep.mubr.f32.mxu0 0.0
  %v392 = vand.u32 %v50, 4294901760
  %v393 = vsub.f32 %v50, %v392
  %394 = vmatmul.mubr.f32.gmra.mrb[0].mxu0 %v393
  %v395 = vpop.f32.mrb[0].mxu0
  %v396 = vadd.f32 %v292, %v395
  %v397 = vpop.f32.mrb[0].mxu0
  %398 = vdwg.mxu0
  %399 = vmatprep.subr.mxu0 0.0
  %v400 = vand.u32 %v14, 4294901760
  %401 = vmatpush1.msra.mxu0 %v400
  %402 = vmatprep.subr.mxu0 0.0
  %v403 = vand.u32 %v15, 4294901760
  %404 = vmatpush1.msra.mxu0 %v403
  %405 = vmatprep.subr.mxu0 0.0
  %v406 = vand.u32 %v16, 4294901760
  %407 = vmatpush1.msra.mxu0 %v406
  %408 = vmatprep.subr.mxu0 0.0
  %v409 = vand.u32 %v17, 4294901760
  %410 = vmatpush1.msra.mxu0 %v409
  %411 = vmatprep.subr.mxu0 0.0
  %v412 = vand.u32 %v18, 4294901760
  %413 = vmatpush1.msra.mxu0 %v412
  %414 = vmatprep.subr.mxu0 0.0
  %v415 = vand.u32 %v19, 4294901760
  %416 = vmatpush1.msra.mxu0 %v415
  %417 = vmatprep.subr.mxu0 0.0
  %v418 = vand.u32 %v20, 4294901760
  %419 = vmatpush1.msra.mxu0 %v418
  %420 = vmatprep.subr.mxu0 0.0
  %v421 = vand.u32 %v21, 4294901760
  %422 = vmatpush1.msra.mxu0 %v421
  %423 = vmatprep.subr.mxu0 0.0
  %v424 = vand.u32 %v22, 4294901760
  %425 = vmatpush1.msra.mxu0 %v424
  %426 = vmatprep.subr.mxu0 0.0
  %v427 = vand.u32 %v23, 4294901760
  %428 = vmatpush1.msra.mxu0 %v427
  %429 = vmatprep.subr.mxu0 0.0
  %v430 = vand.u32 %v24, 4294901760
  %431 = vmatpush1.msra.mxu0 %v430
  %432 = vmatprep.subr.mxu0 0.0
  %v433 = vand.u32 %v25, 4294901760
  %434 = vmatpush1.msra.mxu0 %v433
  %435 = vmatprep.subr.mxu0 0.0
  %v436 = vand.u32 %v26, 4294901760
  %437 = vmatpush1.msra.mxu0 %v436
  %438 = vmatprep.subr.mxu0 0.0
  %v439 = vand.u32 %v27, 4294901760
  %440 = vmatpush1.msra.mxu0 %v439
  %441 = vmatprep.subr.mxu0 0.0
  %v442 = vand.u32 %v28, 4294901760
  %443 = vmatpush1.msra.mxu0 %v442
  %444 = vmatprep.subr.mxu0 0.0
  %v445 = vand.u32 %v29, 4294901760
  %446 = vmatpush1.msra.mxu0 %v445
  %447 = vmatprep.subr.mxu0 0.0
  %448 = vmatpush1.msra.mxu0 0.0
  %449 = vmatprep.subr.mxu0 0.0
  %450 = vmatpush1.msra.mxu0 0.0
  %451 = vmatprep.subr.mxu0 0.0
  %452 = vmatpush1.msra.mxu0 0.0
  %453 = vmatprep.subr.mxu0 0.0
  %454 = vmatpush1.msra.mxu0 0.0
  %455 = vmatprep.subr.mxu0 0.0
  %456 = vmatpush1.msra.mxu0 0.0
  %457 = vmatprep.subr.mxu0 0.0
  %458 = vmatpush1.msra.mxu0 0.0
  %459 = vmatprep.subr.mxu0 0.0
  %460 = vmatpush1.msra.mxu0 0.0
  %461 = vmatprep.subr.mxu0 0.0
  %462 = vmatpush1.msra.mxu0 0.0
  %463 = vmatprep.subr.mxu0 0.0
  %464 = vmatpush1.msra.mxu0 0.0
  %465 = vmatprep.subr.mxu0 0.0
  %466 = vmatpush1.msra.mxu0 0.0
  %467 = vmatprep.subr.mxu0 0.0
  %468 = vmatpush1.msra.mxu0 0.0
  %469 = vmatprep.subr.mxu0 0.0
  %470 = vmatpush1.msra.mxu0 0.0
  %471 = vmatprep.subr.mxu0 0.0
  %472 = vmatpush1.msra.mxu0 0.0
  %473 = vmatprep.subr.mxu0 0.0
  %474 = vmatpush1.msra.mxu0 0.0
  %475 = vmatprep.subr.mxu0 0.0
  %476 = vmatpush1.msra.mxu0 0.0
  %477 = vmatprep.subr.mxu0 0.0
  %478 = vmatpush1.msra.mxu0 0.0
  %479 = vmatprep.mubr.f32.mxu0 0.0
  %v480 = vand.u32 %v50, 4294901760
  %v481 = vsub.f32 %v50, %v480
  %v482 = vand.u32 %v481, 4294901760
  %483 = vmatmul.mubr.f32.gmra.mrb[0].mxu0 %v482
  %v484 = vpop.f32.mrb[0].mxu0
  %v485 = vadd.f32 %v396, %v484
  %v486 = vpop.f32.mrb[0].mxu0
  %487 = vdwg.mxu0
  %488 = vmatprep.subr.mxu0 0.0
  %v489 = vand.u32 %v14, 4294901760
  %v490 = vsub.f32 %v14, %v489
  %v491 = vand.u32 %v490, 4294901760
  %492 = vmatpush1.msra.mxu0 %v491
  %493 = vmatprep.subr.mxu0 0.0
  %v494 = vand.u32 %v15, 4294901760
  %v495 = vsub.f32 %v15, %v494
  %v496 = vand.u32 %v495, 4294901760
  %497 = vmatpush1.msra.mxu0 %v496
  %498 = vmatprep.subr.mxu0 0.0
  %v499 = vand.u32 %v16, 4294901760
  %v500 = vsub.f32 %v16, %v499
  %v501 = vand.u32 %v500, 4294901760
  %502 = vmatpush1.msra.mxu0 %v501
  %503 = vmatprep.subr.mxu0 0.0
  %v504 = vand.u32 %v17, 4294901760
  %v505 = vsub.f32 %v17, %v504
  %v506 = vand.u32 %v505, 4294901760
  %507 = vmatpush1.msra.mxu0 %v506
  %508 = vmatprep.subr.mxu0 0.0
  %v509 = vand.u32 %v18, 4294901760
  %v510 = vsub.f32 %v18, %v509
  %v511 = vand.u32 %v510, 4294901760
  %512 = vmatpush1.msra.mxu0 %v511
  %513 = vmatprep.subr.mxu0 0.0
  %v514 = vand.u32 %v19, 4294901760
  %v515 = vsub.f32 %v19, %v514
  %v516 = vand.u32 %v515, 4294901760
  %517 = vmatpush1.msra.mxu0 %v516
  %518 = vmatprep.subr.mxu0 0.0
  %v519 = vand.u32 %v20, 4294901760
  %v520 = vsub.f32 %v20, %v519
  %v521 = vand.u32 %v520, 4294901760
  %522 = vmatpush1.msra.mxu0 %v521
  %523 = vmatprep.subr.mxu0 0.0
  %v524 = vand.u32 %v21, 4294901760
  %v525 = vsub.f32 %v21, %v524
  %v526 = vand.u32 %v525, 4294901760
  %527 = vmatpush1.msra.mxu0 %v526
  %528 = vmatprep.subr.mxu0 0.0
  %v529 = vand.u32 %v22, 4294901760
  %v530 = vsub.f32 %v22, %v529
  %v531 = vand.u32 %v530, 4294901760
  %532 = vmatpush1.msra.mxu0 %v531
  %533 = vmatprep.subr.mxu0 0.0
  %v534 = vand.u32 %v23, 4294901760
  %v535 = vsub.f32 %v23, %v534
  %v536 = vand.u32 %v535, 4294901760
  %537 = vmatpush1.msra.mxu0 %v536
  %538 = vmatprep.subr.mxu0 0.0
  %v539 = vand.u32 %v24, 4294901760
  %v540 = vsub.f32 %v24, %v539
  %v541 = vand.u32 %v540, 4294901760
  %542 = vmatpush1.msra.mxu0 %v541
  %543 = vmatprep.subr.mxu0 0.0
  %v544 = vand.u32 %v25, 4294901760
  %v545 = vsub.f32 %v25, %v544
  %v546 = vand.u32 %v545, 4294901760
  %547 = vmatpush1.msra.mxu0 %v546
  %548 = vmatprep.subr.mxu0 0.0
  %v549 = vand.u32 %v26, 4294901760
  %v550 = vsub.f32 %v26, %v549
  %v551 = vand.u32 %v550, 4294901760
  %552 = vmatpush1.msra.mxu0 %v551
  %553 = vmatprep.subr.mxu0 0.0
  %v554 = vand.u32 %v27, 4294901760
  %v555 = vsub.f32 %v27, %v554
  %v556 = vand.u32 %v555, 4294901760
  %557 = vmatpush1.msra.mxu0 %v556
  %558 = vmatprep.subr.mxu0 0.0
  %v559 = vand.u32 %v28, 4294901760
  %v560 = vsub.f32 %v28, %v559
  %v561 = vand.u32 %v560, 4294901760
  %562 = vmatpush1.msra.mxu0 %v561
  %563 = vmatprep.subr.mxu0 0.0
  %v564 = vand.u32 %v29, 4294901760
  %v565 = vsub.f32 %v29, %v564
  %v566 = vand.u32 %v565, 4294901760
  %567 = vmatpush1.msra.mxu0 %v566
  %568 = vmatprep.subr.mxu0 0.0
  %569 = vmatpush1.msra.mxu0 0.0
  %570 = vmatprep.subr.mxu0 0.0
  %571 = vmatpush1.msra.mxu0 0.0
  %572 = vmatprep.subr.mxu0 0.0
  %573 = vmatpush1.msra.mxu0 0.0
  %574 = vmatprep.subr.mxu0 0.0
  %575 = vmatpush1.msra.mxu0 0.0
  %576 = vmatprep.subr.mxu0 0.0
  %577 = vmatpush1.msra.mxu0 0.0
  %578 = vmatprep.subr.mxu0 0.0
  %579 = vmatpush1.msra.mxu0 0.0
  %580 = vmatprep.subr.mxu0 0.0
  %581 = vmatpush1.msra.mxu0 0.0
  %582 = vmatprep.subr.mxu0 0.0
  %583 = vmatpush1.msra.mxu0 0.0
  %584 = vmatprep.subr.mxu0 0.0
  %585 = vmatpush1.msra.mxu0 0.0
  %586 = vmatprep.subr.mxu0 0.0
  %587 = vmatpush1.msra.mxu0 0.0
  %588 = vmatprep.subr.mxu0 0.0
  %589 = vmatpush1.msra.mxu0 0.0
  %590 = vmatprep.subr.mxu0 0.0
  %591 = vmatpush1.msra.mxu0 0.0
  %592 = vmatprep.subr.mxu0 0.0
  %593 = vmatpush1.msra.mxu0 0.0
  %594 = vmatprep.subr.mxu0 0.0
  %595 = vmatpush1.msra.mxu0 0.0
  %596 = vmatprep.subr.mxu0 0.0
  %597 = vmatpush1.msra.mxu0 0.0
  %598 = vmatprep.subr.mxu0 0.0
  %599 = vmatpush1.msra.mxu0 0.0
  %600 = vmatprep.mubr.f32.mxu0 0.0
  %v601 = vand.u32 %v50, 4294901760
  %602 = vmatmul.mubr.f32.gmra.mrb[0].mxu0 %v601
  %v603 = vpop.f32.mrb[0].mxu0
  %v604 = vadd.f32 %v485, %v603
  %v605 = vpop.f32.mrb[0].mxu0
  %606 = vdwg.mxu0
  %607 = vmatprep.subr.mxu0 0.0
  %v608 = vand.u32 %v14, 4294901760
  %609 = vmatpush1.msra.mxu0 %v608
  %610 = vmatprep.subr.mxu0 0.0
  %v611 = vand.u32 %v15, 4294901760
  %612 = vmatpush1.msra.mxu0 %v611
  %613 = vmatprep.subr.mxu0 0.0
  %v614 = vand.u32 %v16, 4294901760
  %615 = vmatpush1.msra.mxu0 %v614
  %616 = vmatprep.subr.mxu0 0.0
  %v617 = vand.u32 %v17, 4294901760
  %618 = vmatpush1.msra.mxu0 %v617
  %619 = vmatprep.subr.mxu0 0.0
  %v620 = vand.u32 %v18, 4294901760
  %621 = vmatpush1.msra.mxu0 %v620
  %622 = vmatprep.subr.mxu0 0.0
  %v623 = vand.u32 %v19, 4294901760
  %624 = vmatpush1.msra.mxu0 %v623
  %625 = vmatprep.subr.mxu0 0.0
  %v626 = vand.u32 %v20, 4294901760
  %627 = vmatpush1.msra.mxu0 %v626
  %628 = vmatprep.subr.mxu0 0.0
  %v629 = vand.u32 %v21, 4294901760
  %630 = vmatpush1.msra.mxu0 %v629
  %631 = vmatprep.subr.mxu0 0.0
  %v632 = vand.u32 %v22, 4294901760
  %633 = vmatpush1.msra.mxu0 %v632
  %634 = vmatprep.subr.mxu0 0.0
  %v635 = vand.u32 %v23, 4294901760
  %636 = vmatpush1.msra.mxu0 %v635
  %637 = vmatprep.subr.mxu0 0.0
  %v638 = vand.u32 %v24, 4294901760
  %639 = vmatpush1.msra.mxu0 %v638
  %640 = vmatprep.subr.mxu0 0.0
  %v641 = vand.u32 %v25, 4294901760
  %642 = vmatpush1.msra.mxu0 %v641
  %643 = vmatprep.subr.mxu0 0.0
  %v644 = vand.u32 %v26, 4294901760
  %645 = vmatpush1.msra.mxu0 %v644
  %646 = vmatprep.subr.mxu0 0.0
  %v647 = vand.u32 %v27, 4294901760
  %648 = vmatpush1.msra.mxu0 %v647
  %649 = vmatprep.subr.mxu0 0.0
  %v650 = vand.u32 %v28, 4294901760
  %651 = vmatpush1.msra.mxu0 %v650
  %652 = vmatprep.subr.mxu0 0.0
  %v653 = vand.u32 %v29, 4294901760
  %654 = vmatpush1.msra.mxu0 %v653
  %655 = vmatprep.subr.mxu0 0.0
  %656 = vmatpush1.msra.mxu0 0.0
  %657 = vmatprep.subr.mxu0 0.0
  %658 = vmatpush1.msra.mxu0 0.0
  %659 = vmatprep.subr.mxu0 0.0
  %660 = vmatpush1.msra.mxu0 0.0
  %661 = vmatprep.subr.mxu0 0.0
  %662 = vmatpush1.msra.mxu0 0.0
  %663 = vmatprep.subr.mxu0 0.0
  %664 = vmatpush1.msra.mxu0 0.0
  %665 = vmatprep.subr.mxu0 0.0
  %666 = vmatpush1.msra.mxu0 0.0
  %667 = vmatprep.subr.mxu0 0.0
  %668 = vmatpush1.msra.mxu0 0.0
  %669 = vmatprep.subr.mxu0 0.0
  %670 = vmatpush1.msra.mxu0 0.0
  %671 = vmatprep.subr.mxu0 0.0
  %672 = vmatpush1.msra.mxu0 0.0
  %673 = vmatprep.subr.mxu0 0.0
  %674 = vmatpush1.msra.mxu0 0.0
  %675 = vmatprep.subr.mxu0 0.0
  %676 = vmatpush1.msra.mxu0 0.0
  %677 = vmatprep.subr.mxu0 0.0
  %678 = vmatpush1.msra.mxu0 0.0
  %679 = vmatprep.subr.mxu0 0.0
  %680 = vmatpush1.msra.mxu0 0.0
  %681 = vmatprep.subr.mxu0 0.0
  %682 = vmatpush1.msra.mxu0 0.0
  %683 = vmatprep.subr.mxu0 0.0
  %684 = vmatpush1.msra.mxu0 0.0
  %685 = vmatprep.subr.mxu0 0.0
  %686 = vmatpush1.msra.mxu0 0.0
  %687 = vmatprep.mubr.f32.mxu0 0.0
  %v688 = vand.u32 %v50, 4294901760
  %689 = vmatmul.mubr.f32.gmra.mrb[0].mxu0 %v688
  %v690 = vpop.f32.mrb[0].mxu0
  %v691 = vadd.f32 %v604, %v690
  %v692 = vpop.f32.mrb[0].mxu0
  %693 = vdwg.mxu0
  %v694 = vadd.f32 %v52, %v691
  %v695 = vmul.f32 %v694, %v33
  %v696 = vtanh.pop %v695
  %v697 = vmul.f32 %v696, %v33
  %v698 = vadd.f32 %v697, %v34
  %699 = vrot.lane.b32.xlu0 %v698, 96
  %v700 = vpop.permute.xlu0 %699
  %701 = vrot.lane.b32.xlu0 %v698, 64
  %v702 = vpop.permute.xlu0 %701
  %703 = vrot.lane.b32.xlu0 %v698, 32
  %v704 = vpop.permute.xlu0 %703
  %v705 = vmul.f32 %v700, %v48
  %v706 = vmul.f32 %v698, %v704
  %v707 = vadd.f32 %v705, %v706
  %v708 = vtanh.pop %v707
  %v709 = vmul.f32 %v702, %v708
  %s710 = scalar_lea.vmem %s0, 16
  %v711 = vld [vmem:[%s710] sm:$0xff]
  %712 = vmatprep.subr.mxu0 0.0
  %v713 = vand.u32 %v14, 4294901760
  %714 = vmatpush1.msra.mxu0 %v713
  %715 = vmatprep.subr.mxu0 0.0
  %v716 = vand.u32 %v15, 4294901760
  %717 = vmatpush1.msra.mxu0 %v716
  %718 = vmatprep.subr.mxu0 0.0
  %v719 = vand.u32 %v16, 4294901760
  %720 = vmatpush1.msra.mxu0 %v719
  %721 = vmatprep.subr.mxu0 0.0
  %v722 = vand.u32 %v17, 4294901760
  %723 = vmatpush1.msra.mxu0 %v722
  %724 = vmatprep.subr.mxu0 0.0
  %v725 = vand.u32 %v18, 4294901760
  %726 = vmatpush1.msra.mxu0 %v725
  %727 = vmatprep.subr.mxu0 0.0
  %v728 = vand.u32 %v19, 4294901760
  %729 = vmatpush1.msra.mxu0 %v728
  %730 = vmatprep.subr.mxu0 0.0
  %v731 = vand.u32 %v20, 4294901760
  %732 = vmatpush1.msra.mxu0 %v731
  %733 = vmatprep.subr.mxu0 0.0
  %v734 = vand.u32 %v21, 4294901760
  %735 = vmatpush1.msra.mxu0 %v734
  %736 = vmatprep.subr.mxu0 0.0
  %v737 = vand.u32 %v22, 4294901760
  %738 = vmatpush1.msra.mxu0 %v737
  %739 = vmatprep.subr.mxu0 0.0
  %v740 = vand.u32 %v23, 4294901760
  %741 = vmatpush1.msra.mxu0 %v740
  %742 = vmatprep.subr.mxu0 0.0
  %v743 = vand.u32 %v24, 4294901760
  %744 = vmatpush1.msra.mxu0 %v743
  %745 = vmatprep.subr.mxu0 0.0
  %v746 = vand.u32 %v25, 4294901760
  %747 = vmatpush1.msra.mxu0 %v746
  %748 = vmatprep.subr.mxu0 0.0
  %v749 = vand.u32 %v26, 4294901760
  %750 = vmatpush1.msra.mxu0 %v749
  %751 = vmatprep.subr.mxu0 0.0
  %v752 = vand.u32 %v27, 4294901760
  %753 = vmatpush1.msra.mxu0 %v752
  %754 = vmatprep.subr.mxu0 0.0
  %v755 = vand.u32 %v28, 4294901760
  %756 = vmatpush1.msra.mxu0 %v755
  %757 = vmatprep.subr.mxu0 0.0
  %v758 = vand.u32 %v29, 4294901760
  %759 = vmatpush1.msra.mxu0 %v758
  %760 = vmatprep.subr.mxu0 0.0
  %761 = vmatpush1.msra.mxu0 0.0
  %762 = vmatprep.subr.mxu0 0.0
  %763 = vmatpush1.msra.mxu0 0.0
  %764 = vmatprep.subr.mxu0 0.0
  %765 = vmatpush1.msra.mxu0 0.0
  %766 = vmatprep.subr.mxu0 0.0
  %767 = vmatpush1.msra.mxu0 0.0
  %768 = vmatprep.subr.mxu0 0.0
  %769 = vmatpush1.msra.mxu0 0.0
  %770 = vmatprep.subr.mxu0 0.0
  %771 = vmatpush1.msra.mxu0 0.0
  %772 = vmatprep.subr.mxu0 0.0
  %773 = vmatpush1.msra.mxu0 0.0
  %774 = vmatprep.subr.mxu0 0.0
  %775 = vmatpush1.msra.mxu0 0.0
  %776 = vmatprep.subr.mxu0 0.0
  %777 = vmatpush1.msra.mxu0 0.0
  %778 = vmatprep.subr.mxu0 0.0
  %779 = vmatpush1.msra.mxu0 0.0
  %780 = vmatprep.subr.mxu0 0.0
  %781 = vmatpush1.msra.mxu0 0.0
  %782 = vmatprep.subr.mxu0 0.0
  %783 = vmatpush1.msra.mxu0 0.0
  %784 = vmatprep.subr.mxu0 0.0
  %785 = vmatpush1.msra.mxu0 0.0
  %786 = vmatprep.subr.mxu0 0.0
  %787 = vmatpush1.msra.mxu0 0.0
  %788 = vmatprep.subr.mxu0 0.0
  %789 = vmatpush1.msra.mxu0 0.0
  %790 = vmatprep.subr.mxu0 0.0
  %791 = vmatpush1.msra.mxu0 0.0
  %792 = vmatprep.mubr.f32.mxu0 0.0
  %v793 = vand.u32 %v709, 4294901760
  %v794 = vsub.f32 %v709, %v793
  %v795 = vand.u32 %v794, 4294901760
  %v796 = vsub.f32 %v794, %v795
  %v797 = vand.u32 %v796, 4294901760
  %798 = vmatmul.mubr.f32.gmra.mrb[0].mxu0 %v797
  %v799 = vpop.f32.mrb[0].mxu0
  %v800 = vadd.f32 0.0, %v799
  %v801 = vpop.f32.mrb[0].mxu0
  %802 = vdwg.mxu0
  %803 = vmatprep.subr.mxu0 0.0
  %v804 = vand.u32 %v14, 4294901760
  %v805 = vsub.f32 %v14, %v804
  %v806 = vand.u32 %v805, 4294901760
  %v807 = vsub.f32 %v805, %v806
  %v808 = vand.u32 %v807, 4294901760
  %809 = vmatpush1.msra.mxu0 %v808
  %810 = vmatprep.subr.mxu0 0.0
  %v811 = vand.u32 %v15, 4294901760
  %v812 = vsub.f32 %v15, %v811
  %v813 = vand.u32 %v812, 4294901760
  %v814 = vsub.f32 %v812, %v813
  %v815 = vand.u32 %v814, 4294901760
  %816 = vmatpush1.msra.mxu0 %v815
  %817 = vmatprep.subr.mxu0 0.0
  %v818 = vand.u32 %v16, 4294901760
  %v819 = vsub.f32 %v16, %v818
  %v820 = vand.u32 %v819, 4294901760
  %v821 = vsub.f32 %v819, %v820
  %v822 = vand.u32 %v821, 4294901760
  %823 = vmatpush1.msra.mxu0 %v822
  %824 = vmatprep.subr.mxu0 0.0
  %v825 = vand.u32 %v17, 4294901760
  %v826 = vsub.f32 %v17, %v825
  %v827 = vand.u32 %v826, 4294901760
  %v828 = vsub.f32 %v826, %v827
  %v829 = vand.u32 %v828, 4294901760
  %830 = vmatpush1.msra.mxu0 %v829
  %831 = vmatprep.subr.mxu0 0.0
  %v832 = vand.u32 %v18, 4294901760
  %v833 = vsub.f32 %v18, %v832
  %v834 = vand.u32 %v833, 4294901760
  %v835 = vsub.f32 %v833, %v834
  %v836 = vand.u32 %v835, 4294901760
  %837 = vmatpush1.msra.mxu0 %v836
  %838 = vmatprep.subr.mxu0 0.0
  %v839 = vand.u32 %v19, 4294901760
  %v840 = vsub.f32 %v19, %v839
  %v841 = vand.u32 %v840, 4294901760
  %v842 = vsub.f32 %v840, %v841
  %v843 = vand.u32 %v842, 4294901760
  %844 = vmatpush1.msra.mxu0 %v843
  %845 = vmatprep.subr.mxu0 0.0
  %v846 = vand.u32 %v20, 4294901760
  %v847 = vsub.f32 %v20, %v846
  %v848 = vand.u32 %v847, 4294901760
  %v849 = vsub.f32 %v847, %v848
  %v850 = vand.u32 %v849, 4294901760
  %851 = vmatpush1.msra.mxu0 %v850
  %852 = vmatprep.subr.mxu0 0.0
  %v853 = vand.u32 %v21, 4294901760
  %v854 = vsub.f32 %v21, %v853
  %v855 = vand.u32 %v854, 4294901760
  %v856 = vsub.f32 %v854, %v855
  %v857 = vand.u32 %v856, 4294901760
  %858 = vmatpush1.msra.mxu0 %v857
  %859 = vmatprep.subr.mxu0 0.0
  %v860 = vand.u32 %v22, 4294901760
  %v861 = vsub.f32 %v22, %v860
  %v862 = vand.u32 %v861, 4294901760
  %v863 = vsub.f32 %v861, %v862
  %v864 = vand.u32 %v863, 4294901760
  %865 = vmatpush1.msra.mxu0 %v864
  %866 = vmatprep.subr.mxu0 0.0
  %v867 = vand.u32 %v23, 4294901760
  %v868 = vsub.f32 %v23, %v867
  %v869 = vand.u32 %v868, 4294901760
  %v870 = vsub.f32 %v868, %v869
  %v871 = vand.u32 %v870, 4294901760
  %872 = vmatpush1.msra.mxu0 %v871
  %873 = vmatprep.subr.mxu0 0.0
  %v874 = vand.u32 %v24, 4294901760
  %v875 = vsub.f32 %v24, %v874
  %v876 = vand.u32 %v875, 4294901760
  %v877 = vsub.f32 %v875, %v876
  %v878 = vand.u32 %v877, 4294901760
  %879 = vmatpush1.msra.mxu0 %v878
  %880 = vmatprep.subr.mxu0 0.0
  %v881 = vand.u32 %v25, 4294901760
  %v882 = vsub.f32 %v25, %v881
  %v883 = vand.u32 %v882, 4294901760
  %v884 = vsub.f32 %v882, %v883
  %v885 = vand.u32 %v884, 4294901760
  %886 = vmatpush1.msra.mxu0 %v885
  %887 = vmatprep.subr.mxu0 0.0
  %v888 = vand.u32 %v26, 4294901760
  %v889 = vsub.f32 %v26, %v888
  %v890 = vand.u32 %v889, 4294901760
  %v891 = vsub.f32 %v889, %v890
  %v892 = vand.u32 %v891, 4294901760
  %893 = vmatpush1.msra.mxu0 %v892
  %894 = vmatprep.subr.mxu0 0.0
  %v895 = vand.u32 %v27, 4294901760
  %v896 = vsub.f32 %v27, %v895
  %v897 = vand.u32 %v896, 4294901760
  %v898 = vsub.f32 %v896, %v897
  %v899 = vand.u32 %v898, 4294901760
  %900 = vmatpush1.msra.mxu0 %v899
  %901 = vmatprep.subr.mxu0 0.0
  %v902 = vand.u32 %v28, 4294901760
  %v903 = vsub.f32 %v28, %v902
  %v904 = vand.u32 %v903, 4294901760
  %v905 = vsub.f32 %v903, %v904
  %v906 = vand.u32 %v905, 4294901760
  %907 = vmatpush1.msra.mxu0 %v906
  %908 = vmatprep.subr.mxu0 0.0
  %v909 = vand.u32 %v29, 4294901760
  %v910 = vsub.f32 %v29, %v909
  %v911 = vand.u32 %v910, 4294901760
  %v912 = vsub.f32 %v910, %v911
  %v913 = vand.u32 %v912, 4294901760
  %914 = vmatpush1.msra.mxu0 %v913
  %915 = vmatprep.subr.mxu0 0.0
  %916 = vmatpush1.msra.mxu0 0.0
  %917 = vmatprep.subr.mxu0 0.0
  %918 = vmatpush1.msra.mxu0 0.0
  %919 = vmatprep.subr.mxu0 0.0
  %920 = vmatpush1.msra.mxu0 0.0
  %921 = vmatprep.subr.mxu0 0.0
  %922 = vmatpush1.msra.mxu0 0.0
  %923 = vmatprep.subr.mxu0 0.0
  %924 = vmatpush1.msra.mxu0 0.0
  %925 = vmatprep.subr.mxu0 0.0
  %926 = vmatpush1.msra.mxu0 0.0
  %927 = vmatprep.subr.mxu0 0.0
  %928 = vmatpush1.msra.mxu0 0.0
  %929 = vmatprep.subr.mxu0 0.0
  %930 = vmatpush1.msra.mxu0 0.0
  %931 = vmatprep.subr.mxu0 0.0
  %932 = vmatpush1.msra.mxu0 0.0
  %933 = vmatprep.subr.mxu0 0.0
  %934 = vmatpush1.msra.mxu0 0.0
  %935 = vmatprep.subr.mxu0 0.0
  %936 = vmatpush1.msra.mxu0 0.0
  %937 = vmatprep.subr.mxu0 0.0
  %938 = vmatpush1.msra.mxu0 0.0
  %939 = vmatprep.subr.mxu0 0.0
  %940 = vmatpush1.msra.mxu0 0.0
  %941 = vmatprep.subr.mxu0 0.0
  %942 = vmatpush1.msra.mxu0 0.0
  %943 = vmatprep.subr.mxu0 0.0
  %944 = vmatpush1.msra.mxu0 0.0
  %945 = vmatprep.subr.mxu0 0.0
  %946 = vmatpush1.msra.mxu0 0.0
  %947 = vmatprep.mubr.f32.mxu0 0.0
  %v948 = vand.u32 %v709, 4294901760
  %949 = vmatmul.mubr.f32.gmra.mrb[0].mxu0 %v948
  %v950 = vpop.f32.mrb[0].mxu0
  %v951 = vadd.f32 %v800, %v950
  %v952 = vpop.f32.mrb[0].mxu0
  %953 = vdwg.mxu0
  %954 = vmatprep.subr.mxu0 0.0
  %v955 = vand.u32 %v14, 4294901760
  %v956 = vsub.f32 %v14, %v955
  %957 = vmatpush1.msra.mxu0 %v956
  %958 = vmatprep.subr.mxu0 0.0
  %v959 = vand.u32 %v15, 4294901760
  %v960 = vsub.f32 %v15, %v959
  %961 = vmatpush1.msra.mxu0 %v960
  %962 = vmatprep.subr.mxu0 0.0
  %v963 = vand.u32 %v16, 4294901760
  %v964 = vsub.f32 %v16, %v963
  %965 = vmatpush1.msra.mxu0 %v964
  %966 = vmatprep.subr.mxu0 0.0
  %v967 = vand.u32 %v17, 4294901760
  %v968 = vsub.f32 %v17, %v967
  %969 = vmatpush1.msra.mxu0 %v968
  %970 = vmatprep.subr.mxu0 0.0
  %v971 = vand.u32 %v18, 4294901760
  %v972 = vsub.f32 %v18, %v971
  %973 = vmatpush1.msra.mxu0 %v972
  %974 = vmatprep.subr.mxu0 0.0
  %v975 = vand.u32 %v19, 4294901760
  %v976 = vsub.f32 %v19, %v975
  %977 = vmatpush1.msra.mxu0 %v976
  %978 = vmatprep.subr.mxu0 0.0
  %v979 = vand.u32 %v20, 4294901760
  %v980 = vsub.f32 %v20, %v979
  %981 = vmatpush1.msra.mxu0 %v980
  %982 = vmatprep.subr.mxu0 0.0
  %v983 = vand.u32 %v21, 4294901760
  %v984 = vsub.f32 %v21, %v983
  %985 = vmatpush1.msra.mxu0 %v984
  %986 = vmatprep.subr.mxu0 0.0
  %v987 = vand.u32 %v22, 4294901760
  %v988 = vsub.f32 %v22, %v987
  %989 = vmatpush1.msra.mxu0 %v988
  %990 = vmatprep.subr.mxu0 0.0
  %v991 = vand.u32 %v23, 4294901760
  %v992 = vsub.f32 %v23, %v991
  %993 = vmatpush1.msra.mxu0 %v992
  %994 = vmatprep.subr.mxu0 0.0
  %v995 = vand.u32 %v24, 4294901760
  %v996 = vsub.f32 %v24, %v995
  %997 = vmatpush1.msra.mxu0 %v996
  %998 = vmatprep.subr.mxu0 0.0
  %v999 = vand.u32 %v25, 4294901760
  %v1000 = vsub.f32 %v25, %v999
  %1001 = vmatpush1.msra.mxu0 %v1000
  %1002 = vmatprep.subr.mxu0 0.0
  %v1003 = vand.u32 %v26, 4294901760
  %v1004 = vsub.f32 %v26, %v1003
  %1005 = vmatpush1.msra.mxu0 %v1004
  %1006 = vmatprep.subr.mxu0 0.0
  %v1007 = vand.u32 %v27, 4294901760
  %v1008 = vsub.f32 %v27, %v1007
  %1009 = vmatpush1.msra.mxu0 %v1008
  %1010 = vmatprep.subr.mxu0 0.0
  %v1011 = vand.u32 %v28, 4294901760
  %v1012 = vsub.f32 %v28, %v1011
  %1013 = vmatpush1.msra.mxu0 %v1012
  %1014 = vmatprep.subr.mxu0 0.0
  %v1015 = vand.u32 %v29, 4294901760
  %v1016 = vsub.f32 %v29, %v1015
  %1017 = vmatpush1.msra.mxu0 %v1016
  %1018 = vmatprep.subr.mxu0 0.0
  %1019 = vmatpush1.msra.mxu0 0.0
  %1020 = vmatprep.subr.mxu0 0.0
  %1021 = vmatpush1.msra.mxu0 0.0
  %1022 = vmatprep.subr.mxu0 0.0
  %1023 = vmatpush1.msra.mxu0 0.0
  %1024 = vmatprep.subr.mxu0 0.0
  %1025 = vmatpush1.msra.mxu0 0.0
  %1026 = vmatprep.subr.mxu0 0.0
  %1027 = vmatpush1.msra.mxu0 0.0
  %1028 = vmatprep.subr.mxu0 0.0
  %1029 = vmatpush1.msra.mxu0 0.0
  %1030 = vmatprep.subr.mxu0 0.0
  %1031 = vmatpush1.msra.mxu0 0.0
  %1032 = vmatprep.subr.mxu0 0.0
  %1033 = vmatpush1.msra.mxu0 0.0
  %1034 = vmatprep.subr.mxu0 0.0
  %1035 = vmatpush1.msra.mxu0 0.0
  %1036 = vmatprep.subr.mxu0 0.0
  %1037 = vmatpush1.msra.mxu0 0.0
  %1038 = vmatprep.subr.mxu0 0.0
  %1039 = vmatpush1.msra.mxu0 0.0
  %1040 = vmatprep.subr.mxu0 0.0
  %1041 = vmatpush1.msra.mxu0 0.0
  %1042 = vmatprep.subr.mxu0 0.0
  %1043 = vmatpush1.msra.mxu0 0.0
  %1044 = vmatprep.subr.mxu0 0.0
  %1045 = vmatpush1.msra.mxu0 0.0
  %1046 = vmatprep.subr.mxu0 0.0
  %1047 = vmatpush1.msra.mxu0 0.0
  %1048 = vmatprep.subr.mxu0 0.0
  %1049 = vmatpush1.msra.mxu0 0.0
  %1050 = vmatprep.mubr.f32.mxu0 0.0
  %v1051 = vand.u32 %v709, 4294901760
  %v1052 = vsub.f32 %v709, %v1051
  %1053 = vmatmul.mubr.f32.gmra.mrb[0].mxu0 %v1052
  %v1054 = vpop.f32.mrb[0].mxu0
  %v1055 = vadd.f32 %v951, %v1054
  %v1056 = vpop.f32.mrb[0].mxu0
  %1057 = vdwg.mxu0
  %1058 = vmatprep.subr.mxu0 0.0
  %v1059 = vand.u32 %v14, 4294901760
  %1060 = vmatpush1.msra.mxu0 %v1059
  %1061 = vmatprep.subr.mxu0 0.0
  %v1062 = vand.u32 %v15, 4294901760
  %1063 = vmatpush1.msra.mxu0 %v1062
  %1064 = vmatprep.subr.mxu0 0.0
  %v1065 = vand.u32 %v16, 4294901760
  %1066 = vmatpush1.msra.mxu0 %v1065
  %1067 = vmatprep.subr.mxu0 0.0
  %v1068 = vand.u32 %v17, 4294901760
  %1069 = vmatpush1.msra.mxu0 %v1068
  %1070 = vmatprep.subr.mxu0 0.0
  %v1071 = vand.u32 %v18, 4294901760
  %1072 = vmatpush1.msra.mxu0 %v1071
  %1073 = vmatprep.subr.mxu0 0.0
  %v1074 = vand.u32 %v19, 4294901760
  %1075 = vmatpush1.msra.mxu0 %v1074
  %1076 = vmatprep.subr.mxu0 0.0
  %v1077 = vand.u32 %v20, 4294901760
  %1078 = vmatpush1.msra.mxu0 %v1077
  %1079 = vmatprep.subr.mxu0 0.0
  %v1080 = vand.u32 %v21, 4294901760
  %1081 = vmatpush1.msra.mxu0 %v1080
  %1082 = vmatprep.subr.mxu0 0.0
  %v1083 = vand.u32 %v22, 4294901760
  %1084 = vmatpush1.msra.mxu0 %v1083
  %1085 = vmatprep.subr.mxu0 0.0
  %v1086 = vand.u32 %v23, 4294901760
  %1087 = vmatpush1.msra.mxu0 %v1086
  %1088 = vmatprep.subr.mxu0 0.0
  %v1089 = vand.u32 %v24, 4294901760
  %1090 = vmatpush1.msra.mxu0 %v1089
  %1091 = vmatprep.subr.mxu0 0.0
  %v1092 = vand.u32 %v25, 4294901760
  %1093 = vmatpush1.msra.mxu0 %v1092
  %1094 = vmatprep.subr.mxu0 0.0
  %v1095 = vand.u32 %v26, 4294901760
  %1096 = vmatpush1.msra.mxu0 %v1095
  %1097 = vmatprep.subr.mxu0 0.0
  %v1098 = vand.u32 %v27, 4294901760
  %1099 = vmatpush1.msra.mxu0 %v1098
  %1100 = vmatprep.subr.mxu0 0.0
  %v1101 = vand.u32 %v28, 4294901760
  %1102 = vmatpush1.msra.mxu0 %v1101
  %1103 = vmatprep.subr.mxu0 0.0
  %v1104 = vand.u32 %v29, 4294901760
  %1105 = vmatpush1.msra.mxu0 %v1104
  %1106 = vmatprep.subr.mxu0 0.0
  %1107 = vmatpush1.msra.mxu0 0.0
  %1108 = vmatprep.subr.mxu0 0.0
  %1109 = vmatpush1.msra.mxu0 0.0
  %1110 = vmatprep.subr.mxu0 0.0
  %1111 = vmatpush1.msra.mxu0 0.0
  %1112 = vmatprep.subr.mxu0 0.0
  %1113 = vmatpush1.msra.mxu0 0.0
  %1114 = vmatprep.subr.mxu0 0.0
  %1115 = vmatpush1.msra.mxu0 0.0
  %1116 = vmatprep.subr.mxu0 0.0
  %1117 = vmatpush1.msra.mxu0 0.0
  %1118 = vmatprep.subr.mxu0 0.0
  %1119 = vmatpush1.msra.mxu0 0.0
  %1120 = vmatprep.subr.mxu0 0.0
  %1121 = vmatpush1.msra.mxu0 0.0
  %1122 = vmatprep.subr.mxu0 0.0
  %1123 = vmatpush1.msra.mxu0 0.0
  %1124 = vmatprep.subr.mxu0 0.0
  %1125 = vmatpush1.msra.mxu0 0.0
  %1126 = vmatprep.subr.mxu0 0.0
  %1127 = vmatpush1.msra.mxu0 0.0
  %1128 = vmatprep.subr.mxu0 0.0
  %1129 = vmatpush1.msra.mxu0 0.0
  %1130 = vmatprep.subr.mxu0 0.0
  %1131 = vmatpush1.msra.mxu0 0.0
  %1132 = vmatprep.subr.mxu0 0.0
  %1133 = vmatpush1.msra.mxu0 0.0
  %1134 = vmatprep.subr.mxu0 0.0
  %1135 = vmatpush1.msra.mxu0 0.0
  %1136 = vmatprep.subr.mxu0 0.0
  %1137 = vmatpush1.msra.mxu0 0.0
  %1138 = vmatprep.mubr.f32.mxu0 0.0
  %v1139 = vand.u32 %v709, 4294901760
  %v1140 = vsub.f32 %v709, %v1139
  %v1141 = vand.u32 %v1140, 4294901760
  %1142 = vmatmul.mubr.f32.gmra.mrb[0].mxu0 %v1141
  %v1143 = vpop.f32.mrb[0].mxu0
  %v1144 = vadd.f32 %v1055, %v1143
  %v1145 = vpop.f32.mrb[0].mxu0
  %1146 = vdwg.mxu0
  %1147 = vmatprep.subr.mxu0 0.0
  %v1148 = vand.u32 %v14, 4294901760
  %v1149 = vsub.f32 %v14, %v1148
  %v1150 = vand.u32 %v1149, 4294901760
  %1151 = vmatpush1.msra.mxu0 %v1150
  %1152 = vmatprep.subr.mxu0 0.0
  %v1153 = vand.u32 %v15, 4294901760
  %v1154 = vsub.f32 %v15, %v1153
  %v1155 = vand.u32 %v1154, 4294901760
  %1156 = vmatpush1.msra.mxu0 %v1155
  %1157 = vmatprep.subr.mxu0 0.0
  %v1158 = vand.u32 %v16, 4294901760
  %v1159 = vsub.f32 %v16, %v1158
  %v1160 = vand.u32 %v1159, 4294901760
  %1161 = vmatpush1.msra.mxu0 %v1160
  %1162 = vmatprep.subr.mxu0 0.0
  %v1163 = vand.u32 %v17, 4294901760
  %v1164 = vsub.f32 %v17, %v1163
  %v1165 = vand.u32 %v1164, 4294901760
  %1166 = vmatpush1.msra.mxu0 %v1165
  %1167 = vmatprep.subr.mxu0 0.0
  %v1168 = vand.u32 %v18, 4294901760
  %v1169 = vsub.f32 %v18, %v1168
  %v1170 = vand.u32 %v1169, 4294901760
  %1171 = vmatpush1.msra.mxu0 %v1170
  %1172 = vmatprep.subr.mxu0 0.0
  %v1173 = vand.u32 %v19, 4294901760
  %v1174 = vsub.f32 %v19, %v1173
  %v1175 = vand.u32 %v1174, 4294901760
  %1176 = vmatpush1.msra.mxu0 %v1175
  %1177 = vmatprep.subr.mxu0 0.0
  %v1178 = vand.u32 %v20, 4294901760
  %v1179 = vsub.f32 %v20, %v1178
  %v1180 = vand.u32 %v1179, 4294901760
  %1181 = vmatpush1.msra.mxu0 %v1180
  %1182 = vmatprep.subr.mxu0 0.0
  %v1183 = vand.u32 %v21, 4294901760
  %v1184 = vsub.f32 %v21, %v1183
  %v1185 = vand.u32 %v1184, 4294901760
  %1186 = vmatpush1.msra.mxu0 %v1185
  %1187 = vmatprep.subr.mxu0 0.0
  %v1188 = vand.u32 %v22, 4294901760
  %v1189 = vsub.f32 %v22, %v1188
  %v1190 = vand.u32 %v1189, 4294901760
  %1191 = vmatpush1.msra.mxu0 %v1190
  %1192 = vmatprep.subr.mxu0 0.0
  %v1193 = vand.u32 %v23, 4294901760
  %v1194 = vsub.f32 %v23, %v1193
  %v1195 = vand.u32 %v1194, 4294901760
  %1196 = vmatpush1.msra.mxu0 %v1195
  %1197 = vmatprep.subr.mxu0 0.0
  %v1198 = vand.u32 %v24, 4294901760
  %v1199 = vsub.f32 %v24, %v1198
  %v1200 = vand.u32 %v1199, 4294901760
  %1201 = vmatpush1.msra.mxu0 %v1200
  %1202 = vmatprep.subr.mxu0 0.0
  %v1203 = vand.u32 %v25, 4294901760
  %v1204 = vsub.f32 %v25, %v1203
  %v1205 = vand.u32 %v1204, 4294901760
  %1206 = vmatpush1.msra.mxu0 %v1205
  %1207 = vmatprep.subr.mxu0 0.0
  %v1208 = vand.u32 %v26, 4294901760
  %v1209 = vsub.f32 %v26, %v1208
  %v1210 = vand.u32 %v1209, 4294901760
  %1211 = vmatpush1.msra.mxu0 %v1210
  %1212 = vmatprep.subr.mxu0 0.0
  %v1213 = vand.u32 %v27, 4294901760
  %v1214 = vsub.f32 %v27, %v1213
  %v1215 = vand.u32 %v1214, 4294901760
  %1216 = vmatpush1.msra.mxu0 %v1215
  %1217 = vmatprep.subr.mxu0 0.0
  %v1218 = vand.u32 %v28, 4294901760
  %v1219 = vsub.f32 %v28, %v1218
  %v1220 = vand.u32 %v1219, 4294901760
  %1221 = vmatpush1.msra.mxu0 %v1220
  %1222 = vmatprep.subr.mxu0 0.0
  %v1223 = vand.u32 %v29, 4294901760
  %v1224 = vsub.f32 %v29, %v1223
  %v1225 = vand.u32 %v1224, 4294901760
  %1226 = vmatpush1.msra.mxu0 %v1225
  %1227 = vmatprep.subr.mxu0 0.0
  %1228 = vmatpush1.msra.mxu0 0.0
  %1229 = vmatprep.subr.mxu0 0.0
  %1230 = vmatpush1.msra.mxu0 0.0
  %1231 = vmatprep.subr.mxu0 0.0
  %1232 = vmatpush1.msra.mxu0 0.0
  %1233 = vmatprep.subr.mxu0 0.0
  %1234 = vmatpush1.msra.mxu0 0.0
  %1235 = vmatprep.subr.mxu0 0.0
  %1236 = vmatpush1.msra.mxu0 0.0
  %1237 = vmatprep.subr.mxu0 0.0
  %1238 = vmatpush1.msra.mxu0 0.0
  %1239 = vmatprep.subr.mxu0 0.0
  %1240 = vmatpush1.msra.mxu0 0.0
  %1241 = vmatprep.subr.mxu0 0.0
  %1242 = vmatpush1.msra.mxu0 0.0
  %1243 = vmatprep.subr.mxu0 0.0
  %1244 = vmatpush1.msra.mxu0 0.0
  %1245 = vmatprep.subr.mxu0 0.0
  %1246 = vmatpush1.msra.mxu0 0.0
  %1247 = vmatprep.subr.mxu0 0.0
  %1248 = vmatpush1.msra.mxu0 0.0
  %1249 = vmatprep.subr.mxu0 0.0
  %1250 = vmatpush1.msra.mxu0 0.0
  %1251 = vmatprep.subr.mxu0 0.0
  %1252 = vmatpush1.msra.mxu0 0.0
  %1253 = vmatprep.subr.mxu0 0.0
  %1254 = vmatpush1.msra.mxu0 0.0
  %1255 = vmatprep.subr.mxu0 0.0
  %1256 = vmatpush1.msra.mxu0 0.0
  %1257 = vmatprep.subr.mxu0 0.0
  %1258 = vmatpush1.msra.mxu0 0.0
  %1259 = vmatprep.mubr.f32.mxu0 0.0
  %v1260 = vand.u32 %v709, 4294901760
  %1261 = vmatmul.mubr.f32.gmra.mrb[0].mxu0 %v1260
  %v1262 = vpop.f32.mrb[0].mxu0
  %v1263 = vadd.f32 %v1144, %v1262
  %v1264 = vpop.f32.mrb[0].mxu0
  %1265 = vdwg.mxu0
  %1266 = vmatprep.subr.mxu0 0.0
  %v1267 = vand.u32 %v14, 4294901760
  %1268 = vmatpush1.msra.mxu0 %v1267
  %1269 = vmatprep.subr.mxu0 0.0
  %v1270 = vand.u32 %v15, 4294901760
  %1271 = vmatpush1.msra.mxu0 %v1270
  %1272 = vmatprep.subr.mxu0 0.0
  %v1273 = vand.u32 %v16, 4294901760
  %1274 = vmatpush1.msra.mxu0 %v1273
  %1275 = vmatprep.subr.mxu0 0.0
  %v1276 = vand.u32 %v17, 4294901760
  %1277 = vmatpush1.msra.mxu0 %v1276
  %1278 = vmatprep.subr.mxu0 0.0
  %v1279 = vand.u32 %v18, 4294901760
  %1280 = vmatpush1.msra.mxu0 %v1279
  %1281 = vmatprep.subr.mxu0 0.0
  %v1282 = vand.u32 %v19, 4294901760
  %1283 = vmatpush1.msra.mxu0 %v1282
  %1284 = vmatprep.subr.mxu0 0.0
  %v1285 = vand.u32 %v20, 4294901760
  %1286 = vmatpush1.msra.mxu0 %v1285
  %1287 = vmatprep.subr.mxu0 0.0
  %v1288 = vand.u32 %v21, 4294901760
  %1289 = vmatpush1.msra.mxu0 %v1288
  %1290 = vmatprep.subr.mxu0 0.0
  %v1291 = vand.u32 %v22, 4294901760
  %1292 = vmatpush1.msra.mxu0 %v1291
  %1293 = vmatprep.subr.mxu0 0.0
  %v1294 = vand.u32 %v23, 4294901760
  %1295 = vmatpush1.msra.mxu0 %v1294
  %1296 = vmatprep.subr.mxu0 0.0
  %v1297 = vand.u32 %v24, 4294901760
  %1298 = vmatpush1.msra.mxu0 %v1297
  %1299 = vmatprep.subr.mxu0 0.0
  %v1300 = vand.u32 %v25, 4294901760
  %1301 = vmatpush1.msra.mxu0 %v1300
  %1302 = vmatprep.subr.mxu0 0.0
  %v1303 = vand.u32 %v26, 4294901760
  %1304 = vmatpush1.msra.mxu0 %v1303
  %1305 = vmatprep.subr.mxu0 0.0
  %v1306 = vand.u32 %v27, 4294901760
  %1307 = vmatpush1.msra.mxu0 %v1306
  %1308 = vmatprep.subr.mxu0 0.0
  %v1309 = vand.u32 %v28, 4294901760
  %1310 = vmatpush1.msra.mxu0 %v1309
  %1311 = vmatprep.subr.mxu0 0.0
  %v1312 = vand.u32 %v29, 4294901760
  %1313 = vmatpush1.msra.mxu0 %v1312
  %1314 = vmatprep.subr.mxu0 0.0
  %1315 = vmatpush1.msra.mxu0 0.0
  %1316 = vmatprep.subr.mxu0 0.0
  %1317 = vmatpush1.msra.mxu0 0.0
  %1318 = vmatprep.subr.mxu0 0.0
  %1319 = vmatpush1.msra.mxu0 0.0
  %1320 = vmatprep.subr.mxu0 0.0
  %1321 = vmatpush1.msra.mxu0 0.0
  %1322 = vmatprep.subr.mxu0 0.0
  %1323 = vmatpush1.msra.mxu0 0.0
  %1324 = vmatprep.subr.mxu0 0.0
  %1325 = vmatpush1.msra.mxu0 0.0
  %1326 = vmatprep.subr.mxu0 0.0
  %1327 = vmatpush1.msra.mxu0 0.0
  %1328 = vmatprep.subr.mxu0 0.0
  %1329 = vmatpush1.msra.mxu0 0.0
  %1330 = vmatprep.subr.mxu0 0.0
  %1331 = vmatpush1.msra.mxu0 0.0
  %1332 = vmatprep.subr.mxu0 0.0
  %1333 = vmatpush1.msra.mxu0 0.0
  %1334 = vmatprep.subr.mxu0 0.0
  %1335 = vmatpush1.msra.mxu0 0.0
  %1336 = vmatprep.subr.mxu0 0.0
  %1337 = vmatpush1.msra.mxu0 0.0
  %1338 = vmatprep.subr.mxu0 0.0
  %1339 = vmatpush1.msra.mxu0 0.0
  %1340 = vmatprep.subr.mxu0 0.0
  %1341 = vmatpush1.msra.mxu0 0.0
  %1342 = vmatprep.subr.mxu0 0.0
  %1343 = vmatpush1.msra.mxu0 0.0
  %1344 = vmatprep.subr.mxu0 0.0
  %1345 = vmatpush1.msra.mxu0 0.0
  %1346 = vmatprep.mubr.f32.mxu0 0.0
  %v1347 = vand.u32 %v709, 4294901760
  %1348 = vmatmul.mubr.f32.gmra.mrb[0].mxu0 %v1347
  %v1349 = vpop.f32.mrb[0].mxu0
  %v1350 = vadd.f32 %v1263, %v1349
  %v1351 = vpop.f32.mrb[0].mxu0
  %1352 = vdwg.mxu0
  %v1353 = vadd.f32 %v711, %v1350
  %v1354 = vmul.f32 %v1353, %v33
  %v1355 = vtanh.pop %v1354
  %v1356 = vmul.f32 %v1355, %v33
  %v1357 = vadd.f32 %v1356, %v34
  %1358 = vrot.lane.b32.xlu0 %v1357, 96
  %v1359 = vpop.permute.xlu0 %1358
  %1360 = vrot.lane.b32.xlu0 %v1357, 64
  %v1361 = vpop.permute.xlu0 %1360
  %1362 = vrot.lane.b32.xlu0 %v1357, 32
  %v1363 = vpop.permute.xlu0 %1362
  %v1364 = vmul.f32 %v1359, %v707
  %v1365 = vmul.f32 %v1357, %v1363
  %v1366 = vadd.f32 %v1364, %v1365
  %v1367 = vtanh.pop %v1366
  %v1368 = vmul.f32 %v1361, %v1367
  %s1369 = scalar_lea.vmem %s0, 24
  %v1370 = vld [vmem:[%s1369] sm:$0xff]
  %1371 = vmatprep.subr.mxu0 0.0
  %v1372 = vand.u32 %v14, 4294901760
  %1373 = vmatpush1.msra.mxu0 %v1372
  %1374 = vmatprep.subr.mxu0 0.0
  %v1375 = vand.u32 %v15, 4294901760
  %1376 = vmatpush1.msra.mxu0 %v1375
  %1377 = vmatprep.subr.mxu0 0.0
  %v1378 = vand.u32 %v16, 4294901760
  %1379 = vmatpush1.msra.mxu0 %v1378
  %1380 = vmatprep.subr.mxu0 0.0
  %v1381 = vand.u32 %v17, 4294901760
  %1382 = vmatpush1.msra.mxu0 %v1381
  %1383 = vmatprep.subr.mxu0 0.0
  %v1384 = vand.u32 %v18, 4294901760
  %1385 = vmatpush1.msra.mxu0 %v1384
  %1386 = vmatprep.subr.mxu0 0.0
  %v1387 = vand.u32 %v19, 4294901760
  %1388 = vmatpush1.msra.mxu0 %v1387
  %1389 = vmatprep.subr.mxu0 0.0
  %v1390 = vand.u32 %v20, 4294901760
  %1391 = vmatpush1.msra.mxu0 %v1390
  %1392 = vmatprep.subr.mxu0 0.0
  %v1393 = vand.u32 %v21, 4294901760
  %1394 = vmatpush1.msra.mxu0 %v1393
  %1395 = vmatprep.subr.mxu0 0.0
  %v1396 = vand.u32 %v22, 4294901760
  %1397 = vmatpush1.msra.mxu0 %v1396
  %1398 = vmatprep.subr.mxu0 0.0
  %v1399 = vand.u32 %v23, 4294901760
  %1400 = vmatpush1.msra.mxu0 %v1399
  %1401 = vmatprep.subr.mxu0 0.0
  %v1402 = vand.u32 %v24, 4294901760
  %1403 = vmatpush1.msra.mxu0 %v1402
  %1404 = vmatprep.subr.mxu0 0.0
  %v1405 = vand.u32 %v25, 4294901760
  %1406 = vmatpush1.msra.mxu0 %v1405
  %1407 = vmatprep.subr.mxu0 0.0
  %v1408 = vand.u32 %v26, 4294901760
  %1409 = vmatpush1.msra.mxu0 %v1408
  %1410 = vmatprep.subr.mxu0 0.0
  %v1411 = vand.u32 %v27, 4294901760
  %1412 = vmatpush1.msra.mxu0 %v1411
  %1413 = vmatprep.subr.mxu0 0.0
  %v1414 = vand.u32 %v28, 4294901760
  %1415 = vmatpush1.msra.mxu0 %v1414
  %1416 = vmatprep.subr.mxu0 0.0
  %v1417 = vand.u32 %v29, 4294901760
  %1418 = vmatpush1.msra.mxu0 %v1417
  %1419 = vmatprep.subr.mxu0 0.0
  %1420 = vmatpush1.msra.mxu0 0.0
  %1421 = vmatprep.subr.mxu0 0.0
  %1422 = vmatpush1.msra.mxu0 0.0
  %1423 = vmatprep.subr.mxu0 0.0
  %1424 = vmatpush1.msra.mxu0 0.0
  %1425 = vmatprep.subr.mxu0 0.0
  %1426 = vmatpush1.msra.mxu0 0.0
  %1427 = vmatprep.subr.mxu0 0.0
  %1428 = vmatpush1.msra.mxu0 0.0
  %1429 = vmatprep.subr.mxu0 0.0
  %1430 = vmatpush1.msra.mxu0 0.0
  %1431 = vmatprep.subr.mxu0 0.0
  %1432 = vmatpush1.msra.mxu0 0.0
  %1433 = vmatprep.subr.mxu0 0.0
  %1434 = vmatpush1.msra.mxu0 0.0
  %1435 = vmatprep.subr.mxu0 0.0
  %1436 = vmatpush1.msra.mxu0 0.0
  %1437 = vmatprep.subr.mxu0 0.0
  %1438 = vmatpush1.msra.mxu0 0.0
  %1439 = vmatprep.subr.mxu0 0.0
  %1440 = vmatpush1.msra.mxu0 0.0
  %1441 = vmatprep.subr.mxu0 0.0
  %1442 = vmatpush1.msra.mxu0 0.0
  %1443 = vmatprep.subr.mxu0 0.0
  %1444 = vmatpush1.msra.mxu0 0.0
  %1445 = vmatprep.subr.mxu0 0.0
  %1446 = vmatpush1.msra.mxu0 0.0
  %1447 = vmatprep.subr.mxu0 0.0
  %1448 = vmatpush1.msra.mxu0 0.0
  %1449 = vmatprep.subr.mxu0 0.0
  %1450 = vmatpush1.msra.mxu0 0.0
  %1451 = vmatprep.mubr.f32.mxu0 0.0
  %v1452 = vand.u32 %v1368, 4294901760
  %v1453 = vsub.f32 %v1368, %v1452
  %v1454 = vand.u32 %v1453, 4294901760
  %v1455 = vsub.f32 %v1453, %v1454
  %v1456 = vand.u32 %v1455, 4294901760
  %1457 = vmatmul.mubr.f32.gmra.mrb[0].mxu0 %v1456
  %v1458 = vpop.f32.mrb[0].mxu0
  %v1459 = vadd.f32 0.0, %v1458
  %v1460 = vpop.f32.mrb[0].mxu0
  %1461 = vdwg.mxu0
  %1462 = vmatprep.subr.mxu0 0.0
  %v1463 = vand.u32 %v14, 4294901760
  %v1464 = vsub.f32 %v14, %v1463
  %v1465 = vand.u32 %v1464, 4294901760
  %v1466 = vsub.f32 %v1464, %v1465
  %v1467 = vand.u32 %v1466, 4294901760
  %1468 = vmatpush1.msra.mxu0 %v1467
  %1469 = vmatprep.subr.mxu0 0.0
  %v1470 = vand.u32 %v15, 4294901760
  %v1471 = vsub.f32 %v15, %v1470
  %v1472 = vand.u32 %v1471, 4294901760
  %v1473 = vsub.f32 %v1471, %v1472
  %v1474 = vand.u32 %v1473, 4294901760
  %1475 = vmatpush1.msra.mxu0 %v1474
  %1476 = vmatprep.subr.mxu0 0.0
  %v1477 = vand.u32 %v16, 4294901760
  %v1478 = vsub.f32 %v16, %v1477
  %v1479 = vand.u32 %v1478, 4294901760
  %v1480 = vsub.f32 %v1478, %v1479
  %v1481 = vand.u32 %v1480, 4294901760
  %1482 = vmatpush1.msra.mxu0 %v1481
  %1483 = vmatprep.subr.mxu0 0.0
  %v1484 = vand.u32 %v17, 4294901760
  %v1485 = vsub.f32 %v17, %v1484
  %v1486 = vand.u32 %v1485, 4294901760
  %v1487 = vsub.f32 %v1485, %v1486
  %v1488 = vand.u32 %v1487, 4294901760
  %1489 = vmatpush1.msra.mxu0 %v1488
  %1490 = vmatprep.subr.mxu0 0.0
  %v1491 = vand.u32 %v18, 4294901760
  %v1492 = vsub.f32 %v18, %v1491
  %v1493 = vand.u32 %v1492, 4294901760
  %v1494 = vsub.f32 %v1492, %v1493
  %v1495 = vand.u32 %v1494, 4294901760
  %1496 = vmatpush1.msra.mxu0 %v1495
  %1497 = vmatprep.subr.mxu0 0.0
  %v1498 = vand.u32 %v19, 4294901760
  %v1499 = vsub.f32 %v19, %v1498
  %v1500 = vand.u32 %v1499, 4294901760
  %v1501 = vsub.f32 %v1499, %v1500
  %v1502 = vand.u32 %v1501, 4294901760
  %1503 = vmatpush1.msra.mxu0 %v1502
  %1504 = vmatprep.subr.mxu0 0.0
  %v1505 = vand.u32 %v20, 4294901760
  %v1506 = vsub.f32 %v20, %v1505
  %v1507 = vand.u32 %v1506, 4294901760
  %v1508 = vsub.f32 %v1506, %v1507
  %v1509 = vand.u32 %v1508, 4294901760
  %1510 = vmatpush1.msra.mxu0 %v1509
  %1511 = vmatprep.subr.mxu0 0.0
  %v1512 = vand.u32 %v21, 4294901760
  %v1513 = vsub.f32 %v21, %v1512
  %v1514 = vand.u32 %v1513, 4294901760
  %v1515 = vsub.f32 %v1513, %v1514
  %v1516 = vand.u32 %v1515, 4294901760
  %1517 = vmatpush1.msra.mxu0 %v1516
  %1518 = vmatprep.subr.mxu0 0.0
  %v1519 = vand.u32 %v22, 4294901760
  %v1520 = vsub.f32 %v22, %v1519
  %v1521 = vand.u32 %v1520, 4294901760
  %v1522 = vsub.f32 %v1520, %v1521
  %v1523 = vand.u32 %v1522, 4294901760
  %1524 = vmatpush1.msra.mxu0 %v1523
  %1525 = vmatprep.subr.mxu0 0.0
  %v1526 = vand.u32 %v23, 4294901760
  %v1527 = vsub.f32 %v23, %v1526
  %v1528 = vand.u32 %v1527, 4294901760
  %v1529 = vsub.f32 %v1527, %v1528
  %v1530 = vand.u32 %v1529, 4294901760
  %1531 = vmatpush1.msra.mxu0 %v1530
  %1532 = vmatprep.subr.mxu0 0.0
  %v1533 = vand.u32 %v24, 4294901760
  %v1534 = vsub.f32 %v24, %v1533
  %v1535 = vand.u32 %v1534, 4294901760
  %v1536 = vsub.f32 %v1534, %v1535
  %v1537 = vand.u32 %v1536, 4294901760
  %1538 = vmatpush1.msra.mxu0 %v1537
  %1539 = vmatprep.subr.mxu0 0.0
  %v1540 = vand.u32 %v25, 4294901760
  %v1541 = vsub.f32 %v25, %v1540
  %v1542 = vand.u32 %v1541, 4294901760
  %v1543 = vsub.f32 %v1541, %v1542
  %v1544 = vand.u32 %v1543, 4294901760
  %1545 = vmatpush1.msra.mxu0 %v1544
  %1546 = vmatprep.subr.mxu0 0.0
  %v1547 = vand.u32 %v26, 4294901760
  %v1548 = vsub.f32 %v26, %v1547
  %v1549 = vand.u32 %v1548, 4294901760
  %v1550 = vsub.f32 %v1548, %v1549
  %v1551 = vand.u32 %v1550, 4294901760
  %1552 = vmatpush1.msra.mxu0 %v1551
  %1553 = vmatprep.subr.mxu0 0.0
  %v1554 = vand.u32 %v27, 4294901760
  %v1555 = vsub.f32 %v27, %v1554
  %v1556 = vand.u32 %v1555, 4294901760
  %v1557 = vsub.f32 %v1555, %v1556
  %v1558 = vand.u32 %v1557, 4294901760
  %1559 = vmatpush1.msra.mxu0 %v1558
  %1560 = vmatprep.subr.mxu0 0.0
  %v1561 = vand.u32 %v28, 4294901760
  %v1562 = vsub.f32 %v28, %v1561
  %v1563 = vand.u32 %v1562, 4294901760
  %v1564 = vsub.f32 %v1562, %v1563
  %v1565 = vand.u32 %v1564, 4294901760
  %1566 = vmatpush1.msra.mxu0 %v1565
  %1567 = vmatprep.subr.mxu0 0.0
  %v1568 = vand.u32 %v29, 4294901760
  %v1569 = vsub.f32 %v29, %v1568
  %v1570 = vand.u32 %v1569, 4294901760
  %v1571 = vsub.f32 %v1569, %v1570
  %v1572 = vand.u32 %v1571, 4294901760
  %1573 = vmatpush1.msra.mxu0 %v1572
  %1574 = vmatprep.subr.mxu0 0.0
  %1575 = vmatpush1.msra.mxu0 0.0
  %1576 = vmatprep.subr.mxu0 0.0
  %1577 = vmatpush1.msra.mxu0 0.0
  %1578 = vmatprep.subr.mxu0 0.0
  %1579 = vmatpush1.msra.mxu0 0.0
  %1580 = vmatprep.subr.mxu0 0.0
  %1581 = vmatpush1.msra.mxu0 0.0
  %1582 = vmatprep.subr.mxu0 0.0
  %1583 = vmatpush1.msra.mxu0 0.0
  %1584 = vmatprep.subr.mxu0 0.0
  %1585 = vmatpush1.msra.mxu0 0.0
  %1586 = vmatprep.subr.mxu0 0.0
  %1587 = vmatpush1.msra.mxu0 0.0
  %1588 = vmatprep.subr.mxu0 0.0
  %1589 = vmatpush1.msra.mxu0 0.0
  %1590 = vmatprep.subr.mxu0 0.0
  %1591 = vmatpush1.msra.mxu0 0.0
  %1592 = vmatprep.subr.mxu0 0.0
  %1593 = vmatpush1.msra.mxu0 0.0
  %1594 = vmatprep.subr.mxu0 0.0
  %1595 = vmatpush1.msra.mxu0 0.0
  %1596 = vmatprep.subr.mxu0 0.0
  %1597 = vmatpush1.msra.mxu0 0.0
  %1598 = vmatprep.subr.mxu0 0.0
  %1599 = vmatpush1.msra.mxu0 0.0
  %1600 = vmatprep.subr.mxu0 0.0
  %1601 = vmatpush1.msra.mxu0 0.0
  %1602 = vmatprep.subr.mxu0 0.0
  %1603 = vmatpush1.msra.mxu0 0.0
  %1604 = vmatprep.subr.mxu0 0.0
  %1605 = vmatpush1.msra.mxu0 0.0
  %1606 = vmatprep.mubr.f32.mxu0 0.0
  %v1607 = vand.u32 %v1368, 4294901760
  %1608 = vmatmul.mubr.f32.gmra.mrb[0].mxu0 %v1607
  %v1609 = vpop.f32.mrb[0].mxu0
  %v1610 = vadd.f32 %v1459, %v1609
  %v1611 = vpop.f32.mrb[0].mxu0
  %1612 = vdwg.mxu0
  %1613 = vmatprep.subr.mxu0 0.0
  %v1614 = vand.u32 %v14, 4294901760
  %v1615 = vsub.f32 %v14, %v1614
  %1616 = vmatpush1.msra.mxu0 %v1615
  %1617 = vmatprep.subr.mxu0 0.0
  %v1618 = vand.u32 %v15, 4294901760
  %v1619 = vsub.f32 %v15, %v1618
  %1620 = vmatpush1.msra.mxu0 %v1619
  %1621 = vmatprep.subr.mxu0 0.0
  %v1622 = vand.u32 %v16, 4294901760
  %v1623 = vsub.f32 %v16, %v1622
  %1624 = vmatpush1.msra.mxu0 %v1623
  %1625 = vmatprep.subr.mxu0 0.0
  %v1626 = vand.u32 %v17, 4294901760
  %v1627 = vsub.f32 %v17, %v1626
  %1628 = vmatpush1.msra.mxu0 %v1627
  %1629 = vmatprep.subr.mxu0 0.0
  %v1630 = vand.u32 %v18, 4294901760
  %v1631 = vsub.f32 %v18, %v1630
  %1632 = vmatpush1.msra.mxu0 %v1631
  %1633 = vmatprep.subr.mxu0 0.0
  %v1634 = vand.u32 %v19, 4294901760
  %v1635 = vsub.f32 %v19, %v1634
  %1636 = vmatpush1.msra.mxu0 %v1635
  %1637 = vmatprep.subr.mxu0 0.0
  %v1638 = vand.u32 %v20, 4294901760
  %v1639 = vsub.f32 %v20, %v1638
  %1640 = vmatpush1.msra.mxu0 %v1639
  %1641 = vmatprep.subr.mxu0 0.0
  %v1642 = vand.u32 %v21, 4294901760
  %v1643 = vsub.f32 %v21, %v1642
  %1644 = vmatpush1.msra.mxu0 %v1643
  %1645 = vmatprep.subr.mxu0 0.0
  %v1646 = vand.u32 %v22, 4294901760
  %v1647 = vsub.f32 %v22, %v1646
  %1648 = vmatpush1.msra.mxu0 %v1647
  %1649 = vmatprep.subr.mxu0 0.0
  %v1650 = vand.u32 %v23, 4294901760
  %v1651 = vsub.f32 %v23, %v1650
  %1652 = vmatpush1.msra.mxu0 %v1651
  %1653 = vmatprep.subr.mxu0 0.0
  %v1654 = vand.u32 %v24, 4294901760
  %v1655 = vsub.f32 %v24, %v1654
  %1656 = vmatpush1.msra.mxu0 %v1655
  %1657 = vmatprep.subr.mxu0 0.0
  %v1658 = vand.u32 %v25, 4294901760
  %v1659 = vsub.f32 %v25, %v1658
  %1660 = vmatpush1.msra.mxu0 %v1659
  %1661 = vmatprep.subr.mxu0 0.0
  %v1662 = vand.u32 %v26, 4294901760
  %v1663 = vsub.f32 %v26, %v1662
  %1664 = vmatpush1.msra.mxu0 %v1663
  %1665 = vmatprep.subr.mxu0 0.0
  %v1666 = vand.u32 %v27, 4294901760
  %v1667 = vsub.f32 %v27, %v1666
  %1668 = vmatpush1.msra.mxu0 %v1667
  %1669 = vmatprep.subr.mxu0 0.0
  %v1670 = vand.u32 %v28, 4294901760
  %v1671 = vsub.f32 %v28, %v1670
  %1672 = vmatpush1.msra.mxu0 %v1671
  %1673 = vmatprep.subr.mxu0 0.0
  %v1674 = vand.u32 %v29, 4294901760
  %v1675 = vsub.f32 %v29, %v1674
  %1676 = vmatpush1.msra.mxu0 %v1675
  %1677 = vmatprep.subr.mxu0 0.0
  %1678 = vmatpush1.msra.mxu0 0.0
  %1679 = vmatprep.subr.mxu0 0.0
  %1680 = vmatpush1.msra.mxu0 0.0
  %1681 = vmatprep.subr.mxu0 0.0
  %1682 = vmatpush1.msra.mxu0 0.0
  %1683 = vmatprep.subr.mxu0 0.0
  %1684 = vmatpush1.msra.mxu0 0.0
  %1685 = vmatprep.subr.mxu0 0.0
  %1686 = vmatpush1.msra.mxu0 0.0
  %1687 = vmatprep.subr.mxu0 0.0
  %1688 = vmatpush1.msra.mxu0 0.0
  %1689 = vmatprep.subr.mxu0 0.0
  %1690 = vmatpush1.msra.mxu0 0.0
  %1691 = vmatprep.subr.mxu0 0.0
  %1692 = vmatpush1.msra.mxu0 0.0
  %1693 = vmatprep.subr.mxu0 0.0
  %1694 = vmatpush1.msra.mxu0 0.0
  %1695 = vmatprep.subr.mxu0 0.0
  %1696 = vmatpush1.msra.mxu0 0.0
  %1697 = vmatprep.subr.mxu0 0.0
  %1698 = vmatpush1.msra.mxu0 0.0
  %1699 = vmatprep.subr.mxu0 0.0
  %1700 = vmatpush1.msra.mxu0 0.0
  %1701 = vmatprep.subr.mxu0 0.0
  %1702 = vmatpush1.msra.mxu0 0.0
  %1703 = vmatprep.subr.mxu0 0.0
  %1704 = vmatpush1.msra.mxu0 0.0
  %1705 = vmatprep.subr.mxu0 0.0
  %1706 = vmatpush1.msra.mxu0 0.0
  %1707 = vmatprep.subr.mxu0 0.0
  %1708 = vmatpush1.msra.mxu0 0.0
  %1709 = vmatprep.mubr.f32.mxu0 0.0
  %v1710 = vand.u32 %v1368, 4294901760
  %v1711 = vsub.f32 %v1368, %v1710
  %1712 = vmatmul.mubr.f32.gmra.mrb[0].mxu0 %v1711
  %v1713 = vpop.f32.mrb[0].mxu0
  %v1714 = vadd.f32 %v1610, %v1713
  %v1715 = vpop.f32.mrb[0].mxu0
  %1716 = vdwg.mxu0
  %1717 = vmatprep.subr.mxu0 0.0
  %v1718 = vand.u32 %v14, 4294901760
  %1719 = vmatpush1.msra.mxu0 %v1718
  %1720 = vmatprep.subr.mxu0 0.0
  %v1721 = vand.u32 %v15, 4294901760
  %1722 = vmatpush1.msra.mxu0 %v1721
  %1723 = vmatprep.subr.mxu0 0.0
  %v1724 = vand.u32 %v16, 4294901760
  %1725 = vmatpush1.msra.mxu0 %v1724
  %1726 = vmatprep.subr.mxu0 0.0
  %v1727 = vand.u32 %v17, 4294901760
  %1728 = vmatpush1.msra.mxu0 %v1727
  %1729 = vmatprep.subr.mxu0 0.0
  %v1730 = vand.u32 %v18, 4294901760
  %1731 = vmatpush1.msra.mxu0 %v1730
  %1732 = vmatprep.subr.mxu0 0.0
  %v1733 = vand.u32 %v19, 4294901760
  %1734 = vmatpush1.msra.mxu0 %v1733
  %1735 = vmatprep.subr.mxu0 0.0
  %v1736 = vand.u32 %v20, 4294901760
  %1737 = vmatpush1.msra.mxu0 %v1736
  %1738 = vmatprep.subr.mxu0 0.0
  %v1739 = vand.u32 %v21, 4294901760
  %1740 = vmatpush1.msra.mxu0 %v1739
  %1741 = vmatprep.subr.mxu0 0.0
  %v1742 = vand.u32 %v22, 4294901760
  %1743 = vmatpush1.msra.mxu0 %v1742
  %1744 = vmatprep.subr.mxu0 0.0
  %v1745 = vand.u32 %v23, 4294901760
  %1746 = vmatpush1.msra.mxu0 %v1745
  %1747 = vmatprep.subr.mxu0 0.0
  %v1748 = vand.u32 %v24, 4294901760
  %1749 = vmatpush1.msra.mxu0 %v1748
  %1750 = vmatprep.subr.mxu0 0.0
  %v1751 = vand.u32 %v25, 4294901760
  %1752 = vmatpush1.msra.mxu0 %v1751
  %1753 = vmatprep.subr.mxu0 0.0
  %v1754 = vand.u32 %v26, 4294901760
  %1755 = vmatpush1.msra.mxu0 %v1754
  %1756 = vmatprep.subr.mxu0 0.0
  %v1757 = vand.u32 %v27, 4294901760
  %1758 = vmatpush1.msra.mxu0 %v1757
  %1759 = vmatprep.subr.mxu0 0.0
  %v1760 = vand.u32 %v28, 4294901760
  %1761 = vmatpush1.msra.mxu0 %v1760
  %1762 = vmatprep.subr.mxu0 0.0
  %v1763 = vand.u32 %v29, 4294901760
  %1764 = vmatpush1.msra.mxu0 %v1763
  %1765 = vmatprep.subr.mxu0 0.0
  %1766 = vmatpush1.msra.mxu0 0.0
  %1767 = vmatprep.subr.mxu0 0.0
  %1768 = vmatpush1.msra.mxu0 0.0
  %1769 = vmatprep.subr.mxu0 0.0
  %1770 = vmatpush1.msra.mxu0 0.0
  %1771 = vmatprep.subr.mxu0 0.0
  %1772 = vmatpush1.msra.mxu0 0.0
  %1773 = vmatprep.subr.mxu0 0.0
  %1774 = vmatpush1.msra.mxu0 0.0
  %1775 = vmatprep.subr.mxu0 0.0
  %1776 = vmatpush1.msra.mxu0 0.0
  %1777 = vmatprep.subr.mxu0 0.0
  %1778 = vmatpush1.msra.mxu0 0.0
  %1779 = vmatprep.subr.mxu0 0.0
  %1780 = vmatpush1.msra.mxu0 0.0
  %1781 = vmatprep.subr.mxu0 0.0
  %1782 = vmatpush1.msra.mxu0 0.0
  %1783 = vmatprep.subr.mxu0 0.0
  %1784 = vmatpush1.msra.mxu0 0.0
  %1785 = vmatprep.subr.mxu0 0.0
  %1786 = vmatpush1.msra.mxu0 0.0
  %1787 = vmatprep.subr.mxu0 0.0
  %1788 = vmatpush1.msra.mxu0 0.0
  %1789 = vmatprep.subr.mxu0 0.0
  %1790 = vmatpush1.msra.mxu0 0.0
  %1791 = vmatprep.subr.mxu0 0.0
  %1792 = vmatpush1.msra.mxu0 0.0
  %1793 = vmatprep.subr.mxu0 0.0
  %1794 = vmatpush1.msra.mxu0 0.0
  %1795 = vmatprep.subr.mxu0 0.0
  %1796 = vmatpush1.msra.mxu0 0.0
  %1797 = vmatprep.mubr.f32.mxu0 0.0
  %v1798 = vand.u32 %v1368, 4294901760
  %v1799 = vsub.f32 %v1368, %v1798
  %v1800 = vand.u32 %v1799, 4294901760
  %1801 = vmatmul.mubr.f32.gmra.mrb[0].mxu0 %v1800
  %v1802 = vpop.f32.mrb[0].mxu0
  %v1803 = vadd.f32 %v1714, %v1802
  %v1804 = vpop.f32.mrb[0].mxu0
  %1805 = vdwg.mxu0
  %1806 = vmatprep.subr.mxu0 0.0
  %v1807 = vand.u32 %v14, 4294901760
  %v1808 = vsub.f32 %v14, %v1807
  %v1809 = vand.u32 %v1808, 4294901760
  %1810 = vmatpush1.msra.mxu0 %v1809
  %1811 = vmatprep.subr.mxu0 0.0
  %v1812 = vand.u32 %v15, 4294901760
  %v1813 = vsub.f32 %v15, %v1812
  %v1814 = vand.u32 %v1813, 4294901760
  %1815 = vmatpush1.msra.mxu0 %v1814
  %1816 = vmatprep.subr.mxu0 0.0
  %v1817 = vand.u32 %v16, 4294901760
  %v1818 = vsub.f32 %v16, %v1817
  %v1819 = vand.u32 %v1818, 4294901760
  %1820 = vmatpush1.msra.mxu0 %v1819
  %1821 = vmatprep.subr.mxu0 0.0
  %v1822 = vand.u32 %v17, 4294901760
  %v1823 = vsub.f32 %v17, %v1822
  %v1824 = vand.u32 %v1823, 4294901760
  %1825 = vmatpush1.msra.mxu0 %v1824
  %1826 = vmatprep.subr.mxu0 0.0
  %v1827 = vand.u32 %v18, 4294901760
  %v1828 = vsub.f32 %v18, %v1827
  %v1829 = vand.u32 %v1828, 4294901760
  %1830 = vmatpush1.msra.mxu0 %v1829
  %1831 = vmatprep.subr.mxu0 0.0
  %v1832 = vand.u32 %v19, 4294901760
  %v1833 = vsub.f32 %v19, %v1832
  %v1834 = vand.u32 %v1833, 4294901760
  %1835 = vmatpush1.msra.mxu0 %v1834
  %1836 = vmatprep.subr.mxu0 0.0
  %v1837 = vand.u32 %v20, 4294901760
  %v1838 = vsub.f32 %v20, %v1837
  %v1839 = vand.u32 %v1838, 4294901760
  %1840 = vmatpush1.msra.mxu0 %v1839
  %1841 = vmatprep.subr.mxu0 0.0
  %v1842 = vand.u32 %v21, 4294901760
  %v1843 = vsub.f32 %v21, %v1842
  %v1844 = vand.u32 %v1843, 4294901760
  %1845 = vmatpush1.msra.mxu0 %v1844
  %1846 = vmatprep.subr.mxu0 0.0
  %v1847 = vand.u32 %v22, 4294901760
  %v1848 = vsub.f32 %v22, %v1847
  %v1849 = vand.u32 %v1848, 4294901760
  %1850 = vmatpush1.msra.mxu0 %v1849
  %1851 = vmatprep.subr.mxu0 0.0
  %v1852 = vand.u32 %v23, 4294901760
  %v1853 = vsub.f32 %v23, %v1852
  %v1854 = vand.u32 %v1853, 4294901760
  %1855 = vmatpush1.msra.mxu0 %v1854
  %1856 = vmatprep.subr.mxu0 0.0
  %v1857 = vand.u32 %v24, 4294901760
  %v1858 = vsub.f32 %v24, %v1857
  %v1859 = vand.u32 %v1858, 4294901760
  %1860 = vmatpush1.msra.mxu0 %v1859
  %1861 = vmatprep.subr.mxu0 0.0
  %v1862 = vand.u32 %v25, 4294901760
  %v1863 = vsub.f32 %v25, %v1862
  %v1864 = vand.u32 %v1863, 4294901760
  %1865 = vmatpush1.msra.mxu0 %v1864
  %1866 = vmatprep.subr.mxu0 0.0
  %v1867 = vand.u32 %v26, 4294901760
  %v1868 = vsub.f32 %v26, %v1867
  %v1869 = vand.u32 %v1868, 4294901760
  %1870 = vmatpush1.msra.mxu0 %v1869
  %1871 = vmatprep.subr.mxu0 0.0
  %v1872 = vand.u32 %v27, 4294901760
  %v1873 = vsub.f32 %v27, %v1872
  %v1874 = vand.u32 %v1873, 4294901760
  %1875 = vmatpush1.msra.mxu0 %v1874
  %1876 = vmatprep.subr.mxu0 0.0
  %v1877 = vand.u32 %v28, 4294901760
  %v1878 = vsub.f32 %v28, %v1877
  %v1879 = vand.u32 %v1878, 4294901760
  %1880 = vmatpush1.msra.mxu0 %v1879
  %1881 = vmatprep.subr.mxu0 0.0
  %v1882 = vand.u32 %v29, 4294901760
  %v1883 = vsub.f32 %v29, %v1882
  %v1884 = vand.u32 %v1883, 4294901760
  %1885 = vmatpush1.msra.mxu0 %v1884
  %1886 = vmatprep.subr.mxu0 0.0
  %1887 = vmatpush1.msra.mxu0 0.0
  %1888 = vmatprep.subr.mxu0 0.0
  %1889 = vmatpush1.msra.mxu0 0.0
  %1890 = vmatprep.subr.mxu0 0.0
  %1891 = vmatpush1.msra.mxu0 0.0
  %1892 = vmatprep.subr.mxu0 0.0
  %1893 = vmatpush1.msra.mxu0 0.0
  %1894 = vmatprep.subr.mxu0 0.0
  %1895 = vmatpush1.msra.mxu0 0.0
  %1896 = vmatprep.subr.mxu0 0.0
  %1897 = vmatpush1.msra.mxu0 0.0
  %1898 = vmatprep.subr.mxu0 0.0
  %1899 = vmatpush1.msra.mxu0 0.0
  %1900 = vmatprep.subr.mxu0 0.0
  %1901 = vmatpush1.msra.mxu0 0.0
  %1902 = vmatprep.subr.mxu0 0.0
  %1903 = vmatpush1.msra.mxu0 0.0
  %1904 = vmatprep.subr.mxu0 0.0
  %1905 = vmatpush1.msra.mxu0 0.0
  %1906 = vmatprep.subr.mxu0 0.0
  %1907 = vmatpush1.msra.mxu0 0.0
  %1908 = vmatprep.subr.mxu0 0.0
  %1909 = vmatpush1.msra.mxu0 0.0
  %1910 = vmatprep.subr.mxu0 0.0
  %1911 = vmatpush1.msra.mxu0 0.0
  %1912 = vmatprep.subr.mxu0 0.0
  %1913 = vmatpush1.msra.mxu0 0.0
  %1914 = vmatprep.subr.mxu0 0.0
  %1915 = vmatpush1.msra.mxu0 0.0
  %1916 = vmatprep.subr.mxu0 0.0
  %1917 = vmatpush1.msra.mxu0 0.0
  %1918 = vmatprep.mubr.f32.mxu0 0.0
  %v1919 = vand.u32 %v1368, 4294901760
  %1920 = vmatmul.mubr.f32.gmra.mrb[0].mxu0 %v1919
  %v1921 = vpop.f32.mrb[0].mxu0
  %v1922 = vadd.f32 %v1803, %v1921
  %v1923 = vpop.f32.mrb[0].mxu0
  %1924 = vdwg.mxu0
  %1925 = vmatprep.subr.mxu0 0.0
  %v1926 = vand.u32 %v14, 4294901760
  %1927 = vmatpush1.msra.mxu0 %v1926
  %1928 = vmatprep.subr.mxu0 0.0
  %v1929 = vand.u32 %v15, 4294901760
  %1930 = vmatpush1.msra.mxu0 %v1929
  %1931 = vmatprep.subr.mxu0 0.0
  %v1932 = vand.u32 %v16, 4294901760
  %1933 = vmatpush1.msra.mxu0 %v1932
  %1934 = vmatprep.subr.mxu0 0.0
  %v1935 = vand.u32 %v17, 4294901760
  %1936 = vmatpush1.msra.mxu0 %v1935
  %1937 = vmatprep.subr.mxu0 0.0
  %v1938 = vand.u32 %v18, 4294901760
  %1939 = vmatpush1.msra.mxu0 %v1938
  %1940 = vmatprep.subr.mxu0 0.0
  %v1941 = vand.u32 %v19, 4294901760
  %1942 = vmatpush1.msra.mxu0 %v1941
  %1943 = vmatprep.subr.mxu0 0.0
  %v1944 = vand.u32 %v20, 4294901760
  %1945 = vmatpush1.msra.mxu0 %v1944
  %1946 = vmatprep.subr.mxu0 0.0
  %v1947 = vand.u32 %v21, 4294901760
  %1948 = vmatpush1.msra.mxu0 %v1947
  %1949 = vmatprep.subr.mxu0 0.0
  %v1950 = vand.u32 %v22, 4294901760
  %1951 = vmatpush1.msra.mxu0 %v1950
  %1952 = vmatprep.subr.mxu0 0.0
  %v1953 = vand.u32 %v23, 4294901760
  %1954 = vmatpush1.msra.mxu0 %v1953
  %1955 = vmatprep.subr.mxu0 0.0
  %v1956 = vand.u32 %v24, 4294901760
  %1957 = vmatpush1.msra.mxu0 %v1956
  %1958 = vmatprep.subr.mxu0 0.0
  %v1959 = vand.u32 %v25, 4294901760
  %1960 = vmatpush1.msra.mxu0 %v1959
  %1961 = vmatprep.subr.mxu0 0.0
  %v1962 = vand.u32 %v26, 4294901760
  %1963 = vmatpush1.msra.mxu0 %v1962
  %1964 = vmatprep.subr.mxu0 0.0
  %v1965 = vand.u32 %v27, 4294901760
  %1966 = vmatpush1.msra.mxu0 %v1965
  %1967 = vmatprep.subr.mxu0 0.0
  %v1968 = vand.u32 %v28, 4294901760
  %1969 = vmatpush1.msra.mxu0 %v1968
  %1970 = vmatprep.subr.mxu0 0.0
  %v1971 = vand.u32 %v29, 4294901760
  %1972 = vmatpush1.msra.mxu0 %v1971
  %1973 = vmatprep.subr.mxu0 0.0
  %1974 = vmatpush1.msra.mxu0 0.0
  %1975 = vmatprep.subr.mxu0 0.0
  %1976 = vmatpush1.msra.mxu0 0.0
  %1977 = vmatprep.subr.mxu0 0.0
  %1978 = vmatpush1.msra.mxu0 0.0
  %1979 = vmatprep.subr.mxu0 0.0
  %1980 = vmatpush1.msra.mxu0 0.0
  %1981 = vmatprep.subr.mxu0 0.0
  %1982 = vmatpush1.msra.mxu0 0.0
  %1983 = vmatprep.subr.mxu0 0.0
  %1984 = vmatpush1.msra.mxu0 0.0
  %1985 = vmatprep.subr.mxu0 0.0
  %1986 = vmatpush1.msra.mxu0 0.0
  %1987 = vmatprep.subr.mxu0 0.0
  %1988 = vmatpush1.msra.mxu0 0.0
  %1989 = vmatprep.subr.mxu0 0.0
  %1990 = vmatpush1.msra.mxu0 0.0
  %1991 = vmatprep.subr.mxu0 0.0
  %1992 = vmatpush1.msra.mxu0 0.0
  %1993 = vmatprep.subr.mxu0 0.0
  %1994 = vmatpush1.msra.mxu0 0.0
  %1995 = vmatprep.subr.mxu0 0.0
  %1996 = vmatpush1.msra.mxu0 0.0
  %1997 = vmatprep.subr.mxu0 0.0
  %1998 = vmatpush1.msra.mxu0 0.0
  %1999 = vmatprep.subr.mxu0 0.0
  %2000 = vmatpush1.msra.mxu0 0.0
  %2001 = vmatprep.subr.mxu0 0.0
  %2002 = vmatpush1.msra.mxu0 0.0
  %2003 = vmatprep.subr.mxu0 0.0
  %2004 = vmatpush1.msra.mxu0 0.0
  %2005 = vmatprep.mubr.f32.mxu0 0.0
  %v2006 = vand.u32 %v1368, 4294901760
  %2007 = vmatmul.mubr.f32.gmra.mrb[0].mxu0 %v2006
  %v2008 = vpop.f32.mrb[0].mxu0
  %v2009 = vadd.f32 %v1922, %v2008
  %v2010 = vpop.f32.mrb[0].mxu0
  %2011 = vdwg.mxu0
  %v2012 = vadd.f32 %v1370, %v2009
  %v2013 = vmul.f32 %v2012, %v33
  %v2014 = vtanh.pop %v2013
  %v2015 = vmul.f32 %v2014, %v33
  %v2016 = vadd.f32 %v2015, %v34
  %2017 = vrot.lane.b32.xlu0 %v2016, 96
  %v2018 = vpop.permute.xlu0 %2017
  %2019 = vrot.lane.b32.xlu0 %v2016, 64
  %v2020 = vpop.permute.xlu0 %2019
  %2021 = vrot.lane.b32.xlu0 %v2016, 32
  %v2022 = vpop.permute.xlu0 %2021
  %v2023 = vmul.f32 %v2018, %v1366
  %v2024 = vmul.f32 %v2016, %v2022
  %v2025 = vadd.f32 %v2023, %v2024
  %v2026 = vtanh.pop %v2025
  %v2027 = vmul.f32 %v2020, %v2026
  %s2028 = scalar_lea.vmem %s0, 32
  %v2029 = vld [vmem:[%s2028] sm:$0xff]
  %2030 = vmatprep.subr.mxu0 0.0
  %v2031 = vand.u32 %v14, 4294901760
  %2032 = vmatpush1.msra.mxu0 %v2031
  %2033 = vmatprep.subr.mxu0 0.0
  %v2034 = vand.u32 %v15, 4294901760
  %2035 = vmatpush1.msra.mxu0 %v2034
  %2036 = vmatprep.subr.mxu0 0.0
  %v2037 = vand.u32 %v16, 4294901760
  %2038 = vmatpush1.msra.mxu0 %v2037
  %2039 = vmatprep.subr.mxu0 0.0
  %v2040 = vand.u32 %v17, 4294901760
  %2041 = vmatpush1.msra.mxu0 %v2040
  %2042 = vmatprep.subr.mxu0 0.0
  %v2043 = vand.u32 %v18, 4294901760
  %2044 = vmatpush1.msra.mxu0 %v2043
  %2045 = vmatprep.subr.mxu0 0.0
  %v2046 = vand.u32 %v19, 4294901760
  %2047 = vmatpush1.msra.mxu0 %v2046
  %2048 = vmatprep.subr.mxu0 0.0
  %v2049 = vand.u32 %v20, 4294901760
  %2050 = vmatpush1.msra.mxu0 %v2049
  %2051 = vmatprep.subr.mxu0 0.0
  %v2052 = vand.u32 %v21, 4294901760
  %2053 = vmatpush1.msra.mxu0 %v2052
  %2054 = vmatprep.subr.mxu0 0.0
  %v2055 = vand.u32 %v22, 4294901760
  %2056 = vmatpush1.msra.mxu0 %v2055
  %2057 = vmatprep.subr.mxu0 0.0
  %v2058 = vand.u32 %v23, 4294901760
  %2059 = vmatpush1.msra.mxu0 %v2058
  %2060 = vmatprep.subr.mxu0 0.0
  %v2061 = vand.u32 %v24, 4294901760
  %2062 = vmatpush1.msra.mxu0 %v2061
  %2063 = vmatprep.subr.mxu0 0.0
  %v2064 = vand.u32 %v25, 4294901760
  %2065 = vmatpush1.msra.mxu0 %v2064
  %2066 = vmatprep.subr.mxu0 0.0
  %v2067 = vand.u32 %v26, 4294901760
  %2068 = vmatpush1.msra.mxu0 %v2067
  %2069 = vmatprep.subr.mxu0 0.0
  %v2070 = vand.u32 %v27, 4294901760
  %2071 = vmatpush1.msra.mxu0 %v2070
  %2072 = vmatprep.subr.mxu0 0.0
  %v2073 = vand.u32 %v28, 4294901760
  %2074 = vmatpush1.msra.mxu0 %v2073
  %2075 = vmatprep.subr.mxu0 0.0
  %v2076 = vand.u32 %v29, 4294901760
  %2077 = vmatpush1.msra.mxu0 %v2076
  %2078 = vmatprep.subr.mxu0 0.0
  %2079 = vmatpush1.msra.mxu0 0.0
  %2080 = vmatprep.subr.mxu0 0.0
  %2081 = vmatpush1.msra.mxu0 0.0
  %2082 = vmatprep.subr.mxu0 0.0
  %2083 = vmatpush1.msra.mxu0 0.0
  %2084 = vmatprep.subr.mxu0 0.0
  %2085 = vmatpush1.msra.mxu0 0.0
  %2086 = vmatprep.subr.mxu0 0.0
  %2087 = vmatpush1.msra.mxu0 0.0
  %2088 = vmatprep.subr.mxu0 0.0
  %2089 = vmatpush1.msra.mxu0 0.0
  %2090 = vmatprep.subr.mxu0 0.0
  %2091 = vmatpush1.msra.mxu0 0.0
  %2092 = vmatprep.subr.mxu0 0.0
  %2093 = vmatpush1.msra.mxu0 0.0
  %2094 = vmatprep.subr.mxu0 0.0
  %2095 = vmatpush1.msra.mxu0 0.0
  %2096 = vmatprep.subr.mxu0 0.0
  %2097 = vmatpush1.msra.mxu0 0.0
  %2098 = vmatprep.subr.mxu0 0.0
  %2099 = vmatpush1.msra.mxu0 0.0
  %2100 = vmatprep.subr.mxu0 0.0
  %2101 = vmatpush1.msra.mxu0 0.0
  %2102 = vmatprep.subr.mxu0 0.0
  %2103 = vmatpush1.msra.mxu0 0.0
  %2104 = vmatprep.subr.mxu0 0.0
  %2105 = vmatpush1.msra.mxu0 0.0
  %2106 = vmatprep.subr.mxu0 0.0
  %2107 = vmatpush1.msra.mxu0 0.0
  %2108 = vmatprep.subr.mxu0 0.0
  %2109 = vmatpush1.msra.mxu0 0.0
  %2110 = vmatprep.mubr.f32.mxu0 0.0
  %v2111 = vand.u32 %v2027, 4294901760
  %v2112 = vsub.f32 %v2027, %v2111
  %v2113 = vand.u32 %v2112, 4294901760
  %v2114 = vsub.f32 %v2112, %v2113
  %v2115 = vand.u32 %v2114, 4294901760
  %2116 = vmatmul.mubr.f32.gmra.mrb[0].mxu0 %v2115
  %v2117 = vpop.f32.mrb[0].mxu0
  %v2118 = vadd.f32 0.0, %v2117
  %v2119 = vpop.f32.mrb[0].mxu0
  %2120 = vdwg.mxu0
  %2121 = vmatprep.subr.mxu0 0.0
  %v2122 = vand.u32 %v14, 4294901760
  %v2123 = vsub.f32 %v14, %v2122
  %v2124 = vand.u32 %v2123, 4294901760
  %v2125 = vsub.f32 %v2123, %v2124
  %v2126 = vand.u32 %v2125, 4294901760
  %2127 = vmatpush1.msra.mxu0 %v2126
  %2128 = vmatprep.subr.mxu0 0.0
  %v2129 = vand.u32 %v15, 4294901760
  %v2130 = vsub.f32 %v15, %v2129
  %v2131 = vand.u32 %v2130, 4294901760
  %v2132 = vsub.f32 %v2130, %v2131
  %v2133 = vand.u32 %v2132, 4294901760
  %2134 = vmatpush1.msra.mxu0 %v2133
  %2135 = vmatprep.subr.mxu0 0.0
  %v2136 = vand.u32 %v16, 4294901760
  %v2137 = vsub.f32 %v16, %v2136
  %v2138 = vand.u32 %v2137, 4294901760
  %v2139 = vsub.f32 %v2137, %v2138
  %v2140 = vand.u32 %v2139, 4294901760
  %2141 = vmatpush1.msra.mxu0 %v2140
  %2142 = vmatprep.subr.mxu0 0.0
  %v2143 = vand.u32 %v17, 4294901760
  %v2144 = vsub.f32 %v17, %v2143
  %v2145 = vand.u32 %v2144, 4294901760
  %v2146 = vsub.f32 %v2144, %v2145
  %v2147 = vand.u32 %v2146, 4294901760
  %2148 = vmatpush1.msra.mxu0 %v2147
  %2149 = vmatprep.subr.mxu0 0.0
  %v2150 = vand.u32 %v18, 4294901760
  %v2151 = vsub.f32 %v18, %v2150
  %v2152 = vand.u32 %v2151, 4294901760
  %v2153 = vsub.f32 %v2151, %v2152
  %v2154 = vand.u32 %v2153, 4294901760
  %2155 = vmatpush1.msra.mxu0 %v2154
  %2156 = vmatprep.subr.mxu0 0.0
  %v2157 = vand.u32 %v19, 4294901760
  %v2158 = vsub.f32 %v19, %v2157
  %v2159 = vand.u32 %v2158, 4294901760
  %v2160 = vsub.f32 %v2158, %v2159
  %v2161 = vand.u32 %v2160, 4294901760
  %2162 = vmatpush1.msra.mxu0 %v2161
  %2163 = vmatprep.subr.mxu0 0.0
  %v2164 = vand.u32 %v20, 4294901760
  %v2165 = vsub.f32 %v20, %v2164
  %v2166 = vand.u32 %v2165, 4294901760
  %v2167 = vsub.f32 %v2165, %v2166
  %v2168 = vand.u32 %v2167, 4294901760
  %2169 = vmatpush1.msra.mxu0 %v2168
  %2170 = vmatprep.subr.mxu0 0.0
  %v2171 = vand.u32 %v21, 4294901760
  %v2172 = vsub.f32 %v21, %v2171
  %v2173 = vand.u32 %v2172, 4294901760
  %v2174 = vsub.f32 %v2172, %v2173
  %v2175 = vand.u32 %v2174, 4294901760
  %2176 = vmatpush1.msra.mxu0 %v2175
  %2177 = vmatprep.subr.mxu0 0.0
  %v2178 = vand.u32 %v22, 4294901760
  %v2179 = vsub.f32 %v22, %v2178
  %v2180 = vand.u32 %v2179, 4294901760
  %v2181 = vsub.f32 %v2179, %v2180
  %v2182 = vand.u32 %v2181, 4294901760
  %2183 = vmatpush1.msra.mxu0 %v2182
  %2184 = vmatprep.subr.mxu0 0.0
  %v2185 = vand.u32 %v23, 4294901760
  %v2186 = vsub.f32 %v23, %v2185
  %v2187 = vand.u32 %v2186, 4294901760
  %v2188 = vsub.f32 %v2186, %v2187
  %v2189 = vand.u32 %v2188, 4294901760
  %2190 = vmatpush1.msra.mxu0 %v2189
  %2191 = vmatprep.subr.mxu0 0.0
  %v2192 = vand.u32 %v24, 4294901760
  %v2193 = vsub.f32 %v24, %v2192
  %v2194 = vand.u32 %v2193, 4294901760
  %v2195 = vsub.f32 %v2193, %v2194
  %v2196 = vand.u32 %v2195, 4294901760
  %2197 = vmatpush1.msra.mxu0 %v2196
  %2198 = vmatprep.subr.mxu0 0.0
  %v2199 = vand.u32 %v25, 4294901760
  %v2200 = vsub.f32 %v25, %v2199
  %v2201 = vand.u32 %v2200, 4294901760
  %v2202 = vsub.f32 %v2200, %v2201
  %v2203 = vand.u32 %v2202, 4294901760
  %2204 = vmatpush1.msra.mxu0 %v2203
  %2205 = vmatprep.subr.mxu0 0.0
  %v2206 = vand.u32 %v26, 4294901760
  %v2207 = vsub.f32 %v26, %v2206
  %v2208 = vand.u32 %v2207, 4294901760
  %v2209 = vsub.f32 %v2207, %v2208
  %v2210 = vand.u32 %v2209, 4294901760
  %2211 = vmatpush1.msra.mxu0 %v2210
  %2212 = vmatprep.subr.mxu0 0.0
  %v2213 = vand.u32 %v27, 4294901760
  %v2214 = vsub.f32 %v27, %v2213
  %v2215 = vand.u32 %v2214, 4294901760
  %v2216 = vsub.f32 %v2214, %v2215
  %v2217 = vand.u32 %v2216, 4294901760
  %2218 = vmatpush1.msra.mxu0 %v2217
  %2219 = vmatprep.subr.mxu0 0.0
  %v2220 = vand.u32 %v28, 4294901760
  %v2221 = vsub.f32 %v28, %v2220
  %v2222 = vand.u32 %v2221, 4294901760
  %v2223 = vsub.f32 %v2221, %v2222
  %v2224 = vand.u32 %v2223, 4294901760
  %2225 = vmatpush1.msra.mxu0 %v2224
  %2226 = vmatprep.subr.mxu0 0.0
  %v2227 = vand.u32 %v29, 4294901760
  %v2228 = vsub.f32 %v29, %v2227
  %v2229 = vand.u32 %v2228, 4294901760
  %v2230 = vsub.f32 %v2228, %v2229
  %v2231 = vand.u32 %v2230, 4294901760
  %2232 = vmatpush1.msra.mxu0 %v2231
  %2233 = vmatprep.subr.mxu0 0.0
  %2234 = vmatpush1.msra.mxu0 0.0
  %2235 = vmatprep.subr.mxu0 0.0
  %2236 = vmatpush1.msra.mxu0 0.0
  %2237 = vmatprep.subr.mxu0 0.0
  %2238 = vmatpush1.msra.mxu0 0.0
  %2239 = vmatprep.subr.mxu0 0.0
  %2240 = vmatpush1.msra.mxu0 0.0
  %2241 = vmatprep.subr.mxu0 0.0
  %2242 = vmatpush1.msra.mxu0 0.0
  %2243 = vmatprep.subr.mxu0 0.0
  %2244 = vmatpush1.msra.mxu0 0.0
  %2245 = vmatprep.subr.mxu0 0.0
  %2246 = vmatpush1.msra.mxu0 0.0
  %2247 = vmatprep.subr.mxu0 0.0
  %2248 = vmatpush1.msra.mxu0 0.0
  %2249 = vmatprep.subr.mxu0 0.0
  %2250 = vmatpush1.msra.mxu0 0.0
  %2251 = vmatprep.subr.mxu0 0.0
  %2252 = vmatpush1.msra.mxu0 0.0
  %2253 = vmatprep.subr.mxu0 0.0
  %2254 = vmatpush1.msra.mxu0 0.0
  %2255 = vmatprep.subr.mxu0 0.0
  %2256 = vmatpush1.msra.mxu0 0.0
  %2257 = vmatprep.subr.mxu0 0.0
  %2258 = vmatpush1.msra.mxu0 0.0
  %2259 = vmatprep.subr.mxu0 0.0
  %2260 = vmatpush1.msra.mxu0 0.0
  %2261 = vmatprep.subr.mxu0 0.0
  %2262 = vmatpush1.msra.mxu0 0.0
  %2263 = vmatprep.subr.mxu0 0.0
  %2264 = vmatpush1.msra.mxu0 0.0
  %2265 = vmatprep.mubr.f32.mxu0 0.0
  %v2266 = vand.u32 %v2027, 4294901760
  %2267 = vmatmul.mubr.f32.gmra.mrb[0].mxu0 %v2266
  %v2268 = vpop.f32.mrb[0].mxu0
  %v2269 = vadd.f32 %v2118, %v2268
  %v2270 = vpop.f32.mrb[0].mxu0
  %2271 = vdwg.mxu0
  %2272 = vmatprep.subr.mxu0 0.0
  %v2273 = vand.u32 %v14, 4294901760
  %v2274 = vsub.f32 %v14, %v2273
  %2275 = vmatpush1.msra.mxu0 %v2274
  %2276 = vmatprep.subr.mxu0 0.0
  %v2277 = vand.u32 %v15, 4294901760
  %v2278 = vsub.f32 %v15, %v2277
  %2279 = vmatpush1.msra.mxu0 %v2278
  %2280 = vmatprep.subr.mxu0 0.0
  %v2281 = vand.u32 %v16, 4294901760
  %v2282 = vsub.f32 %v16, %v2281
  %2283 = vmatpush1.msra.mxu0 %v2282
  %2284 = vmatprep.subr.mxu0 0.0
  %v2285 = vand.u32 %v17, 4294901760
  %v2286 = vsub.f32 %v17, %v2285
  %2287 = vmatpush1.msra.mxu0 %v2286
  %2288 = vmatprep.subr.mxu0 0.0
  %v2289 = vand.u32 %v18, 4294901760
  %v2290 = vsub.f32 %v18, %v2289
  %2291 = vmatpush1.msra.mxu0 %v2290
  %2292 = vmatprep.subr.mxu0 0.0
  %v2293 = vand.u32 %v19, 4294901760
  %v2294 = vsub.f32 %v19, %v2293
  %2295 = vmatpush1.msra.mxu0 %v2294
  %2296 = vmatprep.subr.mxu0 0.0
  %v2297 = vand.u32 %v20, 4294901760
  %v2298 = vsub.f32 %v20, %v2297
  %2299 = vmatpush1.msra.mxu0 %v2298
  %2300 = vmatprep.subr.mxu0 0.0
  %v2301 = vand.u32 %v21, 4294901760
  %v2302 = vsub.f32 %v21, %v2301
  %2303 = vmatpush1.msra.mxu0 %v2302
  %2304 = vmatprep.subr.mxu0 0.0
  %v2305 = vand.u32 %v22, 4294901760
  %v2306 = vsub.f32 %v22, %v2305
  %2307 = vmatpush1.msra.mxu0 %v2306
  %2308 = vmatprep.subr.mxu0 0.0
  %v2309 = vand.u32 %v23, 4294901760
  %v2310 = vsub.f32 %v23, %v2309
  %2311 = vmatpush1.msra.mxu0 %v2310
  %2312 = vmatprep.subr.mxu0 0.0
  %v2313 = vand.u32 %v24, 4294901760
  %v2314 = vsub.f32 %v24, %v2313
  %2315 = vmatpush1.msra.mxu0 %v2314
  %2316 = vmatprep.subr.mxu0 0.0
  %v2317 = vand.u32 %v25, 4294901760
  %v2318 = vsub.f32 %v25, %v2317
  %2319 = vmatpush1.msra.mxu0 %v2318
  %2320 = vmatprep.subr.mxu0 0.0
  %v2321 = vand.u32 %v26, 4294901760
  %v2322 = vsub.f32 %v26, %v2321
  %2323 = vmatpush1.msra.mxu0 %v2322
  %2324 = vmatprep.subr.mxu0 0.0
  %v2325 = vand.u32 %v27, 4294901760
  %v2326 = vsub.f32 %v27, %v2325
  %2327 = vmatpush1.msra.mxu0 %v2326
  %2328 = vmatprep.subr.mxu0 0.0
  %v2329 = vand.u32 %v28, 4294901760
  %v2330 = vsub.f32 %v28, %v2329
  %2331 = vmatpush1.msra.mxu0 %v2330
  %2332 = vmatprep.subr.mxu0 0.0
  %v2333 = vand.u32 %v29, 4294901760
  %v2334 = vsub.f32 %v29, %v2333
  %2335 = vmatpush1.msra.mxu0 %v2334
  %2336 = vmatprep.subr.mxu0 0.0
  %2337 = vmatpush1.msra.mxu0 0.0
  %2338 = vmatprep.subr.mxu0 0.0
  %2339 = vmatpush1.msra.mxu0 0.0
  %2340 = vmatprep.subr.mxu0 0.0
  %2341 = vmatpush1.msra.mxu0 0.0
  %2342 = vmatprep.subr.mxu0 0.0
  %2343 = vmatpush1.msra.mxu0 0.0
  %2344 = vmatprep.subr.mxu0 0.0
  %2345 = vmatpush1.msra.mxu0 0.0
  %2346 = vmatprep.subr.mxu0 0.0
  %2347 = vmatpush1.msra.mxu0 0.0
  %2348 = vmatprep.subr.mxu0 0.0
  %2349 = vmatpush1.msra.mxu0 0.0
  %2350 = vmatprep.subr.mxu0 0.0
  %2351 = vmatpush1.msra.mxu0 0.0
  %2352 = vmatprep.subr.mxu0 0.0
  %2353 = vmatpush1.msra.mxu0 0.0
  %2354 = vmatprep.subr.mxu0 0.0
  %2355 = vmatpush1.msra.mxu0 0.0
  %2356 = vmatprep.subr.mxu0 0.0
  %2357 = vmatpush1.msra.mxu0 0.0
  %2358 = vmatprep.subr.mxu0 0.0
  %2359 = vmatpush1.msra.mxu0 0.0
  %2360 = vmatprep.subr.mxu0 0.0
  %2361 = vmatpush1.msra.mxu0 0.0
  %2362 = vmatprep.subr.mxu0 0.0
  %2363 = vmatpush1.msra.mxu0 0.0
  %2364 = vmatprep.subr.mxu0 0.0
  %2365 = vmatpush1.msra.mxu0 0.0
  %2366 = vmatprep.subr.mxu0 0.0
  %2367 = vmatpush1.msra.mxu0 0.0
  %2368 = vmatprep.mubr.f32.mxu0 0.0
  %v2369 = vand.u32 %v2027, 4294901760
  %v2370 = vsub.f32 %v2027, %v2369
  %2371 = vmatmul.mubr.f32.gmra.mrb[0].mxu0 %v2370
  %v2372 = vpop.f32.mrb[0].mxu0
  %v2373 = vadd.f32 %v2269, %v2372
  %v2374 = vpop.f32.mrb[0].mxu0
  %2375 = vdwg.mxu0
  %2376 = vmatprep.subr.mxu0 0.0
  %v2377 = vand.u32 %v14, 4294901760
  %2378 = vmatpush1.msra.mxu0 %v2377
  %2379 = vmatprep.subr.mxu0 0.0
  %v2380 = vand.u32 %v15, 4294901760
  %2381 = vmatpush1.msra.mxu0 %v2380
  %2382 = vmatprep.subr.mxu0 0.0
  %v2383 = vand.u32 %v16, 4294901760
  %2384 = vmatpush1.msra.mxu0 %v2383
  %2385 = vmatprep.subr.mxu0 0.0
  %v2386 = vand.u32 %v17, 4294901760
  %2387 = vmatpush1.msra.mxu0 %v2386
  %2388 = vmatprep.subr.mxu0 0.0
  %v2389 = vand.u32 %v18, 4294901760
  %2390 = vmatpush1.msra.mxu0 %v2389
  %2391 = vmatprep.subr.mxu0 0.0
  %v2392 = vand.u32 %v19, 4294901760
  %2393 = vmatpush1.msra.mxu0 %v2392
  %2394 = vmatprep.subr.mxu0 0.0
  %v2395 = vand.u32 %v20, 4294901760
  %2396 = vmatpush1.msra.mxu0 %v2395
  %2397 = vmatprep.subr.mxu0 0.0
  %v2398 = vand.u32 %v21, 4294901760
  %2399 = vmatpush1.msra.mxu0 %v2398
  %2400 = vmatprep.subr.mxu0 0.0
  %v2401 = vand.u32 %v22, 4294901760
  %2402 = vmatpush1.msra.mxu0 %v2401
  %2403 = vmatprep.subr.mxu0 0.0
  %v2404 = vand.u32 %v23, 4294901760
  %2405 = vmatpush1.msra.mxu0 %v2404
  %2406 = vmatprep.subr.mxu0 0.0
  %v2407 = vand.u32 %v24, 4294901760
  %2408 = vmatpush1.msra.mxu0 %v2407
  %2409 = vmatprep.subr.mxu0 0.0
  %v2410 = vand.u32 %v25, 4294901760
  %2411 = vmatpush1.msra.mxu0 %v2410
  %2412 = vmatprep.subr.mxu0 0.0
  %v2413 = vand.u32 %v26, 4294901760
  %2414 = vmatpush1.msra.mxu0 %v2413
  %2415 = vmatprep.subr.mxu0 0.0
  %v2416 = vand.u32 %v27, 4294901760
  %2417 = vmatpush1.msra.mxu0 %v2416
  %2418 = vmatprep.subr.mxu0 0.0
  %v2419 = vand.u32 %v28, 4294901760
  %2420 = vmatpush1.msra.mxu0 %v2419
  %2421 = vmatprep.subr.mxu0 0.0
  %v2422 = vand.u32 %v29, 4294901760
  %2423 = vmatpush1.msra.mxu0 %v2422
  %2424 = vmatprep.subr.mxu0 0.0
  %2425 = vmatpush1.msra.mxu0 0.0
  %2426 = vmatprep.subr.mxu0 0.0
  %2427 = vmatpush1.msra.mxu0 0.0
  %2428 = vmatprep.subr.mxu0 0.0
  %2429 = vmatpush1.msra.mxu0 0.0
  %2430 = vmatprep.subr.mxu0 0.0
  %2431 = vmatpush1.msra.mxu0 0.0
  %2432 = vmatprep.subr.mxu0 0.0
  %2433 = vmatpush1.msra.mxu0 0.0
  %2434 = vmatprep.subr.mxu0 0.0
  %2435 = vmatpush1.msra.mxu0 0.0
  %2436 = vmatprep.subr.mxu0 0.0
  %2437 = vmatpush1.msra.mxu0 0.0
  %2438 = vmatprep.subr.mxu0 0.0
  %2439 = vmatpush1.msra.mxu0 0.0
  %2440 = vmatprep.subr.mxu0 0.0
  %2441 = vmatpush1.msra.mxu0 0.0
  %2442 = vmatprep.subr.mxu0 0.0
  %2443 = vmatpush1.msra.mxu0 0.0
  %2444 = vmatprep.subr.mxu0 0.0
  %2445 = vmatpush1.msra.mxu0 0.0
  %2446 = vmatprep.subr.mxu0 0.0
  %2447 = vmatpush1.msra.mxu0 0.0
  %2448 = vmatprep.subr.mxu0 0.0
  %2449 = vmatpush1.msra.mxu0 0.0
  %2450 = vmatprep.subr.mxu0 0.0
  %2451 = vmatpush1.msra.mxu0 0.0
  %2452 = vmatprep.subr.mxu0 0.0
  %2453 = vmatpush1.msra.mxu0 0.0
  %2454 = vmatprep.subr.mxu0 0.0
  %2455 = vmatpush1.msra.mxu0 0.0
  %2456 = vmatprep.mubr.f32.mxu0 0.0
  %v2457 = vand.u32 %v2027, 4294901760
  %v2458 = vsub.f32 %v2027, %v2457
  %v2459 = vand.u32 %v2458, 4294901760
  %2460 = vmatmul.mubr.f32.gmra.mrb[0].mxu0 %v2459
  %v2461 = vpop.f32.mrb[0].mxu0
  %v2462 = vadd.f32 %v2373, %v2461
  %v2463 = vpop.f32.mrb[0].mxu0
  %2464 = vdwg.mxu0
  %2465 = vmatprep.subr.mxu0 0.0
  %v2466 = vand.u32 %v14, 4294901760
  %v2467 = vsub.f32 %v14, %v2466
  %v2468 = vand.u32 %v2467, 4294901760
  %2469 = vmatpush1.msra.mxu0 %v2468
  %2470 = vmatprep.subr.mxu0 0.0
  %v2471 = vand.u32 %v15, 4294901760
  %v2472 = vsub.f32 %v15, %v2471
  %v2473 = vand.u32 %v2472, 4294901760
  %2474 = vmatpush1.msra.mxu0 %v2473
  %2475 = vmatprep.subr.mxu0 0.0
  %v2476 = vand.u32 %v16, 4294901760
  %v2477 = vsub.f32 %v16, %v2476
  %v2478 = vand.u32 %v2477, 4294901760
  %2479 = vmatpush1.msra.mxu0 %v2478
  %2480 = vmatprep.subr.mxu0 0.0
  %v2481 = vand.u32 %v17, 4294901760
  %v2482 = vsub.f32 %v17, %v2481
  %v2483 = vand.u32 %v2482, 4294901760
  %2484 = vmatpush1.msra.mxu0 %v2483
  %2485 = vmatprep.subr.mxu0 0.0
  %v2486 = vand.u32 %v18, 4294901760
  %v2487 = vsub.f32 %v18, %v2486
  %v2488 = vand.u32 %v2487, 4294901760
  %2489 = vmatpush1.msra.mxu0 %v2488
  %2490 = vmatprep.subr.mxu0 0.0
  %v2491 = vand.u32 %v19, 4294901760
  %v2492 = vsub.f32 %v19, %v2491
  %v2493 = vand.u32 %v2492, 4294901760
  %2494 = vmatpush1.msra.mxu0 %v2493
  %2495 = vmatprep.subr.mxu0 0.0
  %v2496 = vand.u32 %v20, 4294901760
  %v2497 = vsub.f32 %v20, %v2496
  %v2498 = vand.u32 %v2497, 4294901760
  %2499 = vmatpush1.msra.mxu0 %v2498
  %2500 = vmatprep.subr.mxu0 0.0
  %v2501 = vand.u32 %v21, 4294901760
  %v2502 = vsub.f32 %v21, %v2501
  %v2503 = vand.u32 %v2502, 4294901760
  %2504 = vmatpush1.msra.mxu0 %v2503
  %2505 = vmatprep.subr.mxu0 0.0
  %v2506 = vand.u32 %v22, 4294901760
  %v2507 = vsub.f32 %v22, %v2506
  %v2508 = vand.u32 %v2507, 4294901760
  %2509 = vmatpush1.msra.mxu0 %v2508
  %2510 = vmatprep.subr.mxu0 0.0
  %v2511 = vand.u32 %v23, 4294901760
  %v2512 = vsub.f32 %v23, %v2511
  %v2513 = vand.u32 %v2512, 4294901760
  %2514 = vmatpush1.msra.mxu0 %v2513
  %2515 = vmatprep.subr.mxu0 0.0
  %v2516 = vand.u32 %v24, 4294901760
  %v2517 = vsub.f32 %v24, %v2516
  %v2518 = vand.u32 %v2517, 4294901760
  %2519 = vmatpush1.msra.mxu0 %v2518
  %2520 = vmatprep.subr.mxu0 0.0
  %v2521 = vand.u32 %v25, 4294901760
  %v2522 = vsub.f32 %v25, %v2521
  %v2523 = vand.u32 %v2522, 4294901760
  %2524 = vmatpush1.msra.mxu0 %v2523
  %2525 = vmatprep.subr.mxu0 0.0
  %v2526 = vand.u32 %v26, 4294901760
  %v2527 = vsub.f32 %v26, %v2526
  %v2528 = vand.u32 %v2527, 4294901760
  %2529 = vmatpush1.msra.mxu0 %v2528
  %2530 = vmatprep.subr.mxu0 0.0
  %v2531 = vand.u32 %v27, 4294901760
  %v2532 = vsub.f32 %v27, %v2531
  %v2533 = vand.u32 %v2532, 4294901760
  %2534 = vmatpush1.msra.mxu0 %v2533
  %2535 = vmatprep.subr.mxu0 0.0
  %v2536 = vand.u32 %v28, 4294901760
  %v2537 = vsub.f32 %v28, %v2536
  %v2538 = vand.u32 %v2537, 4294901760
  %2539 = vmatpush1.msra.mxu0 %v2538
  %2540 = vmatprep.subr.mxu0 0.0
  %v2541 = vand.u32 %v29, 4294901760
  %v2542 = vsub.f32 %v29, %v2541
  %v2543 = vand.u32 %v2542, 4294901760
  %2544 = vmatpush1.msra.mxu0 %v2543
  %2545 = vmatprep.subr.mxu0 0.0
  %2546 = vmatpush1.msra.mxu0 0.0
  %2547 = vmatprep.subr.mxu0 0.0
  %2548 = vmatpush1.msra.mxu0 0.0
  %2549 = vmatprep.subr.mxu0 0.0
  %2550 = vmatpush1.msra.mxu0 0.0
  %2551 = vmatprep.subr.mxu0 0.0
  %2552 = vmatpush1.msra.mxu0 0.0
  %2553 = vmatprep.subr.mxu0 0.0
  %2554 = vmatpush1.msra.mxu0 0.0
  %2555 = vmatprep.subr.mxu0 0.0
  %2556 = vmatpush1.msra.mxu0 0.0
  %2557 = vmatprep.subr.mxu0 0.0
  %2558 = vmatpush1.msra.mxu0 0.0
  %2559 = vmatprep.subr.mxu0 0.0
  %2560 = vmatpush1.msra.mxu0 0.0
  %2561 = vmatprep.subr.mxu0 0.0
  %2562 = vmatpush1.msra.mxu0 0.0
  %2563 = vmatprep.subr.mxu0 0.0
  %2564 = vmatpush1.msra.mxu0 0.0
  %2565 = vmatprep.subr.mxu0 0.0
  %2566 = vmatpush1.msra.mxu0 0.0
  %2567 = vmatprep.subr.mxu0 0.0
  %2568 = vmatpush1.msra.mxu0 0.0
  %2569 = vmatprep.subr.mxu0 0.0
  %2570 = vmatpush1.msra.mxu0 0.0
  %2571 = vmatprep.subr.mxu0 0.0
  %2572 = vmatpush1.msra.mxu0 0.0
  %2573 = vmatprep.subr.mxu0 0.0
  %2574 = vmatpush1.msra.mxu0 0.0
  %2575 = vmatprep.subr.mxu0 0.0
  %2576 = vmatpush1.msra.mxu0 0.0
  %2577 = vmatprep.mubr.f32.mxu0 0.0
  %v2578 = vand.u32 %v2027, 4294901760
  %2579 = vmatmul.mubr.f32.gmra.mrb[0].mxu0 %v2578
  %v2580 = vpop.f32.mrb[0].mxu0
  %v2581 = vadd.f32 %v2462, %v2580
  %v2582 = vpop.f32.mrb[0].mxu0
  %2583 = vdwg.mxu0
  %2584 = vmatprep.subr.mxu0 0.0
  %v2585 = vand.u32 %v14, 4294901760
  %2586 = vmatpush1.msra.mxu0 %v2585
  %2587 = vmatprep.subr.mxu0 0.0
  %v2588 = vand.u32 %v15, 4294901760
  %2589 = vmatpush1.msra.mxu0 %v2588
  %2590 = vmatprep.subr.mxu0 0.0
  %v2591 = vand.u32 %v16, 4294901760
  %2592 = vmatpush1.msra.mxu0 %v2591
  %2593 = vmatprep.subr.mxu0 0.0
  %v2594 = vand.u32 %v17, 4294901760
  %2595 = vmatpush1.msra.mxu0 %v2594
  %2596 = vmatprep.subr.mxu0 0.0
  %v2597 = vand.u32 %v18, 4294901760
  %2598 = vmatpush1.msra.mxu0 %v2597
  %2599 = vmatprep.subr.mxu0 0.0
  %v2600 = vand.u32 %v19, 4294901760
  %2601 = vmatpush1.msra.mxu0 %v2600
  %2602 = vmatprep.subr.mxu0 0.0
  %v2603 = vand.u32 %v20, 4294901760
  %2604 = vmatpush1.msra.mxu0 %v2603
  %2605 = vmatprep.subr.mxu0 0.0
  %v2606 = vand.u32 %v21, 4294901760
  %2607 = vmatpush1.msra.mxu0 %v2606
  %2608 = vmatprep.subr.mxu0 0.0
  %v2609 = vand.u32 %v22, 4294901760
  %2610 = vmatpush1.msra.mxu0 %v2609
  %2611 = vmatprep.subr.mxu0 0.0
  %v2612 = vand.u32 %v23, 4294901760
  %2613 = vmatpush1.msra.mxu0 %v2612
  %2614 = vmatprep.subr.mxu0 0.0
  %v2615 = vand.u32 %v24, 4294901760
  %2616 = vmatpush1.msra.mxu0 %v2615
  %2617 = vmatprep.subr.mxu0 0.0
  %v2618 = vand.u32 %v25, 4294901760
  %2619 = vmatpush1.msra.mxu0 %v2618
  %2620 = vmatprep.subr.mxu0 0.0
  %v2621 = vand.u32 %v26, 4294901760
  %2622 = vmatpush1.msra.mxu0 %v2621
  %2623 = vmatprep.subr.mxu0 0.0
  %v2624 = vand.u32 %v27, 4294901760
  %2625 = vmatpush1.msra.mxu0 %v2624
  %2626 = vmatprep.subr.mxu0 0.0
  %v2627 = vand.u32 %v28, 4294901760
  %2628 = vmatpush1.msra.mxu0 %v2627
  %2629 = vmatprep.subr.mxu0 0.0
  %v2630 = vand.u32 %v29, 4294901760
  %2631 = vmatpush1.msra.mxu0 %v2630
  %2632 = vmatprep.subr.mxu0 0.0
  %2633 = vmatpush1.msra.mxu0 0.0
  %2634 = vmatprep.subr.mxu0 0.0
  %2635 = vmatpush1.msra.mxu0 0.0
  %2636 = vmatprep.subr.mxu0 0.0
  %2637 = vmatpush1.msra.mxu0 0.0
  %2638 = vmatprep.subr.mxu0 0.0
  %2639 = vmatpush1.msra.mxu0 0.0
  %2640 = vmatprep.subr.mxu0 0.0
  %2641 = vmatpush1.msra.mxu0 0.0
  %2642 = vmatprep.subr.mxu0 0.0
  %2643 = vmatpush1.msra.mxu0 0.0
  %2644 = vmatprep.subr.mxu0 0.0
  %2645 = vmatpush1.msra.mxu0 0.0
  %2646 = vmatprep.subr.mxu0 0.0
  %2647 = vmatpush1.msra.mxu0 0.0
  %2648 = vmatprep.subr.mxu0 0.0
  %2649 = vmatpush1.msra.mxu0 0.0
  %2650 = vmatprep.subr.mxu0 0.0
  %2651 = vmatpush1.msra.mxu0 0.0
  %2652 = vmatprep.subr.mxu0 0.0
  %2653 = vmatpush1.msra.mxu0 0.0
  %2654 = vmatprep.subr.mxu0 0.0
  %2655 = vmatpush1.msra.mxu0 0.0
  %2656 = vmatprep.subr.mxu0 0.0
  %2657 = vmatpush1.msra.mxu0 0.0
  %2658 = vmatprep.subr.mxu0 0.0
  %2659 = vmatpush1.msra.mxu0 0.0
  %2660 = vmatprep.subr.mxu0 0.0
  %2661 = vmatpush1.msra.mxu0 0.0
  %2662 = vmatprep.subr.mxu0 0.0
  %2663 = vmatpush1.msra.mxu0 0.0
  %2664 = vmatprep.mubr.f32.mxu0 0.0
  %v2665 = vand.u32 %v2027, 4294901760
  %2666 = vmatmul.mubr.f32.gmra.mrb[0].mxu0 %v2665
  %v2667 = vpop.f32.mrb[0].mxu0
  %v2668 = vadd.f32 %v2581, %v2667
  %v2669 = vpop.f32.mrb[0].mxu0
  %2670 = vdwg.mxu0
  %v2671 = vadd.f32 %v2029, %v2668
  %v2672 = vmul.f32 %v2671, %v33
  %v2673 = vtanh.pop %v2672
  %v2674 = vmul.f32 %v2673, %v33
  %v2675 = vadd.f32 %v2674, %v34
  %2676 = vrot.lane.b32.xlu0 %v2675, 96
  %v2677 = vpop.permute.xlu0 %2676
  %2678 = vrot.lane.b32.xlu0 %v2675, 64
  %v2679 = vpop.permute.xlu0 %2678
  %2680 = vrot.lane.b32.xlu0 %v2675, 32
  %v2681 = vpop.permute.xlu0 %2680
  %v2682 = vmul.f32 %v2677, %v2025
  %v2683 = vmul.f32 %v2675, %v2681
  %v2684 = vadd.f32 %v2682, %v2683
  %v2685 = vtanh.pop %v2684
  %v2686 = vmul.f32 %v2679, %v2685
  %s2687 = scalar_lea.vmem %s0, 40
  %v2688 = vld [vmem:[%s2687] sm:$0xff]
  %2689 = vmatprep.subr.mxu0 0.0
  %v2690 = vand.u32 %v14, 4294901760
  %2691 = vmatpush1.msra.mxu0 %v2690
  %2692 = vmatprep.subr.mxu0 0.0
  %v2693 = vand.u32 %v15, 4294901760
  %2694 = vmatpush1.msra.mxu0 %v2693
  %2695 = vmatprep.subr.mxu0 0.0
  %v2696 = vand.u32 %v16, 4294901760
  %2697 = vmatpush1.msra.mxu0 %v2696
  %2698 = vmatprep.subr.mxu0 0.0
  %v2699 = vand.u32 %v17, 4294901760
  %2700 = vmatpush1.msra.mxu0 %v2699
  %2701 = vmatprep.subr.mxu0 0.0
  %v2702 = vand.u32 %v18, 4294901760
  %2703 = vmatpush1.msra.mxu0 %v2702
  %2704 = vmatprep.subr.mxu0 0.0
  %v2705 = vand.u32 %v19, 4294901760
  %2706 = vmatpush1.msra.mxu0 %v2705
  %2707 = vmatprep.subr.mxu0 0.0
  %v2708 = vand.u32 %v20, 4294901760
  %2709 = vmatpush1.msra.mxu0 %v2708
  %2710 = vmatprep.subr.mxu0 0.0
  %v2711 = vand.u32 %v21, 4294901760
  %2712 = vmatpush1.msra.mxu0 %v2711
  %2713 = vmatprep.subr.mxu0 0.0
  %v2714 = vand.u32 %v22, 4294901760
  %2715 = vmatpush1.msra.mxu0 %v2714
  %2716 = vmatprep.subr.mxu0 0.0
  %v2717 = vand.u32 %v23, 4294901760
  %2718 = vmatpush1.msra.mxu0 %v2717
  %2719 = vmatprep.subr.mxu0 0.0
  %v2720 = vand.u32 %v24, 4294901760
  %2721 = vmatpush1.msra.mxu0 %v2720
  %2722 = vmatprep.subr.mxu0 0.0
  %v2723 = vand.u32 %v25, 4294901760
  %2724 = vmatpush1.msra.mxu0 %v2723
  %2725 = vmatprep.subr.mxu0 0.0
  %v2726 = vand.u32 %v26, 4294901760
  %2727 = vmatpush1.msra.mxu0 %v2726
  %2728 = vmatprep.subr.mxu0 0.0
  %v2729 = vand.u32 %v27, 4294901760
  %2730 = vmatpush1.msra.mxu0 %v2729
  %2731 = vmatprep.subr.mxu0 0.0
  %v2732 = vand.u32 %v28, 4294901760
  %2733 = vmatpush1.msra.mxu0 %v2732
  %2734 = vmatprep.subr.mxu0 0.0
  %v2735 = vand.u32 %v29, 4294901760
  %2736 = vmatpush1.msra.mxu0 %v2735
  %2737 = vmatprep.subr.mxu0 0.0
  %2738 = vmatpush1.msra.mxu0 0.0
  %2739 = vmatprep.subr.mxu0 0.0
  %2740 = vmatpush1.msra.mxu0 0.0
  %2741 = vmatprep.subr.mxu0 0.0
  %2742 = vmatpush1.msra.mxu0 0.0
  %2743 = vmatprep.subr.mxu0 0.0
  %2744 = vmatpush1.msra.mxu0 0.0
  %2745 = vmatprep.subr.mxu0 0.0
  %2746 = vmatpush1.msra.mxu0 0.0
  %2747 = vmatprep.subr.mxu0 0.0
  %2748 = vmatpush1.msra.mxu0 0.0
  %2749 = vmatprep.subr.mxu0 0.0
  %2750 = vmatpush1.msra.mxu0 0.0
  %2751 = vmatprep.subr.mxu0 0.0
  %2752 = vmatpush1.msra.mxu0 0.0
  %2753 = vmatprep.subr.mxu0 0.0
  %2754 = vmatpush1.msra.mxu0 0.0
  %2755 = vmatprep.subr.mxu0 0.0
  %2756 = vmatpush1.msra.mxu0 0.0
  %2757 = vmatprep.subr.mxu0 0.0
  %2758 = vmatpush1.msra.mxu0 0.0
  %2759 = vmatprep.subr.mxu0 0.0
  %2760 = vmatpush1.msra.mxu0 0.0
  %2761 = vmatprep.subr.mxu0 0.0
  %2762 = vmatpush1.msra.mxu0 0.0
  %2763 = vmatprep.subr.mxu0 0.0
  %2764 = vmatpush1.msra.mxu0 0.0
  %2765 = vmatprep.subr.mxu0 0.0
  %2766 = vmatpush1.msra.mxu0 0.0
  %2767 = vmatprep.subr.mxu0 0.0
  %2768 = vmatpush1.msra.mxu0 0.0
  %2769 = vmatprep.mubr.f32.mxu0 0.0
  %v2770 = vand.u32 %v2686, 4294901760
  %v2771 = vsub.f32 %v2686, %v2770
  %v2772 = vand.u32 %v2771, 4294901760
  %v2773 = vsub.f32 %v2771, %v2772
  %v2774 = vand.u32 %v2773, 4294901760
  %2775 = vmatmul.mubr.f32.gmra.mrb[0].mxu0 %v2774
  %v2776 = vpop.f32.mrb[0].mxu0
  %v2777 = vadd.f32 0.0, %v2776
  %v2778 = vpop.f32.mrb[0].mxu0
  %2779 = vdwg.mxu0
  %2780 = vmatprep.subr.mxu0 0.0
  %v2781 = vand.u32 %v14, 4294901760
  %v2782 = vsub.f32 %v14, %v2781
  %v2783 = vand.u32 %v2782, 4294901760
  %v2784 = vsub.f32 %v2782, %v2783
  %v2785 = vand.u32 %v2784, 4294901760
  %2786 = vmatpush1.msra.mxu0 %v2785
  %2787 = vmatprep.subr.mxu0 0.0
  %v2788 = vand.u32 %v15, 4294901760
  %v2789 = vsub.f32 %v15, %v2788
  %v2790 = vand.u32 %v2789, 4294901760
  %v2791 = vsub.f32 %v2789, %v2790
  %v2792 = vand.u32 %v2791, 4294901760
  %2793 = vmatpush1.msra.mxu0 %v2792
  %2794 = vmatprep.subr.mxu0 0.0
  %v2795 = vand.u32 %v16, 4294901760
  %v2796 = vsub.f32 %v16, %v2795
  %v2797 = vand.u32 %v2796, 4294901760
  %v2798 = vsub.f32 %v2796, %v2797
  %v2799 = vand.u32 %v2798, 4294901760
  %2800 = vmatpush1.msra.mxu0 %v2799
  %2801 = vmatprep.subr.mxu0 0.0
  %v2802 = vand.u32 %v17, 4294901760
  %v2803 = vsub.f32 %v17, %v2802
  %v2804 = vand.u32 %v2803, 4294901760
  %v2805 = vsub.f32 %v2803, %v2804
  %v2806 = vand.u32 %v2805, 4294901760
  %2807 = vmatpush1.msra.mxu0 %v2806
  %2808 = vmatprep.subr.mxu0 0.0
  %v2809 = vand.u32 %v18, 4294901760
  %v2810 = vsub.f32 %v18, %v2809
  %v2811 = vand.u32 %v2810, 4294901760
  %v2812 = vsub.f32 %v2810, %v2811
  %v2813 = vand.u32 %v2812, 4294901760
  %2814 = vmatpush1.msra.mxu0 %v2813
  %2815 = vmatprep.subr.mxu0 0.0
  %v2816 = vand.u32 %v19, 4294901760
  %v2817 = vsub.f32 %v19, %v2816
  %v2818 = vand.u32 %v2817, 4294901760
  %v2819 = vsub.f32 %v2817, %v2818
  %v2820 = vand.u32 %v2819, 4294901760
  %2821 = vmatpush1.msra.mxu0 %v2820
  %2822 = vmatprep.subr.mxu0 0.0
  %v2823 = vand.u32 %v20, 4294901760
  %v2824 = vsub.f32 %v20, %v2823
  %v2825 = vand.u32 %v2824, 4294901760
  %v2826 = vsub.f32 %v2824, %v2825
  %v2827 = vand.u32 %v2826, 4294901760
  %2828 = vmatpush1.msra.mxu0 %v2827
  %2829 = vmatprep.subr.mxu0 0.0
  %v2830 = vand.u32 %v21, 4294901760
  %v2831 = vsub.f32 %v21, %v2830
  %v2832 = vand.u32 %v2831, 4294901760
  %v2833 = vsub.f32 %v2831, %v2832
  %v2834 = vand.u32 %v2833, 4294901760
  %2835 = vmatpush1.msra.mxu0 %v2834
  %2836 = vmatprep.subr.mxu0 0.0
  %v2837 = vand.u32 %v22, 4294901760
  %v2838 = vsub.f32 %v22, %v2837
  %v2839 = vand.u32 %v2838, 4294901760
  %v2840 = vsub.f32 %v2838, %v2839
  %v2841 = vand.u32 %v2840, 4294901760
  %2842 = vmatpush1.msra.mxu0 %v2841
  %2843 = vmatprep.subr.mxu0 0.0
  %v2844 = vand.u32 %v23, 4294901760
  %v2845 = vsub.f32 %v23, %v2844
  %v2846 = vand.u32 %v2845, 4294901760
  %v2847 = vsub.f32 %v2845, %v2846
  %v2848 = vand.u32 %v2847, 4294901760
  %2849 = vmatpush1.msra.mxu0 %v2848
  %2850 = vmatprep.subr.mxu0 0.0
  %v2851 = vand.u32 %v24, 4294901760
  %v2852 = vsub.f32 %v24, %v2851
  %v2853 = vand.u32 %v2852, 4294901760
  %v2854 = vsub.f32 %v2852, %v2853
  %v2855 = vand.u32 %v2854, 4294901760
  %2856 = vmatpush1.msra.mxu0 %v2855
  %2857 = vmatprep.subr.mxu0 0.0
  %v2858 = vand.u32 %v25, 4294901760
  %v2859 = vsub.f32 %v25, %v2858
  %v2860 = vand.u32 %v2859, 4294901760
  %v2861 = vsub.f32 %v2859, %v2860
  %v2862 = vand.u32 %v2861, 4294901760
  %2863 = vmatpush1.msra.mxu0 %v2862
  %2864 = vmatprep.subr.mxu0 0.0
  %v2865 = vand.u32 %v26, 4294901760
  %v2866 = vsub.f32 %v26, %v2865
  %v2867 = vand.u32 %v2866, 4294901760
  %v2868 = vsub.f32 %v2866, %v2867
  %v2869 = vand.u32 %v2868, 4294901760
  %2870 = vmatpush1.msra.mxu0 %v2869
  %2871 = vmatprep.subr.mxu0 0.0
  %v2872 = vand.u32 %v27, 4294901760
  %v2873 = vsub.f32 %v27, %v2872
  %v2874 = vand.u32 %v2873, 4294901760
  %v2875 = vsub.f32 %v2873, %v2874
  %v2876 = vand.u32 %v2875, 4294901760
  %2877 = vmatpush1.msra.mxu0 %v2876
  %2878 = vmatprep.subr.mxu0 0.0
  %v2879 = vand.u32 %v28, 4294901760
  %v2880 = vsub.f32 %v28, %v2879
  %v2881 = vand.u32 %v2880, 4294901760
  %v2882 = vsub.f32 %v2880, %v2881
  %v2883 = vand.u32 %v2882, 4294901760
  %2884 = vmatpush1.msra.mxu0 %v2883
  %2885 = vmatprep.subr.mxu0 0.0
  %v2886 = vand.u32 %v29, 4294901760
  %v2887 = vsub.f32 %v29, %v2886
  %v2888 = vand.u32 %v2887, 4294901760
  %v2889 = vsub.f32 %v2887, %v2888
  %v2890 = vand.u32 %v2889, 4294901760
  %2891 = vmatpush1.msra.mxu0 %v2890
  %2892 = vmatprep.subr.mxu0 0.0
  %2893 = vmatpush1.msra.mxu0 0.0
  %2894 = vmatprep.subr.mxu0 0.0
  %2895 = vmatpush1.msra.mxu0 0.0
  %2896 = vmatprep.subr.mxu0 0.0
  %2897 = vmatpush1.msra.mxu0 0.0
  %2898 = vmatprep.subr.mxu0 0.0
  %2899 = vmatpush1.msra.mxu0 0.0
  %2900 = vmatprep.subr.mxu0 0.0
  %2901 = vmatpush1.msra.mxu0 0.0
  %2902 = vmatprep.subr.mxu0 0.0
  %2903 = vmatpush1.msra.mxu0 0.0
  %2904 = vmatprep.subr.mxu0 0.0
  %2905 = vmatpush1.msra.mxu0 0.0
  %2906 = vmatprep.subr.mxu0 0.0
  %2907 = vmatpush1.msra.mxu0 0.0
  %2908 = vmatprep.subr.mxu0 0.0
  %2909 = vmatpush1.msra.mxu0 0.0
  %2910 = vmatprep.subr.mxu0 0.0
  %2911 = vmatpush1.msra.mxu0 0.0
  %2912 = vmatprep.subr.mxu0 0.0
  %2913 = vmatpush1.msra.mxu0 0.0
  %2914 = vmatprep.subr.mxu0 0.0
  %2915 = vmatpush1.msra.mxu0 0.0
  %2916 = vmatprep.subr.mxu0 0.0
  %2917 = vmatpush1.msra.mxu0 0.0
  %2918 = vmatprep.subr.mxu0 0.0
  %2919 = vmatpush1.msra.mxu0 0.0
  %2920 = vmatprep.subr.mxu0 0.0
  %2921 = vmatpush1.msra.mxu0 0.0
  %2922 = vmatprep.subr.mxu0 0.0
  %2923 = vmatpush1.msra.mxu0 0.0
  %2924 = vmatprep.mubr.f32.mxu0 0.0
  %v2925 = vand.u32 %v2686, 4294901760
  %2926 = vmatmul.mubr.f32.gmra.mrb[0].mxu0 %v2925
  %v2927 = vpop.f32.mrb[0].mxu0
  %v2928 = vadd.f32 %v2777, %v2927
  %v2929 = vpop.f32.mrb[0].mxu0
  %2930 = vdwg.mxu0
  %2931 = vmatprep.subr.mxu0 0.0
  %v2932 = vand.u32 %v14, 4294901760
  %v2933 = vsub.f32 %v14, %v2932
  %2934 = vmatpush1.msra.mxu0 %v2933
  %2935 = vmatprep.subr.mxu0 0.0
  %v2936 = vand.u32 %v15, 4294901760
  %v2937 = vsub.f32 %v15, %v2936
  %2938 = vmatpush1.msra.mxu0 %v2937
  %2939 = vmatprep.subr.mxu0 0.0
  %v2940 = vand.u32 %v16, 4294901760
  %v2941 = vsub.f32 %v16, %v2940
  %2942 = vmatpush1.msra.mxu0 %v2941
  %2943 = vmatprep.subr.mxu0 0.0
  %v2944 = vand.u32 %v17, 4294901760
  %v2945 = vsub.f32 %v17, %v2944
  %2946 = vmatpush1.msra.mxu0 %v2945
  %2947 = vmatprep.subr.mxu0 0.0
  %v2948 = vand.u32 %v18, 4294901760
  %v2949 = vsub.f32 %v18, %v2948
  %2950 = vmatpush1.msra.mxu0 %v2949
  %2951 = vmatprep.subr.mxu0 0.0
  %v2952 = vand.u32 %v19, 4294901760
  %v2953 = vsub.f32 %v19, %v2952
  %2954 = vmatpush1.msra.mxu0 %v2953
  %2955 = vmatprep.subr.mxu0 0.0
  %v2956 = vand.u32 %v20, 4294901760
  %v2957 = vsub.f32 %v20, %v2956
  %2958 = vmatpush1.msra.mxu0 %v2957
  %2959 = vmatprep.subr.mxu0 0.0
  %v2960 = vand.u32 %v21, 4294901760
  %v2961 = vsub.f32 %v21, %v2960
  %2962 = vmatpush1.msra.mxu0 %v2961
  %2963 = vmatprep.subr.mxu0 0.0
  %v2964 = vand.u32 %v22, 4294901760
  %v2965 = vsub.f32 %v22, %v2964
  %2966 = vmatpush1.msra.mxu0 %v2965
  %2967 = vmatprep.subr.mxu0 0.0
  %v2968 = vand.u32 %v23, 4294901760
  %v2969 = vsub.f32 %v23, %v2968
  %2970 = vmatpush1.msra.mxu0 %v2969
  %2971 = vmatprep.subr.mxu0 0.0
  %v2972 = vand.u32 %v24, 4294901760
  %v2973 = vsub.f32 %v24, %v2972
  %2974 = vmatpush1.msra.mxu0 %v2973
  %2975 = vmatprep.subr.mxu0 0.0
  %v2976 = vand.u32 %v25, 4294901760
  %v2977 = vsub.f32 %v25, %v2976
  %2978 = vmatpush1.msra.mxu0 %v2977
  %2979 = vmatprep.subr.mxu0 0.0
  %v2980 = vand.u32 %v26, 4294901760
  %v2981 = vsub.f32 %v26, %v2980
  %2982 = vmatpush1.msra.mxu0 %v2981
  %2983 = vmatprep.subr.mxu0 0.0
  %v2984 = vand.u32 %v27, 4294901760
  %v2985 = vsub.f32 %v27, %v2984
  %2986 = vmatpush1.msra.mxu0 %v2985
  %2987 = vmatprep.subr.mxu0 0.0
  %v2988 = vand.u32 %v28, 4294901760
  %v2989 = vsub.f32 %v28, %v2988
  %2990 = vmatpush1.msra.mxu0 %v2989
  %2991 = vmatprep.subr.mxu0 0.0
  %v2992 = vand.u32 %v29, 4294901760
  %v2993 = vsub.f32 %v29, %v2992
  %2994 = vmatpush1.msra.mxu0 %v2993
  %2995 = vmatprep.subr.mxu0 0.0
  %2996 = vmatpush1.msra.mxu0 0.0
  %2997 = vmatprep.subr.mxu0 0.0
  %2998 = vmatpush1.msra.mxu0 0.0
  %2999 = vmatprep.subr.mxu0 0.0
  %3000 = vmatpush1.msra.mxu0 0.0
  %3001 = vmatprep.subr.mxu0 0.0
  %3002 = vmatpush1.msra.mxu0 0.0
  %3003 = vmatprep.subr.mxu0 0.0
  %3004 = vmatpush1.msra.mxu0 0.0
  %3005 = vmatprep.subr.mxu0 0.0
  %3006 = vmatpush1.msra.mxu0 0.0
  %3007 = vmatprep.subr.mxu0 0.0
  %3008 = vmatpush1.msra.mxu0 0.0
  %3009 = vmatprep.subr.mxu0 0.0
  %3010 = vmatpush1.msra.mxu0 0.0
  %3011 = vmatprep.subr.mxu0 0.0
  %3012 = vmatpush1.msra.mxu0 0.0
  %3013 = vmatprep.subr.mxu0 0.0
  %3014 = vmatpush1.msra.mxu0 0.0
  %3015 = vmatprep.subr.mxu0 0.0
  %3016 = vmatpush1.msra.mxu0 0.0
  %3017 = vmatprep.subr.mxu0 0.0
  %3018 = vmatpush1.msra.mxu0 0.0
  %3019 = vmatprep.subr.mxu0 0.0
  %3020 = vmatpush1.msra.mxu0 0.0
  %3021 = vmatprep.subr.mxu0 0.0
  %3022 = vmatpush1.msra.mxu0 0.0
  %3023 = vmatprep.subr.mxu0 0.0
  %3024 = vmatpush1.msra.mxu0 0.0
  %3025 = vmatprep.subr.mxu0 0.0
  %3026 = vmatpush1.msra.mxu0 0.0
  %3027 = vmatprep.mubr.f32.mxu0 0.0
  %v3028 = vand.u32 %v2686, 4294901760
  %v3029 = vsub.f32 %v2686, %v3028
  %3030 = vmatmul.mubr.f32.gmra.mrb[0].mxu0 %v3029
  %v3031 = vpop.f32.mrb[0].mxu0
  %v3032 = vadd.f32 %v2928, %v3031
  %v3033 = vpop.f32.mrb[0].mxu0
  %3034 = vdwg.mxu0
  %3035 = vmatprep.subr.mxu0 0.0
  %v3036 = vand.u32 %v14, 4294901760
  %3037 = vmatpush1.msra.mxu0 %v3036
  %3038 = vmatprep.subr.mxu0 0.0
  %v3039 = vand.u32 %v15, 4294901760
  %3040 = vmatpush1.msra.mxu0 %v3039
  %3041 = vmatprep.subr.mxu0 0.0
  %v3042 = vand.u32 %v16, 4294901760
  %3043 = vmatpush1.msra.mxu0 %v3042
  %3044 = vmatprep.subr.mxu0 0.0
  %v3045 = vand.u32 %v17, 4294901760
  %3046 = vmatpush1.msra.mxu0 %v3045
  %3047 = vmatprep.subr.mxu0 0.0
  %v3048 = vand.u32 %v18, 4294901760
  %3049 = vmatpush1.msra.mxu0 %v3048
  %3050 = vmatprep.subr.mxu0 0.0
  %v3051 = vand.u32 %v19, 4294901760
  %3052 = vmatpush1.msra.mxu0 %v3051
  %3053 = vmatprep.subr.mxu0 0.0
  %v3054 = vand.u32 %v20, 4294901760
  %3055 = vmatpush1.msra.mxu0 %v3054
  %3056 = vmatprep.subr.mxu0 0.0
  %v3057 = vand.u32 %v21, 4294901760
  %3058 = vmatpush1.msra.mxu0 %v3057
  %3059 = vmatprep.subr.mxu0 0.0
  %v3060 = vand.u32 %v22, 4294901760
  %3061 = vmatpush1.msra.mxu0 %v3060
  %3062 = vmatprep.subr.mxu0 0.0
  %v3063 = vand.u32 %v23, 4294901760
  %3064 = vmatpush1.msra.mxu0 %v3063
  %3065 = vmatprep.subr.mxu0 0.0
  %v3066 = vand.u32 %v24, 4294901760
  %3067 = vmatpush1.msra.mxu0 %v3066
  %3068 = vmatprep.subr.mxu0 0.0
  %v3069 = vand.u32 %v25, 4294901760
  %3070 = vmatpush1.msra.mxu0 %v3069
  %3071 = vmatprep.subr.mxu0 0.0
  %v3072 = vand.u32 %v26, 4294901760
  %3073 = vmatpush1.msra.mxu0 %v3072
  %3074 = vmatprep.subr.mxu0 0.0
  %v3075 = vand.u32 %v27, 4294901760
  %3076 = vmatpush1.msra.mxu0 %v3075
  %3077 = vmatprep.subr.mxu0 0.0
  %v3078 = vand.u32 %v28, 4294901760
  %3079 = vmatpush1.msra.mxu0 %v3078
  %3080 = vmatprep.subr.mxu0 0.0
  %v3081 = vand.u32 %v29, 4294901760
  %3082 = vmatpush1.msra.mxu0 %v3081
  %3083 = vmatprep.subr.mxu0 0.0
  %3084 = vmatpush1.msra.mxu0 0.0
  %3085 = vmatprep.subr.mxu0 0.0
  %3086 = vmatpush1.msra.mxu0 0.0
  %3087 = vmatprep.subr.mxu0 0.0
  %3088 = vmatpush1.msra.mxu0 0.0
  %3089 = vmatprep.subr.mxu0 0.0
  %3090 = vmatpush1.msra.mxu0 0.0
  %3091 = vmatprep.subr.mxu0 0.0
  %3092 = vmatpush1.msra.mxu0 0.0
  %3093 = vmatprep.subr.mxu0 0.0
  %3094 = vmatpush1.msra.mxu0 0.0
  %3095 = vmatprep.subr.mxu0 0.0
  %3096 = vmatpush1.msra.mxu0 0.0
  %3097 = vmatprep.subr.mxu0 0.0
  %3098 = vmatpush1.msra.mxu0 0.0
  %3099 = vmatprep.subr.mxu0 0.0
  %3100 = vmatpush1.msra.mxu0 0.0
  %3101 = vmatprep.subr.mxu0 0.0
  %3102 = vmatpush1.msra.mxu0 0.0
  %3103 = vmatprep.subr.mxu0 0.0
  %3104 = vmatpush1.msra.mxu0 0.0
  %3105 = vmatprep.subr.mxu0 0.0
  %3106 = vmatpush1.msra.mxu0 0.0
  %3107 = vmatprep.subr.mxu0 0.0
  %3108 = vmatpush1.msra.mxu0 0.0
  %3109 = vmatprep.subr.mxu0 0.0
  %3110 = vmatpush1.msra.mxu0 0.0
  %3111 = vmatprep.subr.mxu0 0.0
  %3112 = vmatpush1.msra.mxu0 0.0
  %3113 = vmatprep.subr.mxu0 0.0
  %3114 = vmatpush1.msra.mxu0 0.0
  %3115 = vmatprep.mubr.f32.mxu0 0.0
  %v3116 = vand.u32 %v2686, 4294901760
  %v3117 = vsub.f32 %v2686, %v3116
  %v3118 = vand.u32 %v3117, 4294901760
  %3119 = vmatmul.mubr.f32.gmra.mrb[0].mxu0 %v3118
  %v3120 = vpop.f32.mrb[0].mxu0
  %v3121 = vadd.f32 %v3032, %v3120
  %v3122 = vpop.f32.mrb[0].mxu0
  %3123 = vdwg.mxu0
  %3124 = vmatprep.subr.mxu0 0.0
  %v3125 = vand.u32 %v14, 4294901760
  %v3126 = vsub.f32 %v14, %v3125
  %v3127 = vand.u32 %v3126, 4294901760
  %3128 = vmatpush1.msra.mxu0 %v3127
  %3129 = vmatprep.subr.mxu0 0.0
  %v3130 = vand.u32 %v15, 4294901760
  %v3131 = vsub.f32 %v15, %v3130
  %v3132 = vand.u32 %v3131, 4294901760
  %3133 = vmatpush1.msra.mxu0 %v3132
  %3134 = vmatprep.subr.mxu0 0.0
  %v3135 = vand.u32 %v16, 4294901760
  %v3136 = vsub.f32 %v16, %v3135
  %v3137 = vand.u32 %v3136, 4294901760
  %3138 = vmatpush1.msra.mxu0 %v3137
  %3139 = vmatprep.subr.mxu0 0.0
  %v3140 = vand.u32 %v17, 4294901760
  %v3141 = vsub.f32 %v17, %v3140
  %v3142 = vand.u32 %v3141, 4294901760
  %3143 = vmatpush1.msra.mxu0 %v3142
  %3144 = vmatprep.subr.mxu0 0.0
  %v3145 = vand.u32 %v18, 4294901760
  %v3146 = vsub.f32 %v18, %v3145
  %v3147 = vand.u32 %v3146, 4294901760
  %3148 = vmatpush1.msra.mxu0 %v3147
  %3149 = vmatprep.subr.mxu0 0.0
  %v3150 = vand.u32 %v19, 4294901760
  %v3151 = vsub.f32 %v19, %v3150
  %v3152 = vand.u32 %v3151, 4294901760
  %3153 = vmatpush1.msra.mxu0 %v3152
  %3154 = vmatprep.subr.mxu0 0.0
  %v3155 = vand.u32 %v20, 4294901760
  %v3156 = vsub.f32 %v20, %v3155
  %v3157 = vand.u32 %v3156, 4294901760
  %3158 = vmatpush1.msra.mxu0 %v3157
  %3159 = vmatprep.subr.mxu0 0.0
  %v3160 = vand.u32 %v21, 4294901760
  %v3161 = vsub.f32 %v21, %v3160
  %v3162 = vand.u32 %v3161, 4294901760
  %3163 = vmatpush1.msra.mxu0 %v3162
  %3164 = vmatprep.subr.mxu0 0.0
  %v3165 = vand.u32 %v22, 4294901760
  %v3166 = vsub.f32 %v22, %v3165
  %v3167 = vand.u32 %v3166, 4294901760
  %3168 = vmatpush1.msra.mxu0 %v3167
  %3169 = vmatprep.subr.mxu0 0.0
  %v3170 = vand.u32 %v23, 4294901760
  %v3171 = vsub.f32 %v23, %v3170
  %v3172 = vand.u32 %v3171, 4294901760
  %3173 = vmatpush1.msra.mxu0 %v3172
  %3174 = vmatprep.subr.mxu0 0.0
  %v3175 = vand.u32 %v24, 4294901760
  %v3176 = vsub.f32 %v24, %v3175
  %v3177 = vand.u32 %v3176, 4294901760
  %3178 = vmatpush1.msra.mxu0 %v3177
  %3179 = vmatprep.subr.mxu0 0.0
  %v3180 = vand.u32 %v25, 4294901760
  %v3181 = vsub.f32 %v25, %v3180
  %v3182 = vand.u32 %v3181, 4294901760
  %3183 = vmatpush1.msra.mxu0 %v3182
  %3184 = vmatprep.subr.mxu0 0.0
  %v3185 = vand.u32 %v26, 4294901760
  %v3186 = vsub.f32 %v26, %v3185
  %v3187 = vand.u32 %v3186, 4294901760
  %3188 = vmatpush1.msra.mxu0 %v3187
  %3189 = vmatprep.subr.mxu0 0.0
  %v3190 = vand.u32 %v27, 4294901760
  %v3191 = vsub.f32 %v27, %v3190
  %v3192 = vand.u32 %v3191, 4294901760
  %3193 = vmatpush1.msra.mxu0 %v3192
  %3194 = vmatprep.subr.mxu0 0.0
  %v3195 = vand.u32 %v28, 4294901760
  %v3196 = vsub.f32 %v28, %v3195
  %v3197 = vand.u32 %v3196, 4294901760
  %3198 = vmatpush1.msra.mxu0 %v3197
  %3199 = vmatprep.subr.mxu0 0.0
  %v3200 = vand.u32 %v29, 4294901760
  %v3201 = vsub.f32 %v29, %v3200
  %v3202 = vand.u32 %v3201, 4294901760
  %3203 = vmatpush1.msra.mxu0 %v3202
  %3204 = vmatprep.subr.mxu0 0.0
  %3205 = vmatpush1.msra.mxu0 0.0
  %3206 = vmatprep.subr.mxu0 0.0
  %3207 = vmatpush1.msra.mxu0 0.0
  %3208 = vmatprep.subr.mxu0 0.0
  %3209 = vmatpush1.msra.mxu0 0.0
  %3210 = vmatprep.subr.mxu0 0.0
  %3211 = vmatpush1.msra.mxu0 0.0
  %3212 = vmatprep.subr.mxu0 0.0
  %3213 = vmatpush1.msra.mxu0 0.0
  %3214 = vmatprep.subr.mxu0 0.0
  %3215 = vmatpush1.msra.mxu0 0.0
  %3216 = vmatprep.subr.mxu0 0.0
  %3217 = vmatpush1.msra.mxu0 0.0
  %3218 = vmatprep.subr.mxu0 0.0
  %3219 = vmatpush1.msra.mxu0 0.0
  %3220 = vmatprep.subr.mxu0 0.0
  %3221 = vmatpush1.msra.mxu0 0.0
  %3222 = vmatprep.subr.mxu0 0.0
  %3223 = vmatpush1.msra.mxu0 0.0
  %3224 = vmatprep.subr.mxu0 0.0
  %3225 = vmatpush1.msra.mxu0 0.0
  %3226 = vmatprep.subr.mxu0 0.0
  %3227 = vmatpush1.msra.mxu0 0.0
  %3228 = vmatprep.subr.mxu0 0.0
  %3229 = vmatpush1.msra.mxu0 0.0
  %3230 = vmatprep.subr.mxu0 0.0
  %3231 = vmatpush1.msra.mxu0 0.0
  %3232 = vmatprep.subr.mxu0 0.0
  %3233 = vmatpush1.msra.mxu0 0.0
  %3234 = vmatprep.subr.mxu0 0.0
  %3235 = vmatpush1.msra.mxu0 0.0
  %3236 = vmatprep.mubr.f32.mxu0 0.0
  %v3237 = vand.u32 %v2686, 4294901760
  %3238 = vmatmul.mubr.f32.gmra.mrb[0].mxu0 %v3237
  %v3239 = vpop.f32.mrb[0].mxu0
  %v3240 = vadd.f32 %v3121, %v3239
  %v3241 = vpop.f32.mrb[0].mxu0
  %3242 = vdwg.mxu0
  %3243 = vmatprep.subr.mxu0 0.0
  %v3244 = vand.u32 %v14, 4294901760
  %3245 = vmatpush1.msra.mxu0 %v3244
  %3246 = vmatprep.subr.mxu0 0.0
  %v3247 = vand.u32 %v15, 4294901760
  %3248 = vmatpush1.msra.mxu0 %v3247
  %3249 = vmatprep.subr.mxu0 0.0
  %v3250 = vand.u32 %v16, 4294901760
  %3251 = vmatpush1.msra.mxu0 %v3250
  %3252 = vmatprep.subr.mxu0 0.0
  %v3253 = vand.u32 %v17, 4294901760
  %3254 = vmatpush1.msra.mxu0 %v3253
  %3255 = vmatprep.subr.mxu0 0.0
  %v3256 = vand.u32 %v18, 4294901760
  %3257 = vmatpush1.msra.mxu0 %v3256
  %3258 = vmatprep.subr.mxu0 0.0
  %v3259 = vand.u32 %v19, 4294901760
  %3260 = vmatpush1.msra.mxu0 %v3259
  %3261 = vmatprep.subr.mxu0 0.0
  %v3262 = vand.u32 %v20, 4294901760
  %3263 = vmatpush1.msra.mxu0 %v3262
  %3264 = vmatprep.subr.mxu0 0.0
  %v3265 = vand.u32 %v21, 4294901760
  %3266 = vmatpush1.msra.mxu0 %v3265
  %3267 = vmatprep.subr.mxu0 0.0
  %v3268 = vand.u32 %v22, 4294901760
  %3269 = vmatpush1.msra.mxu0 %v3268
  %3270 = vmatprep.subr.mxu0 0.0
  %v3271 = vand.u32 %v23, 4294901760
  %3272 = vmatpush1.msra.mxu0 %v3271
  %3273 = vmatprep.subr.mxu0 0.0
  %v3274 = vand.u32 %v24, 4294901760
  %3275 = vmatpush1.msra.mxu0 %v3274
  %3276 = vmatprep.subr.mxu0 0.0
  %v3277 = vand.u32 %v25, 4294901760
  %3278 = vmatpush1.msra.mxu0 %v3277
  %3279 = vmatprep.subr.mxu0 0.0
  %v3280 = vand.u32 %v26, 4294901760
  %3281 = vmatpush1.msra.mxu0 %v3280
  %3282 = vmatprep.subr.mxu0 0.0
  %v3283 = vand.u32 %v27, 4294901760
  %3284 = vmatpush1.msra.mxu0 %v3283
  %3285 = vmatprep.subr.mxu0 0.0
  %v3286 = vand.u32 %v28, 4294901760
  %3287 = vmatpush1.msra.mxu0 %v3286
  %3288 = vmatprep.subr.mxu0 0.0
  %v3289 = vand.u32 %v29, 4294901760
  %3290 = vmatpush1.msra.mxu0 %v3289
  %3291 = vmatprep.subr.mxu0 0.0
  %3292 = vmatpush1.msra.mxu0 0.0
  %3293 = vmatprep.subr.mxu0 0.0
  %3294 = vmatpush1.msra.mxu0 0.0
  %3295 = vmatprep.subr.mxu0 0.0
  %3296 = vmatpush1.msra.mxu0 0.0
  %3297 = vmatprep.subr.mxu0 0.0
  %3298 = vmatpush1.msra.mxu0 0.0
  %3299 = vmatprep.subr.mxu0 0.0
  %3300 = vmatpush1.msra.mxu0 0.0
  %3301 = vmatprep.subr.mxu0 0.0
  %3302 = vmatpush1.msra.mxu0 0.0
  %3303 = vmatprep.subr.mxu0 0.0
  %3304 = vmatpush1.msra.mxu0 0.0
  %3305 = vmatprep.subr.mxu0 0.0
  %3306 = vmatpush1.msra.mxu0 0.0
  %3307 = vmatprep.subr.mxu0 0.0
  %3308 = vmatpush1.msra.mxu0 0.0
  %3309 = vmatprep.subr.mxu0 0.0
  %3310 = vmatpush1.msra.mxu0 0.0
  %3311 = vmatprep.subr.mxu0 0.0
  %3312 = vmatpush1.msra.mxu0 0.0
  %3313 = vmatprep.subr.mxu0 0.0
  %3314 = vmatpush1.msra.mxu0 0.0
  %3315 = vmatprep.subr.mxu0 0.0
  %3316 = vmatpush1.msra.mxu0 0.0
  %3317 = vmatprep.subr.mxu0 0.0
  %3318 = vmatpush1.msra.mxu0 0.0
  %3319 = vmatprep.subr.mxu0 0.0
  %3320 = vmatpush1.msra.mxu0 0.0
  %3321 = vmatprep.subr.mxu0 0.0
  %3322 = vmatpush1.msra.mxu0 0.0
  %3323 = vmatprep.mubr.f32.mxu0 0.0
  %v3324 = vand.u32 %v2686, 4294901760
  %3325 = vmatmul.mubr.f32.gmra.mrb[0].mxu0 %v3324
  %v3326 = vpop.f32.mrb[0].mxu0
  %v3327 = vadd.f32 %v3240, %v3326
  %v3328 = vpop.f32.mrb[0].mxu0
  %3329 = vdwg.mxu0
  %v3330 = vadd.f32 %v2688, %v3327
  %v3331 = vmul.f32 %v3330, %v33
  %v3332 = vtanh.pop %v3331
  %v3333 = vmul.f32 %v3332, %v33
  %v3334 = vadd.f32 %v3333, %v34
  %3335 = vrot.lane.b32.xlu0 %v3334, 96
  %v3336 = vpop.permute.xlu0 %3335
  %3337 = vrot.lane.b32.xlu0 %v3334, 64
  %v3338 = vpop.permute.xlu0 %3337
  %3339 = vrot.lane.b32.xlu0 %v3334, 32
  %v3340 = vpop.permute.xlu0 %3339
  %v3341 = vmul.f32 %v3336, %v2684
  %v3342 = vmul.f32 %v3334, %v3340
  %v3343 = vadd.f32 %v3341, %v3342
  %v3344 = vtanh.pop %v3343
  %v3345 = vmul.f32 %v3338, %v3344
  %s3346 = scalar_lea.vmem %s0, 48
  %v3347 = vld [vmem:[%s3346] sm:$0xff]
  %3348 = vmatprep.subr.mxu0 0.0
  %v3349 = vand.u32 %v14, 4294901760
  %3350 = vmatpush1.msra.mxu0 %v3349
  %3351 = vmatprep.subr.mxu0 0.0
  %v3352 = vand.u32 %v15, 4294901760
  %3353 = vmatpush1.msra.mxu0 %v3352
  %3354 = vmatprep.subr.mxu0 0.0
  %v3355 = vand.u32 %v16, 4294901760
  %3356 = vmatpush1.msra.mxu0 %v3355
  %3357 = vmatprep.subr.mxu0 0.0
  %v3358 = vand.u32 %v17, 4294901760
  %3359 = vmatpush1.msra.mxu0 %v3358
  %3360 = vmatprep.subr.mxu0 0.0
  %v3361 = vand.u32 %v18, 4294901760
  %3362 = vmatpush1.msra.mxu0 %v3361
  %3363 = vmatprep.subr.mxu0 0.0
  %v3364 = vand.u32 %v19, 4294901760
  %3365 = vmatpush1.msra.mxu0 %v3364
  %3366 = vmatprep.subr.mxu0 0.0
  %v3367 = vand.u32 %v20, 4294901760
  %3368 = vmatpush1.msra.mxu0 %v3367
  %3369 = vmatprep.subr.mxu0 0.0
  %v3370 = vand.u32 %v21, 4294901760
  %3371 = vmatpush1.msra.mxu0 %v3370
  %3372 = vmatprep.subr.mxu0 0.0
  %v3373 = vand.u32 %v22, 4294901760
  %3374 = vmatpush1.msra.mxu0 %v3373
  %3375 = vmatprep.subr.mxu0 0.0
  %v3376 = vand.u32 %v23, 4294901760
  %3377 = vmatpush1.msra.mxu0 %v3376
  %3378 = vmatprep.subr.mxu0 0.0
  %v3379 = vand.u32 %v24, 4294901760
  %3380 = vmatpush1.msra.mxu0 %v3379
  %3381 = vmatprep.subr.mxu0 0.0
  %v3382 = vand.u32 %v25, 4294901760
  %3383 = vmatpush1.msra.mxu0 %v3382
  %3384 = vmatprep.subr.mxu0 0.0
  %v3385 = vand.u32 %v26, 4294901760
  %3386 = vmatpush1.msra.mxu0 %v3385
  %3387 = vmatprep.subr.mxu0 0.0
  %v3388 = vand.u32 %v27, 4294901760
  %3389 = vmatpush1.msra.mxu0 %v3388
  %3390 = vmatprep.subr.mxu0 0.0
  %v3391 = vand.u32 %v28, 4294901760
  %3392 = vmatpush1.msra.mxu0 %v3391
  %3393 = vmatprep.subr.mxu0 0.0
  %v3394 = vand.u32 %v29, 4294901760
  %3395 = vmatpush1.msra.mxu0 %v3394
  %3396 = vmatprep.subr.mxu0 0.0
  %3397 = vmatpush1.msra.mxu0 0.0
  %3398 = vmatprep.subr.mxu0 0.0
  %3399 = vmatpush1.msra.mxu0 0.0
  %3400 = vmatprep.subr.mxu0 0.0
  %3401 = vmatpush1.msra.mxu0 0.0
  %3402 = vmatprep.subr.mxu0 0.0
  %3403 = vmatpush1.msra.mxu0 0.0
  %3404 = vmatprep.subr.mxu0 0.0
  %3405 = vmatpush1.msra.mxu0 0.0
  %3406 = vmatprep.subr.mxu0 0.0
  %3407 = vmatpush1.msra.mxu0 0.0
  %3408 = vmatprep.subr.mxu0 0.0
  %3409 = vmatpush1.msra.mxu0 0.0
  %3410 = vmatprep.subr.mxu0 0.0
  %3411 = vmatpush1.msra.mxu0 0.0
  %3412 = vmatprep.subr.mxu0 0.0
  %3413 = vmatpush1.msra.mxu0 0.0
  %3414 = vmatprep.subr.mxu0 0.0
  %3415 = vmatpush1.msra.mxu0 0.0
  %3416 = vmatprep.subr.mxu0 0.0
  %3417 = vmatpush1.msra.mxu0 0.0
  %3418 = vmatprep.subr.mxu0 0.0
  %3419 = vmatpush1.msra.mxu0 0.0
  %3420 = vmatprep.subr.mxu0 0.0
  %3421 = vmatpush1.msra.mxu0 0.0
  %3422 = vmatprep.subr.mxu0 0.0
  %3423 = vmatpush1.msra.mxu0 0.0
  %3424 = vmatprep.subr.mxu0 0.0
  %3425 = vmatpush1.msra.mxu0 0.0
  %3426 = vmatprep.subr.mxu0 0.0
  %3427 = vmatpush1.msra.mxu0 0.0
  %3428 = vmatprep.mubr.f32.mxu0 0.0
  %v3429 = vand.u32 %v3345, 4294901760
  %v3430 = vsub.f32 %v3345, %v3429
  %v3431 = vand.u32 %v3430, 4294901760
  %v3432 = vsub.f32 %v3430, %v3431
  %v3433 = vand.u32 %v3432, 4294901760
  %3434 = vmatmul.mubr.f32.gmra.mrb[0].mxu0 %v3433
  %v3435 = vpop.f32.mrb[0].mxu0
  %v3436 = vadd.f32 0.0, %v3435
  %v3437 = vpop.f32.mrb[0].mxu0
  %3438 = vdwg.mxu0
  %3439 = vmatprep.subr.mxu0 0.0
  %v3440 = vand.u32 %v14, 4294901760
  %v3441 = vsub.f32 %v14, %v3440
  %v3442 = vand.u32 %v3441, 4294901760
  %v3443 = vsub.f32 %v3441, %v3442
  %v3444 = vand.u32 %v3443, 4294901760
  %3445 = vmatpush1.msra.mxu0 %v3444
  %3446 = vmatprep.subr.mxu0 0.0
  %v3447 = vand.u32 %v15, 4294901760
  %v3448 = vsub.f32 %v15, %v3447
  %v3449 = vand.u32 %v3448, 4294901760
  %v3450 = vsub.f32 %v3448, %v3449
  %v3451 = vand.u32 %v3450, 4294901760
  %3452 = vmatpush1.msra.mxu0 %v3451
  %3453 = vmatprep.subr.mxu0 0.0
  %v3454 = vand.u32 %v16, 4294901760
  %v3455 = vsub.f32 %v16, %v3454
  %v3456 = vand.u32 %v3455, 4294901760
  %v3457 = vsub.f32 %v3455, %v3456
  %v3458 = vand.u32 %v3457, 4294901760
  %3459 = vmatpush1.msra.mxu0 %v3458
  %3460 = vmatprep.subr.mxu0 0.0
  %v3461 = vand.u32 %v17, 4294901760
  %v3462 = vsub.f32 %v17, %v3461
  %v3463 = vand.u32 %v3462, 4294901760
  %v3464 = vsub.f32 %v3462, %v3463
  %v3465 = vand.u32 %v3464, 4294901760
  %3466 = vmatpush1.msra.mxu0 %v3465
  %3467 = vmatprep.subr.mxu0 0.0
  %v3468 = vand.u32 %v18, 4294901760
  %v3469 = vsub.f32 %v18, %v3468
  %v3470 = vand.u32 %v3469, 4294901760
  %v3471 = vsub.f32 %v3469, %v3470
  %v3472 = vand.u32 %v3471, 4294901760
  %3473 = vmatpush1.msra.mxu0 %v3472
  %3474 = vmatprep.subr.mxu0 0.0
  %v3475 = vand.u32 %v19, 4294901760
  %v3476 = vsub.f32 %v19, %v3475
  %v3477 = vand.u32 %v3476, 4294901760
  %v3478 = vsub.f32 %v3476, %v3477
  %v3479 = vand.u32 %v3478, 4294901760
  %3480 = vmatpush1.msra.mxu0 %v3479
  %3481 = vmatprep.subr.mxu0 0.0
  %v3482 = vand.u32 %v20, 4294901760
  %v3483 = vsub.f32 %v20, %v3482
  %v3484 = vand.u32 %v3483, 4294901760
  %v3485 = vsub.f32 %v3483, %v3484
  %v3486 = vand.u32 %v3485, 4294901760
  %3487 = vmatpush1.msra.mxu0 %v3486
  %3488 = vmatprep.subr.mxu0 0.0
  %v3489 = vand.u32 %v21, 4294901760
  %v3490 = vsub.f32 %v21, %v3489
  %v3491 = vand.u32 %v3490, 4294901760
  %v3492 = vsub.f32 %v3490, %v3491
  %v3493 = vand.u32 %v3492, 4294901760
  %3494 = vmatpush1.msra.mxu0 %v3493
  %3495 = vmatprep.subr.mxu0 0.0
  %v3496 = vand.u32 %v22, 4294901760
  %v3497 = vsub.f32 %v22, %v3496
  %v3498 = vand.u32 %v3497, 4294901760
  %v3499 = vsub.f32 %v3497, %v3498
  %v3500 = vand.u32 %v3499, 4294901760
  %3501 = vmatpush1.msra.mxu0 %v3500
  %3502 = vmatprep.subr.mxu0 0.0
  %v3503 = vand.u32 %v23, 4294901760
  %v3504 = vsub.f32 %v23, %v3503
  %v3505 = vand.u32 %v3504, 4294901760
  %v3506 = vsub.f32 %v3504, %v3505
  %v3507 = vand.u32 %v3506, 4294901760
  %3508 = vmatpush1.msra.mxu0 %v3507
  %3509 = vmatprep.subr.mxu0 0.0
  %v3510 = vand.u32 %v24, 4294901760
  %v3511 = vsub.f32 %v24, %v3510
  %v3512 = vand.u32 %v3511, 4294901760
  %v3513 = vsub.f32 %v3511, %v3512
  %v3514 = vand.u32 %v3513, 4294901760
  %3515 = vmatpush1.msra.mxu0 %v3514
  %3516 = vmatprep.subr.mxu0 0.0
  %v3517 = vand.u32 %v25, 4294901760
  %v3518 = vsub.f32 %v25, %v3517
  %v3519 = vand.u32 %v3518, 4294901760
  %v3520 = vsub.f32 %v3518, %v3519
  %v3521 = vand.u32 %v3520, 4294901760
  %3522 = vmatpush1.msra.mxu0 %v3521
  %3523 = vmatprep.subr.mxu0 0.0
  %v3524 = vand.u32 %v26, 4294901760
  %v3525 = vsub.f32 %v26, %v3524
  %v3526 = vand.u32 %v3525, 4294901760
  %v3527 = vsub.f32 %v3525, %v3526
  %v3528 = vand.u32 %v3527, 4294901760
  %3529 = vmatpush1.msra.mxu0 %v3528
  %3530 = vmatprep.subr.mxu0 0.0
  %v3531 = vand.u32 %v27, 4294901760
  %v3532 = vsub.f32 %v27, %v3531
  %v3533 = vand.u32 %v3532, 4294901760
  %v3534 = vsub.f32 %v3532, %v3533
  %v3535 = vand.u32 %v3534, 4294901760
  %3536 = vmatpush1.msra.mxu0 %v3535
  %3537 = vmatprep.subr.mxu0 0.0
  %v3538 = vand.u32 %v28, 4294901760
  %v3539 = vsub.f32 %v28, %v3538
  %v3540 = vand.u32 %v3539, 4294901760
  %v3541 = vsub.f32 %v3539, %v3540
  %v3542 = vand.u32 %v3541, 4294901760
  %3543 = vmatpush1.msra.mxu0 %v3542
  %3544 = vmatprep.subr.mxu0 0.0
  %v3545 = vand.u32 %v29, 4294901760
  %v3546 = vsub.f32 %v29, %v3545
  %v3547 = vand.u32 %v3546, 4294901760
  %v3548 = vsub.f32 %v3546, %v3547
  %v3549 = vand.u32 %v3548, 4294901760
  %3550 = vmatpush1.msra.mxu0 %v3549
  %3551 = vmatprep.subr.mxu0 0.0
  %3552 = vmatpush1.msra.mxu0 0.0
  %3553 = vmatprep.subr.mxu0 0.0
  %3554 = vmatpush1.msra.mxu0 0.0
  %3555 = vmatprep.subr.mxu0 0.0
  %3556 = vmatpush1.msra.mxu0 0.0
  %3557 = vmatprep.subr.mxu0 0.0
  %3558 = vmatpush1.msra.mxu0 0.0
  %3559 = vmatprep.subr.mxu0 0.0
  %3560 = vmatpush1.msra.mxu0 0.0
  %3561 = vmatprep.subr.mxu0 0.0
  %3562 = vmatpush1.msra.mxu0 0.0
  %3563 = vmatprep.subr.mxu0 0.0
  %3564 = vmatpush1.msra.mxu0 0.0
  %3565 = vmatprep.subr.mxu0 0.0
  %3566 = vmatpush1.msra.mxu0 0.0
  %3567 = vmatprep.subr.mxu0 0.0
  %3568 = vmatpush1.msra.mxu0 0.0
  %3569 = vmatprep.subr.mxu0 0.0
  %3570 = vmatpush1.msra.mxu0 0.0
  %3571 = vmatprep.subr.mxu0 0.0
  %3572 = vmatpush1.msra.mxu0 0.0
  %3573 = vmatprep.subr.mxu0 0.0
  %3574 = vmatpush1.msra.mxu0 0.0
  %3575 = vmatprep.subr.mxu0 0.0
  %3576 = vmatpush1.msra.mxu0 0.0
  %3577 = vmatprep.subr.mxu0 0.0
  %3578 = vmatpush1.msra.mxu0 0.0
  %3579 = vmatprep.subr.mxu0 0.0
  %3580 = vmatpush1.msra.mxu0 0.0
  %3581 = vmatprep.subr.mxu0 0.0
  %3582 = vmatpush1.msra.mxu0 0.0
  %3583 = vmatprep.mubr.f32.mxu0 0.0
  %v3584 = vand.u32 %v3345, 4294901760
  %3585 = vmatmul.mubr.f32.gmra.mrb[0].mxu0 %v3584
  %v3586 = vpop.f32.mrb[0].mxu0
  %v3587 = vadd.f32 %v3436, %v3586
  %v3588 = vpop.f32.mrb[0].mxu0
  %3589 = vdwg.mxu0
  %3590 = vmatprep.subr.mxu0 0.0
  %v3591 = vand.u32 %v14, 4294901760
  %v3592 = vsub.f32 %v14, %v3591
  %3593 = vmatpush1.msra.mxu0 %v3592
  %3594 = vmatprep.subr.mxu0 0.0
  %v3595 = vand.u32 %v15, 4294901760
  %v3596 = vsub.f32 %v15, %v3595
  %3597 = vmatpush1.msra.mxu0 %v3596
  %3598 = vmatprep.subr.mxu0 0.0
  %v3599 = vand.u32 %v16, 4294901760
  %v3600 = vsub.f32 %v16, %v3599
  %3601 = vmatpush1.msra.mxu0 %v3600
  %3602 = vmatprep.subr.mxu0 0.0
  %v3603 = vand.u32 %v17, 4294901760
  %v3604 = vsub.f32 %v17, %v3603
  %3605 = vmatpush1.msra.mxu0 %v3604
  %3606 = vmatprep.subr.mxu0 0.0
  %v3607 = vand.u32 %v18, 4294901760
  %v3608 = vsub.f32 %v18, %v3607
  %3609 = vmatpush1.msra.mxu0 %v3608
  %3610 = vmatprep.subr.mxu0 0.0
  %v3611 = vand.u32 %v19, 4294901760
  %v3612 = vsub.f32 %v19, %v3611
  %3613 = vmatpush1.msra.mxu0 %v3612
  %3614 = vmatprep.subr.mxu0 0.0
  %v3615 = vand.u32 %v20, 4294901760
  %v3616 = vsub.f32 %v20, %v3615
  %3617 = vmatpush1.msra.mxu0 %v3616
  %3618 = vmatprep.subr.mxu0 0.0
  %v3619 = vand.u32 %v21, 4294901760
  %v3620 = vsub.f32 %v21, %v3619
  %3621 = vmatpush1.msra.mxu0 %v3620
  %3622 = vmatprep.subr.mxu0 0.0
  %v3623 = vand.u32 %v22, 4294901760
  %v3624 = vsub.f32 %v22, %v3623
  %3625 = vmatpush1.msra.mxu0 %v3624
  %3626 = vmatprep.subr.mxu0 0.0
  %v3627 = vand.u32 %v23, 4294901760
  %v3628 = vsub.f32 %v23, %v3627
  %3629 = vmatpush1.msra.mxu0 %v3628
  %3630 = vmatprep.subr.mxu0 0.0
  %v3631 = vand.u32 %v24, 4294901760
  %v3632 = vsub.f32 %v24, %v3631
  %3633 = vmatpush1.msra.mxu0 %v3632
  %3634 = vmatprep.subr.mxu0 0.0
  %v3635 = vand.u32 %v25, 4294901760
  %v3636 = vsub.f32 %v25, %v3635
  %3637 = vmatpush1.msra.mxu0 %v3636
  %3638 = vmatprep.subr.mxu0 0.0
  %v3639 = vand.u32 %v26, 4294901760
  %v3640 = vsub.f32 %v26, %v3639
  %3641 = vmatpush1.msra.mxu0 %v3640
  %3642 = vmatprep.subr.mxu0 0.0
  %v3643 = vand.u32 %v27, 4294901760
  %v3644 = vsub.f32 %v27, %v3643
  %3645 = vmatpush1.msra.mxu0 %v3644
  %3646 = vmatprep.subr.mxu0 0.0
  %v3647 = vand.u32 %v28, 4294901760
  %v3648 = vsub.f32 %v28, %v3647
  %3649 = vmatpush1.msra.mxu0 %v3648
  %3650 = vmatprep.subr.mxu0 0.0
  %v3651 = vand.u32 %v29, 4294901760
  %v3652 = vsub.f32 %v29, %v3651
  %3653 = vmatpush1.msra.mxu0 %v3652
  %3654 = vmatprep.subr.mxu0 0.0
  %3655 = vmatpush1.msra.mxu0 0.0
  %3656 = vmatprep.subr.mxu0 0.0
  %3657 = vmatpush1.msra.mxu0 0.0
  %3658 = vmatprep.subr.mxu0 0.0
  %3659 = vmatpush1.msra.mxu0 0.0
  %3660 = vmatprep.subr.mxu0 0.0
  %3661 = vmatpush1.msra.mxu0 0.0
  %3662 = vmatprep.subr.mxu0 0.0
  %3663 = vmatpush1.msra.mxu0 0.0
  %3664 = vmatprep.subr.mxu0 0.0
  %3665 = vmatpush1.msra.mxu0 0.0
  %3666 = vmatprep.subr.mxu0 0.0
  %3667 = vmatpush1.msra.mxu0 0.0
  %3668 = vmatprep.subr.mxu0 0.0
  %3669 = vmatpush1.msra.mxu0 0.0
  %3670 = vmatprep.subr.mxu0 0.0
  %3671 = vmatpush1.msra.mxu0 0.0
  %3672 = vmatprep.subr.mxu0 0.0
  %3673 = vmatpush1.msra.mxu0 0.0
  %3674 = vmatprep.subr.mxu0 0.0
  %3675 = vmatpush1.msra.mxu0 0.0
  %3676 = vmatprep.subr.mxu0 0.0
  %3677 = vmatpush1.msra.mxu0 0.0
  %3678 = vmatprep.subr.mxu0 0.0
  %3679 = vmatpush1.msra.mxu0 0.0
  %3680 = vmatprep.subr.mxu0 0.0
  %3681 = vmatpush1.msra.mxu0 0.0
  %3682 = vmatprep.subr.mxu0 0.0
  %3683 = vmatpush1.msra.mxu0 0.0
  %3684 = vmatprep.subr.mxu0 0.0
  %3685 = vmatpush1.msra.mxu0 0.0
  %3686 = vmatprep.mubr.f32.mxu0 0.0
  %v3687 = vand.u32 %v3345, 4294901760
  %v3688 = vsub.f32 %v3345, %v3687
  %3689 = vmatmul.mubr.f32.gmra.mrb[0].mxu0 %v3688
  %v3690 = vpop.f32.mrb[0].mxu0
  %v3691 = vadd.f32 %v3587, %v3690
  %v3692 = vpop.f32.mrb[0].mxu0
  %3693 = vdwg.mxu0
  %3694 = vmatprep.subr.mxu0 0.0
  %v3695 = vand.u32 %v14, 4294901760
  %3696 = vmatpush1.msra.mxu0 %v3695
  %3697 = vmatprep.subr.mxu0 0.0
  %v3698 = vand.u32 %v15, 4294901760
  %3699 = vmatpush1.msra.mxu0 %v3698
  %3700 = vmatprep.subr.mxu0 0.0
  %v3701 = vand.u32 %v16, 4294901760
  %3702 = vmatpush1.msra.mxu0 %v3701
  %3703 = vmatprep.subr.mxu0 0.0
  %v3704 = vand.u32 %v17, 4294901760
  %3705 = vmatpush1.msra.mxu0 %v3704
  %3706 = vmatprep.subr.mxu0 0.0
  %v3707 = vand.u32 %v18, 4294901760
  %3708 = vmatpush1.msra.mxu0 %v3707
  %3709 = vmatprep.subr.mxu0 0.0
  %v3710 = vand.u32 %v19, 4294901760
  %3711 = vmatpush1.msra.mxu0 %v3710
  %3712 = vmatprep.subr.mxu0 0.0
  %v3713 = vand.u32 %v20, 4294901760
  %3714 = vmatpush1.msra.mxu0 %v3713
  %3715 = vmatprep.subr.mxu0 0.0
  %v3716 = vand.u32 %v21, 4294901760
  %3717 = vmatpush1.msra.mxu0 %v3716
  %3718 = vmatprep.subr.mxu0 0.0
  %v3719 = vand.u32 %v22, 4294901760
  %3720 = vmatpush1.msra.mxu0 %v3719
  %3721 = vmatprep.subr.mxu0 0.0
  %v3722 = vand.u32 %v23, 4294901760
  %3723 = vmatpush1.msra.mxu0 %v3722
  %3724 = vmatprep.subr.mxu0 0.0
  %v3725 = vand.u32 %v24, 4294901760
  %3726 = vmatpush1.msra.mxu0 %v3725
  %3727 = vmatprep.subr.mxu0 0.0
  %v3728 = vand.u32 %v25, 4294901760
  %3729 = vmatpush1.msra.mxu0 %v3728
  %3730 = vmatprep.subr.mxu0 0.0
  %v3731 = vand.u32 %v26, 4294901760
  %3732 = vmatpush1.msra.mxu0 %v3731
  %3733 = vmatprep.subr.mxu0 0.0
  %v3734 = vand.u32 %v27, 4294901760
  %3735 = vmatpush1.msra.mxu0 %v3734
  %3736 = vmatprep.subr.mxu0 0.0
  %v3737 = vand.u32 %v28, 4294901760
  %3738 = vmatpush1.msra.mxu0 %v3737
  %3739 = vmatprep.subr.mxu0 0.0
  %v3740 = vand.u32 %v29, 4294901760
  %3741 = vmatpush1.msra.mxu0 %v3740
  %3742 = vmatprep.subr.mxu0 0.0
  %3743 = vmatpush1.msra.mxu0 0.0
  %3744 = vmatprep.subr.mxu0 0.0
  %3745 = vmatpush1.msra.mxu0 0.0
  %3746 = vmatprep.subr.mxu0 0.0
  %3747 = vmatpush1.msra.mxu0 0.0
  %3748 = vmatprep.subr.mxu0 0.0
  %3749 = vmatpush1.msra.mxu0 0.0
  %3750 = vmatprep.subr.mxu0 0.0
  %3751 = vmatpush1.msra.mxu0 0.0
  %3752 = vmatprep.subr.mxu0 0.0
  %3753 = vmatpush1.msra.mxu0 0.0
  %3754 = vmatprep.subr.mxu0 0.0
  %3755 = vmatpush1.msra.mxu0 0.0
  %3756 = vmatprep.subr.mxu0 0.0
  %3757 = vmatpush1.msra.mxu0 0.0
  %3758 = vmatprep.subr.mxu0 0.0
  %3759 = vmatpush1.msra.mxu0 0.0
  %3760 = vmatprep.subr.mxu0 0.0
  %3761 = vmatpush1.msra.mxu0 0.0
  %3762 = vmatprep.subr.mxu0 0.0
  %3763 = vmatpush1.msra.mxu0 0.0
  %3764 = vmatprep.subr.mxu0 0.0
  %3765 = vmatpush1.msra.mxu0 0.0
  %3766 = vmatprep.subr.mxu0 0.0
  %3767 = vmatpush1.msra.mxu0 0.0
  %3768 = vmatprep.subr.mxu0 0.0
  %3769 = vmatpush1.msra.mxu0 0.0
  %3770 = vmatprep.subr.mxu0 0.0
  %3771 = vmatpush1.msra.mxu0 0.0
  %3772 = vmatprep.subr.mxu0 0.0
  %3773 = vmatpush1.msra.mxu0 0.0
  %3774 = vmatprep.mubr.f32.mxu0 0.0
  %v3775 = vand.u32 %v3345, 4294901760
  %v3776 = vsub.f32 %v3345, %v3775
  %v3777 = vand.u32 %v3776, 4294901760
  %3778 = vmatmul.mubr.f32.gmra.mrb[0].mxu0 %v3777
  %v3779 = vpop.f32.mrb[0].mxu0
  %v3780 = vadd.f32 %v3691, %v3779
  %v3781 = vpop.f32.mrb[0].mxu0
  %3782 = vdwg.mxu0
  %3783 = vmatprep.subr.mxu0 0.0
  %v3784 = vand.u32 %v14, 4294901760
  %v3785 = vsub.f32 %v14, %v3784
  %v3786 = vand.u32 %v3785, 4294901760
  %3787 = vmatpush1.msra.mxu0 %v3786
  %3788 = vmatprep.subr.mxu0 0.0
  %v3789 = vand.u32 %v15, 4294901760
  %v3790 = vsub.f32 %v15, %v3789
  %v3791 = vand.u32 %v3790, 4294901760
  %3792 = vmatpush1.msra.mxu0 %v3791
  %3793 = vmatprep.subr.mxu0 0.0
  %v3794 = vand.u32 %v16, 4294901760
  %v3795 = vsub.f32 %v16, %v3794
  %v3796 = vand.u32 %v3795, 4294901760
  %3797 = vmatpush1.msra.mxu0 %v3796
  %3798 = vmatprep.subr.mxu0 0.0
  %v3799 = vand.u32 %v17, 4294901760
  %v3800 = vsub.f32 %v17, %v3799
  %v3801 = vand.u32 %v3800, 4294901760
  %3802 = vmatpush1.msra.mxu0 %v3801
  %3803 = vmatprep.subr.mxu0 0.0
  %v3804 = vand.u32 %v18, 4294901760
  %v3805 = vsub.f32 %v18, %v3804
  %v3806 = vand.u32 %v3805, 4294901760
  %3807 = vmatpush1.msra.mxu0 %v3806
  %3808 = vmatprep.subr.mxu0 0.0
  %v3809 = vand.u32 %v19, 4294901760
  %v3810 = vsub.f32 %v19, %v3809
  %v3811 = vand.u32 %v3810, 4294901760
  %3812 = vmatpush1.msra.mxu0 %v3811
  %3813 = vmatprep.subr.mxu0 0.0
  %v3814 = vand.u32 %v20, 4294901760
  %v3815 = vsub.f32 %v20, %v3814
  %v3816 = vand.u32 %v3815, 4294901760
  %3817 = vmatpush1.msra.mxu0 %v3816
  %3818 = vmatprep.subr.mxu0 0.0
  %v3819 = vand.u32 %v21, 4294901760
  %v3820 = vsub.f32 %v21, %v3819
  %v3821 = vand.u32 %v3820, 4294901760
  %3822 = vmatpush1.msra.mxu0 %v3821
  %3823 = vmatprep.subr.mxu0 0.0
  %v3824 = vand.u32 %v22, 4294901760
  %v3825 = vsub.f32 %v22, %v3824
  %v3826 = vand.u32 %v3825, 4294901760
  %3827 = vmatpush1.msra.mxu0 %v3826
  %3828 = vmatprep.subr.mxu0 0.0
  %v3829 = vand.u32 %v23, 4294901760
  %v3830 = vsub.f32 %v23, %v3829
  %v3831 = vand.u32 %v3830, 4294901760
  %3832 = vmatpush1.msra.mxu0 %v3831
  %3833 = vmatprep.subr.mxu0 0.0
  %v3834 = vand.u32 %v24, 4294901760
  %v3835 = vsub.f32 %v24, %v3834
  %v3836 = vand.u32 %v3835, 4294901760
  %3837 = vmatpush1.msra.mxu0 %v3836
  %3838 = vmatprep.subr.mxu0 0.0
  %v3839 = vand.u32 %v25, 4294901760
  %v3840 = vsub.f32 %v25, %v3839
  %v3841 = vand.u32 %v3840, 4294901760
  %3842 = vmatpush1.msra.mxu0 %v3841
  %3843 = vmatprep.subr.mxu0 0.0
  %v3844 = vand.u32 %v26, 4294901760
  %v3845 = vsub.f32 %v26, %v3844
  %v3846 = vand.u32 %v3845, 4294901760
  %3847 = vmatpush1.msra.mxu0 %v3846
  %3848 = vmatprep.subr.mxu0 0.0
  %v3849 = vand.u32 %v27, 4294901760
  %v3850 = vsub.f32 %v27, %v3849
  %v3851 = vand.u32 %v3850, 4294901760
  %3852 = vmatpush1.msra.mxu0 %v3851
  %3853 = vmatprep.subr.mxu0 0.0
  %v3854 = vand.u32 %v28, 4294901760
  %v3855 = vsub.f32 %v28, %v3854
  %v3856 = vand.u32 %v3855, 4294901760
  %3857 = vmatpush1.msra.mxu0 %v3856
  %3858 = vmatprep.subr.mxu0 0.0
  %v3859 = vand.u32 %v29, 4294901760
  %v3860 = vsub.f32 %v29, %v3859
  %v3861 = vand.u32 %v3860, 4294901760
  %3862 = vmatpush1.msra.mxu0 %v3861
  %3863 = vmatprep.subr.mxu0 0.0
  %3864 = vmatpush1.msra.mxu0 0.0
  %3865 = vmatprep.subr.mxu0 0.0
  %3866 = vmatpush1.msra.mxu0 0.0
  %3867 = vmatprep.subr.mxu0 0.0
  %3868 = vmatpush1.msra.mxu0 0.0
  %3869 = vmatprep.subr.mxu0 0.0
  %3870 = vmatpush1.msra.mxu0 0.0
  %3871 = vmatprep.subr.mxu0 0.0
  %3872 = vmatpush1.msra.mxu0 0.0
  %3873 = vmatprep.subr.mxu0 0.0
  %3874 = vmatpush1.msra.mxu0 0.0
  %3875 = vmatprep.subr.mxu0 0.0
  %3876 = vmatpush1.msra.mxu0 0.0
  %3877 = vmatprep.subr.mxu0 0.0
  %3878 = vmatpush1.msra.mxu0 0.0
  %3879 = vmatprep.subr.mxu0 0.0
  %3880 = vmatpush1.msra.mxu0 0.0
  %3881 = vmatprep.subr.mxu0 0.0
  %3882 = vmatpush1.msra.mxu0 0.0
  %3883 = vmatprep.subr.mxu0 0.0
  %3884 = vmatpush1.msra.mxu0 0.0
  %3885 = vmatprep.subr.mxu0 0.0
  %3886 = vmatpush1.msra.mxu0 0.0
  %3887 = vmatprep.subr.mxu0 0.0
  %3888 = vmatpush1.msra.mxu0 0.0
  %3889 = vmatprep.subr.mxu0 0.0
  %3890 = vmatpush1.msra.mxu0 0.0
  %3891 = vmatprep.subr.mxu0 0.0
  %3892 = vmatpush1.msra.mxu0 0.0
  %3893 = vmatprep.subr.mxu0 0.0
  %3894 = vmatpush1.msra.mxu0 0.0
  %3895 = vmatprep.mubr.f32.mxu0 0.0
  %v3896 = vand.u32 %v3345, 4294901760
  %3897 = vmatmul.mubr.f32.gmra.mrb[0].mxu0 %v3896
  %v3898 = vpop.f32.mrb[0].mxu0
  %v3899 = vadd.f32 %v3780, %v3898
  %v3900 = vpop.f32.mrb[0].mxu0
  %3901 = vdwg.mxu0
  %3902 = vmatprep.subr.mxu0 0.0
  %v3903 = vand.u32 %v14, 4294901760
  %3904 = vmatpush1.msra.mxu0 %v3903
  %3905 = vmatprep.subr.mxu0 0.0
  %v3906 = vand.u32 %v15, 4294901760
  %3907 = vmatpush1.msra.mxu0 %v3906
  %3908 = vmatprep.subr.mxu0 0.0
  %v3909 = vand.u32 %v16, 4294901760
  %3910 = vmatpush1.msra.mxu0 %v3909
  %3911 = vmatprep.subr.mxu0 0.0
  %v3912 = vand.u32 %v17, 4294901760
  %3913 = vmatpush1.msra.mxu0 %v3912
  %3914 = vmatprep.subr.mxu0 0.0
  %v3915 = vand.u32 %v18, 4294901760
  %3916 = vmatpush1.msra.mxu0 %v3915
  %3917 = vmatprep.subr.mxu0 0.0
  %v3918 = vand.u32 %v19, 4294901760
  %3919 = vmatpush1.msra.mxu0 %v3918
  %3920 = vmatprep.subr.mxu0 0.0
  %v3921 = vand.u32 %v20, 4294901760
  %3922 = vmatpush1.msra.mxu0 %v3921
  %3923 = vmatprep.subr.mxu0 0.0
  %v3924 = vand.u32 %v21, 4294901760
  %3925 = vmatpush1.msra.mxu0 %v3924
  %3926 = vmatprep.subr.mxu0 0.0
  %v3927 = vand.u32 %v22, 4294901760
  %3928 = vmatpush1.msra.mxu0 %v3927
  %3929 = vmatprep.subr.mxu0 0.0
  %v3930 = vand.u32 %v23, 4294901760
  %3931 = vmatpush1.msra.mxu0 %v3930
  %3932 = vmatprep.subr.mxu0 0.0
  %v3933 = vand.u32 %v24, 4294901760
  %3934 = vmatpush1.msra.mxu0 %v3933
  %3935 = vmatprep.subr.mxu0 0.0
  %v3936 = vand.u32 %v25, 4294901760
  %3937 = vmatpush1.msra.mxu0 %v3936
  %3938 = vmatprep.subr.mxu0 0.0
  %v3939 = vand.u32 %v26, 4294901760
  %3940 = vmatpush1.msra.mxu0 %v3939
  %3941 = vmatprep.subr.mxu0 0.0
  %v3942 = vand.u32 %v27, 4294901760
  %3943 = vmatpush1.msra.mxu0 %v3942
  %3944 = vmatprep.subr.mxu0 0.0
  %v3945 = vand.u32 %v28, 4294901760
  %3946 = vmatpush1.msra.mxu0 %v3945
  %3947 = vmatprep.subr.mxu0 0.0
  %v3948 = vand.u32 %v29, 4294901760
  %3949 = vmatpush1.msra.mxu0 %v3948
  %3950 = vmatprep.subr.mxu0 0.0
  %3951 = vmatpush1.msra.mxu0 0.0
  %3952 = vmatprep.subr.mxu0 0.0
  %3953 = vmatpush1.msra.mxu0 0.0
  %3954 = vmatprep.subr.mxu0 0.0
  %3955 = vmatpush1.msra.mxu0 0.0
  %3956 = vmatprep.subr.mxu0 0.0
  %3957 = vmatpush1.msra.mxu0 0.0
  %3958 = vmatprep.subr.mxu0 0.0
  %3959 = vmatpush1.msra.mxu0 0.0
  %3960 = vmatprep.subr.mxu0 0.0
  %3961 = vmatpush1.msra.mxu0 0.0
  %3962 = vmatprep.subr.mxu0 0.0
  %3963 = vmatpush1.msra.mxu0 0.0
  %3964 = vmatprep.subr.mxu0 0.0
  %3965 = vmatpush1.msra.mxu0 0.0
  %3966 = vmatprep.subr.mxu0 0.0
  %3967 = vmatpush1.msra.mxu0 0.0
  %3968 = vmatprep.subr.mxu0 0.0
  %3969 = vmatpush1.msra.mxu0 0.0
  %3970 = vmatprep.subr.mxu0 0.0
  %3971 = vmatpush1.msra.mxu0 0.0
  %3972 = vmatprep.subr.mxu0 0.0
  %3973 = vmatpush1.msra.mxu0 0.0
  %3974 = vmatprep.subr.mxu0 0.0
  %3975 = vmatpush1.msra.mxu0 0.0
  %3976 = vmatprep.subr.mxu0 0.0
  %3977 = vmatpush1.msra.mxu0 0.0
  %3978 = vmatprep.subr.mxu0 0.0
  %3979 = vmatpush1.msra.mxu0 0.0
  %3980 = vmatprep.subr.mxu0 0.0
  %3981 = vmatpush1.msra.mxu0 0.0
  %3982 = vmatprep.mubr.f32.mxu0 0.0
  %v3983 = vand.u32 %v3345, 4294901760
  %3984 = vmatmul.mubr.f32.gmra.mrb[0].mxu0 %v3983
  %v3985 = vpop.f32.mrb[0].mxu0
  %v3986 = vadd.f32 %v3899, %v3985
  %v3987 = vpop.f32.mrb[0].mxu0
  %3988 = vdwg.mxu0
  %v3989 = vadd.f32 %v3347, %v3986
  %v3990 = vmul.f32 %v3989, %v33
  %v3991 = vtanh.pop %v3990
  %v3992 = vmul.f32 %v3991, %v33
  %v3993 = vadd.f32 %v3992, %v34
  %3994 = vrot.lane.b32.xlu0 %v3993, 96
  %v3995 = vpop.permute.xlu0 %3994
  %3996 = vrot.lane.b32.xlu0 %v3993, 64
  %v3997 = vpop.permute.xlu0 %3996
  %3998 = vrot.lane.b32.xlu0 %v3993, 32
  %v3999 = vpop.permute.xlu0 %3998
  %v4000 = vmul.f32 %v3995, %v3343
  %v4001 = vmul.f32 %v3993, %v3999
  %v4002 = vadd.f32 %v4000, %v4001
  %v4003 = vtanh.pop %v4002
  %v4004 = vmul.f32 %v3997, %v4003
  %s4005 = scalar_lea.vmem %s0, 56
  %v4006 = vld [vmem:[%s4005] sm:$0xff]
  %4007 = vmatprep.subr.mxu0 0.0
  %v4008 = vand.u32 %v14, 4294901760
  %4009 = vmatpush1.msra.mxu0 %v4008
  %4010 = vmatprep.subr.mxu0 0.0
  %v4011 = vand.u32 %v15, 4294901760
  %4012 = vmatpush1.msra.mxu0 %v4011
  %4013 = vmatprep.subr.mxu0 0.0
  %v4014 = vand.u32 %v16, 4294901760
  %4015 = vmatpush1.msra.mxu0 %v4014
  %4016 = vmatprep.subr.mxu0 0.0
  %v4017 = vand.u32 %v17, 4294901760
  %4018 = vmatpush1.msra.mxu0 %v4017
  %4019 = vmatprep.subr.mxu0 0.0
  %v4020 = vand.u32 %v18, 4294901760
  %4021 = vmatpush1.msra.mxu0 %v4020
  %4022 = vmatprep.subr.mxu0 0.0
  %v4023 = vand.u32 %v19, 4294901760
  %4024 = vmatpush1.msra.mxu0 %v4023
  %4025 = vmatprep.subr.mxu0 0.0
  %v4026 = vand.u32 %v20, 4294901760
  %4027 = vmatpush1.msra.mxu0 %v4026
  %4028 = vmatprep.subr.mxu0 0.0
  %v4029 = vand.u32 %v21, 4294901760
  %4030 = vmatpush1.msra.mxu0 %v4029
  %4031 = vmatprep.subr.mxu0 0.0
  %v4032 = vand.u32 %v22, 4294901760
  %4033 = vmatpush1.msra.mxu0 %v4032
  %4034 = vmatprep.subr.mxu0 0.0
  %v4035 = vand.u32 %v23, 4294901760
  %4036 = vmatpush1.msra.mxu0 %v4035
  %4037 = vmatprep.subr.mxu0 0.0
  %v4038 = vand.u32 %v24, 4294901760
  %4039 = vmatpush1.msra.mxu0 %v4038
  %4040 = vmatprep.subr.mxu0 0.0
  %v4041 = vand.u32 %v25, 4294901760
  %4042 = vmatpush1.msra.mxu0 %v4041
  %4043 = vmatprep.subr.mxu0 0.0
  %v4044 = vand.u32 %v26, 4294901760
  %4045 = vmatpush1.msra.mxu0 %v4044
  %4046 = vmatprep.subr.mxu0 0.0
  %v4047 = vand.u32 %v27, 4294901760
  %4048 = vmatpush1.msra.mxu0 %v4047
  %4049 = vmatprep.subr.mxu0 0.0
  %v4050 = vand.u32 %v28, 4294901760
  %4051 = vmatpush1.msra.mxu0 %v4050
  %4052 = vmatprep.subr.mxu0 0.0
  %v4053 = vand.u32 %v29, 4294901760
  %4054 = vmatpush1.msra.mxu0 %v4053
  %4055 = vmatprep.subr.mxu0 0.0
  %4056 = vmatpush1.msra.mxu0 0.0
  %4057 = vmatprep.subr.mxu0 0.0
  %4058 = vmatpush1.msra.mxu0 0.0
  %4059 = vmatprep.subr.mxu0 0.0
  %4060 = vmatpush1.msra.mxu0 0.0
  %4061 = vmatprep.subr.mxu0 0.0
  %4062 = vmatpush1.msra.mxu0 0.0
  %4063 = vmatprep.subr.mxu0 0.0
  %4064 = vmatpush1.msra.mxu0 0.0
  %4065 = vmatprep.subr.mxu0 0.0
  %4066 = vmatpush1.msra.mxu0 0.0
  %4067 = vmatprep.subr.mxu0 0.0
  %4068 = vmatpush1.msra.mxu0 0.0
  %4069 = vmatprep.subr.mxu0 0.0
  %4070 = vmatpush1.msra.mxu0 0.0
  %4071 = vmatprep.subr.mxu0 0.0
  %4072 = vmatpush1.msra.mxu0 0.0
  %4073 = vmatprep.subr.mxu0 0.0
  %4074 = vmatpush1.msra.mxu0 0.0
  %4075 = vmatprep.subr.mxu0 0.0
  %4076 = vmatpush1.msra.mxu0 0.0
  %4077 = vmatprep.subr.mxu0 0.0
  %4078 = vmatpush1.msra.mxu0 0.0
  %4079 = vmatprep.subr.mxu0 0.0
  %4080 = vmatpush1.msra.mxu0 0.0
  %4081 = vmatprep.subr.mxu0 0.0
  %4082 = vmatpush1.msra.mxu0 0.0
  %4083 = vmatprep.subr.mxu0 0.0
  %4084 = vmatpush1.msra.mxu0 0.0
  %4085 = vmatprep.subr.mxu0 0.0
  %4086 = vmatpush1.msra.mxu0 0.0
  %4087 = vmatprep.mubr.f32.mxu0 0.0
  %v4088 = vand.u32 %v4004, 4294901760
  %v4089 = vsub.f32 %v4004, %v4088
  %v4090 = vand.u32 %v4089, 4294901760
  %v4091 = vsub.f32 %v4089, %v4090
  %v4092 = vand.u32 %v4091, 4294901760
  %4093 = vmatmul.mubr.f32.gmra.mrb[0].mxu0 %v4092
  %v4094 = vpop.f32.mrb[0].mxu0
  %v4095 = vadd.f32 0.0, %v4094
  %v4096 = vpop.f32.mrb[0].mxu0
  %4097 = vdwg.mxu0
  %4098 = vmatprep.subr.mxu0 0.0
  %v4099 = vand.u32 %v14, 4294901760
  %v4100 = vsub.f32 %v14, %v4099
  %v4101 = vand.u32 %v4100, 4294901760
  %v4102 = vsub.f32 %v4100, %v4101
  %v4103 = vand.u32 %v4102, 4294901760
  %4104 = vmatpush1.msra.mxu0 %v4103
  %4105 = vmatprep.subr.mxu0 0.0
  %v4106 = vand.u32 %v15, 4294901760
  %v4107 = vsub.f32 %v15, %v4106
  %v4108 = vand.u32 %v4107, 4294901760
  %v4109 = vsub.f32 %v4107, %v4108
  %v4110 = vand.u32 %v4109, 4294901760
  %4111 = vmatpush1.msra.mxu0 %v4110
  %4112 = vmatprep.subr.mxu0 0.0
  %v4113 = vand.u32 %v16, 4294901760
  %v4114 = vsub.f32 %v16, %v4113
  %v4115 = vand.u32 %v4114, 4294901760
  %v4116 = vsub.f32 %v4114, %v4115
  %v4117 = vand.u32 %v4116, 4294901760
  %4118 = vmatpush1.msra.mxu0 %v4117
  %4119 = vmatprep.subr.mxu0 0.0
  %v4120 = vand.u32 %v17, 4294901760
  %v4121 = vsub.f32 %v17, %v4120
  %v4122 = vand.u32 %v4121, 4294901760
  %v4123 = vsub.f32 %v4121, %v4122
  %v4124 = vand.u32 %v4123, 4294901760
  %4125 = vmatpush1.msra.mxu0 %v4124
  %4126 = vmatprep.subr.mxu0 0.0
  %v4127 = vand.u32 %v18, 4294901760
  %v4128 = vsub.f32 %v18, %v4127
  %v4129 = vand.u32 %v4128, 4294901760
  %v4130 = vsub.f32 %v4128, %v4129
  %v4131 = vand.u32 %v4130, 4294901760
  %4132 = vmatpush1.msra.mxu0 %v4131
  %4133 = vmatprep.subr.mxu0 0.0
  %v4134 = vand.u32 %v19, 4294901760
  %v4135 = vsub.f32 %v19, %v4134
  %v4136 = vand.u32 %v4135, 4294901760
  %v4137 = vsub.f32 %v4135, %v4136
  %v4138 = vand.u32 %v4137, 4294901760
  %4139 = vmatpush1.msra.mxu0 %v4138
  %4140 = vmatprep.subr.mxu0 0.0
  %v4141 = vand.u32 %v20, 4294901760
  %v4142 = vsub.f32 %v20, %v4141
  %v4143 = vand.u32 %v4142, 4294901760
  %v4144 = vsub.f32 %v4142, %v4143
  %v4145 = vand.u32 %v4144, 4294901760
  %4146 = vmatpush1.msra.mxu0 %v4145
  %4147 = vmatprep.subr.mxu0 0.0
  %v4148 = vand.u32 %v21, 4294901760
  %v4149 = vsub.f32 %v21, %v4148
  %v4150 = vand.u32 %v4149, 4294901760
  %v4151 = vsub.f32 %v4149, %v4150
  %v4152 = vand.u32 %v4151, 4294901760
  %4153 = vmatpush1.msra.mxu0 %v4152
  %4154 = vmatprep.subr.mxu0 0.0
  %v4155 = vand.u32 %v22, 4294901760
  %v4156 = vsub.f32 %v22, %v4155
  %v4157 = vand.u32 %v4156, 4294901760
  %v4158 = vsub.f32 %v4156, %v4157
  %v4159 = vand.u32 %v4158, 4294901760
  %4160 = vmatpush1.msra.mxu0 %v4159
  %4161 = vmatprep.subr.mxu0 0.0
  %v4162 = vand.u32 %v23, 4294901760
  %v4163 = vsub.f32 %v23, %v4162
  %v4164 = vand.u32 %v4163, 4294901760
  %v4165 = vsub.f32 %v4163, %v4164
  %v4166 = vand.u32 %v4165, 4294901760
  %4167 = vmatpush1.msra.mxu0 %v4166
  %4168 = vmatprep.subr.mxu0 0.0
  %v4169 = vand.u32 %v24, 4294901760
  %v4170 = vsub.f32 %v24, %v4169
  %v4171 = vand.u32 %v4170, 4294901760
  %v4172 = vsub.f32 %v4170, %v4171
  %v4173 = vand.u32 %v4172, 4294901760
  %4174 = vmatpush1.msra.mxu0 %v4173
  %4175 = vmatprep.subr.mxu0 0.0
  %v4176 = vand.u32 %v25, 4294901760
  %v4177 = vsub.f32 %v25, %v4176
  %v4178 = vand.u32 %v4177, 4294901760
  %v4179 = vsub.f32 %v4177, %v4178
  %v4180 = vand.u32 %v4179, 4294901760
  %4181 = vmatpush1.msra.mxu0 %v4180
  %4182 = vmatprep.subr.mxu0 0.0
  %v4183 = vand.u32 %v26, 4294901760
  %v4184 = vsub.f32 %v26, %v4183
  %v4185 = vand.u32 %v4184, 4294901760
  %v4186 = vsub.f32 %v4184, %v4185
  %v4187 = vand.u32 %v4186, 4294901760
  %4188 = vmatpush1.msra.mxu0 %v4187
  %4189 = vmatprep.subr.mxu0 0.0
  %v4190 = vand.u32 %v27, 4294901760
  %v4191 = vsub.f32 %v27, %v4190
  %v4192 = vand.u32 %v4191, 4294901760
  %v4193 = vsub.f32 %v4191, %v4192
  %v4194 = vand.u32 %v4193, 4294901760
  %4195 = vmatpush1.msra.mxu0 %v4194
  %4196 = vmatprep.subr.mxu0 0.0
  %v4197 = vand.u32 %v28, 4294901760
  %v4198 = vsub.f32 %v28, %v4197
  %v4199 = vand.u32 %v4198, 4294901760
  %v4200 = vsub.f32 %v4198, %v4199
  %v4201 = vand.u32 %v4200, 4294901760
  %4202 = vmatpush1.msra.mxu0 %v4201
  %4203 = vmatprep.subr.mxu0 0.0
  %v4204 = vand.u32 %v29, 4294901760
  %v4205 = vsub.f32 %v29, %v4204
  %v4206 = vand.u32 %v4205, 4294901760
  %v4207 = vsub.f32 %v4205, %v4206
  %v4208 = vand.u32 %v4207, 4294901760
  %4209 = vmatpush1.msra.mxu0 %v4208
  %4210 = vmatprep.subr.mxu0 0.0
  %4211 = vmatpush1.msra.mxu0 0.0
  %4212 = vmatprep.subr.mxu0 0.0
  %4213 = vmatpush1.msra.mxu0 0.0
  %4214 = vmatprep.subr.mxu0 0.0
  %4215 = vmatpush1.msra.mxu0 0.0
  %4216 = vmatprep.subr.mxu0 0.0
  %4217 = vmatpush1.msra.mxu0 0.0
  %4218 = vmatprep.subr.mxu0 0.0
  %4219 = vmatpush1.msra.mxu0 0.0
  %4220 = vmatprep.subr.mxu0 0.0
  %4221 = vmatpush1.msra.mxu0 0.0
  %4222 = vmatprep.subr.mxu0 0.0
  %4223 = vmatpush1.msra.mxu0 0.0
  %4224 = vmatprep.subr.mxu0 0.0
  %4225 = vmatpush1.msra.mxu0 0.0
  %4226 = vmatprep.subr.mxu0 0.0
  %4227 = vmatpush1.msra.mxu0 0.0
  %4228 = vmatprep.subr.mxu0 0.0
  %4229 = vmatpush1.msra.mxu0 0.0
  %4230 = vmatprep.subr.mxu0 0.0
  %4231 = vmatpush1.msra.mxu0 0.0
  %4232 = vmatprep.subr.mxu0 0.0
  %4233 = vmatpush1.msra.mxu0 0.0
  %4234 = vmatprep.subr.mxu0 0.0
  %4235 = vmatpush1.msra.mxu0 0.0
  %4236 = vmatprep.subr.mxu0 0.0
  %4237 = vmatpush1.msra.mxu0 0.0
  %4238 = vmatprep.subr.mxu0 0.0
  %4239 = vmatpush1.msra.mxu0 0.0
  %4240 = vmatprep.subr.mxu0 0.0
  %4241 = vmatpush1.msra.mxu0 0.0
  %4242 = vmatprep.mubr.f32.mxu0 0.0
  %v4243 = vand.u32 %v4004, 4294901760
  %4244 = vmatmul.mubr.f32.gmra.mrb[0].mxu0 %v4243
  %v4245 = vpop.f32.mrb[0].mxu0
  %v4246 = vadd.f32 %v4095, %v4245
  %v4247 = vpop.f32.mrb[0].mxu0
  %4248 = vdwg.mxu0
  %4249 = vmatprep.subr.mxu0 0.0
  %v4250 = vand.u32 %v14, 4294901760
  %v4251 = vsub.f32 %v14, %v4250
  %4252 = vmatpush1.msra.mxu0 %v4251
  %4253 = vmatprep.subr.mxu0 0.0
  %v4254 = vand.u32 %v15, 4294901760
  %v4255 = vsub.f32 %v15, %v4254
  %4256 = vmatpush1.msra.mxu0 %v4255
  %4257 = vmatprep.subr.mxu0 0.0
  %v4258 = vand.u32 %v16, 4294901760
  %v4259 = vsub.f32 %v16, %v4258
  %4260 = vmatpush1.msra.mxu0 %v4259
  %4261 = vmatprep.subr.mxu0 0.0
  %v4262 = vand.u32 %v17, 4294901760
  %v4263 = vsub.f32 %v17, %v4262
  %4264 = vmatpush1.msra.mxu0 %v4263
  %4265 = vmatprep.subr.mxu0 0.0
  %v4266 = vand.u32 %v18, 4294901760
  %v4267 = vsub.f32 %v18, %v4266
  %4268 = vmatpush1.msra.mxu0 %v4267
  %4269 = vmatprep.subr.mxu0 0.0
  %v4270 = vand.u32 %v19, 4294901760
  %v4271 = vsub.f32 %v19, %v4270
  %4272 = vmatpush1.msra.mxu0 %v4271
  %4273 = vmatprep.subr.mxu0 0.0
  %v4274 = vand.u32 %v20, 4294901760
  %v4275 = vsub.f32 %v20, %v4274
  %4276 = vmatpush1.msra.mxu0 %v4275
  %4277 = vmatprep.subr.mxu0 0.0
  %v4278 = vand.u32 %v21, 4294901760
  %v4279 = vsub.f32 %v21, %v4278
  %4280 = vmatpush1.msra.mxu0 %v4279
  %4281 = vmatprep.subr.mxu0 0.0
  %v4282 = vand.u32 %v22, 4294901760
  %v4283 = vsub.f32 %v22, %v4282
  %4284 = vmatpush1.msra.mxu0 %v4283
  %4285 = vmatprep.subr.mxu0 0.0
  %v4286 = vand.u32 %v23, 4294901760
  %v4287 = vsub.f32 %v23, %v4286
  %4288 = vmatpush1.msra.mxu0 %v4287
  %4289 = vmatprep.subr.mxu0 0.0
  %v4290 = vand.u32 %v24, 4294901760
  %v4291 = vsub.f32 %v24, %v4290
  %4292 = vmatpush1.msra.mxu0 %v4291
  %4293 = vmatprep.subr.mxu0 0.0
  %v4294 = vand.u32 %v25, 4294901760
  %v4295 = vsub.f32 %v25, %v4294
  %4296 = vmatpush1.msra.mxu0 %v4295
  %4297 = vmatprep.subr.mxu0 0.0
  %v4298 = vand.u32 %v26, 4294901760
  %v4299 = vsub.f32 %v26, %v4298
  %4300 = vmatpush1.msra.mxu0 %v4299
  %4301 = vmatprep.subr.mxu0 0.0
  %v4302 = vand.u32 %v27, 4294901760
  %v4303 = vsub.f32 %v27, %v4302
  %4304 = vmatpush1.msra.mxu0 %v4303
  %4305 = vmatprep.subr.mxu0 0.0
  %v4306 = vand.u32 %v28, 4294901760
  %v4307 = vsub.f32 %v28, %v4306
  %4308 = vmatpush1.msra.mxu0 %v4307
  %4309 = vmatprep.subr.mxu0 0.0
  %v4310 = vand.u32 %v29, 4294901760
  %v4311 = vsub.f32 %v29, %v4310
  %4312 = vmatpush1.msra.mxu0 %v4311
  %4313 = vmatprep.subr.mxu0 0.0
  %4314 = vmatpush1.msra.mxu0 0.0
  %4315 = vmatprep.subr.mxu0 0.0
  %4316 = vmatpush1.msra.mxu0 0.0
  %4317 = vmatprep.subr.mxu0 0.0
  %4318 = vmatpush1.msra.mxu0 0.0
  %4319 = vmatprep.subr.mxu0 0.0
  %4320 = vmatpush1.msra.mxu0 0.0
  %4321 = vmatprep.subr.mxu0 0.0
  %4322 = vmatpush1.msra.mxu0 0.0
  %4323 = vmatprep.subr.mxu0 0.0
  %4324 = vmatpush1.msra.mxu0 0.0
  %4325 = vmatprep.subr.mxu0 0.0
  %4326 = vmatpush1.msra.mxu0 0.0
  %4327 = vmatprep.subr.mxu0 0.0
  %4328 = vmatpush1.msra.mxu0 0.0
  %4329 = vmatprep.subr.mxu0 0.0
  %4330 = vmatpush1.msra.mxu0 0.0
  %4331 = vmatprep.subr.mxu0 0.0
  %4332 = vmatpush1.msra.mxu0 0.0
  %4333 = vmatprep.subr.mxu0 0.0
  %4334 = vmatpush1.msra.mxu0 0.0
  %4335 = vmatprep.subr.mxu0 0.0
  %4336 = vmatpush1.msra.mxu0 0.0
  %4337 = vmatprep.subr.mxu0 0.0
  %4338 = vmatpush1.msra.mxu0 0.0
  %4339 = vmatprep.subr.mxu0 0.0
  %4340 = vmatpush1.msra.mxu0 0.0
  %4341 = vmatprep.subr.mxu0 0.0
  %4342 = vmatpush1.msra.mxu0 0.0
  %4343 = vmatprep.subr.mxu0 0.0
  %4344 = vmatpush1.msra.mxu0 0.0
  %4345 = vmatprep.mubr.f32.mxu0 0.0
  %v4346 = vand.u32 %v4004, 4294901760
  %v4347 = vsub.f32 %v4004, %v4346
  %4348 = vmatmul.mubr.f32.gmra.mrb[0].mxu0 %v4347
  %v4349 = vpop.f32.mrb[0].mxu0
  %v4350 = vadd.f32 %v4246, %v4349
  %v4351 = vpop.f32.mrb[0].mxu0
  %4352 = vdwg.mxu0
  %4353 = vmatprep.subr.mxu0 0.0
  %v4354 = vand.u32 %v14, 4294901760
  %4355 = vmatpush1.msra.mxu0 %v4354
  %4356 = vmatprep.subr.mxu0 0.0
  %v4357 = vand.u32 %v15, 4294901760
  %4358 = vmatpush1.msra.mxu0 %v4357
  %4359 = vmatprep.subr.mxu0 0.0
  %v4360 = vand.u32 %v16, 4294901760
  %4361 = vmatpush1.msra.mxu0 %v4360
  %4362 = vmatprep.subr.mxu0 0.0
  %v4363 = vand.u32 %v17, 4294901760
  %4364 = vmatpush1.msra.mxu0 %v4363
  %4365 = vmatprep.subr.mxu0 0.0
  %v4366 = vand.u32 %v18, 4294901760
  %4367 = vmatpush1.msra.mxu0 %v4366
  %4368 = vmatprep.subr.mxu0 0.0
  %v4369 = vand.u32 %v19, 4294901760
  %4370 = vmatpush1.msra.mxu0 %v4369
  %4371 = vmatprep.subr.mxu0 0.0
  %v4372 = vand.u32 %v20, 4294901760
  %4373 = vmatpush1.msra.mxu0 %v4372
  %4374 = vmatprep.subr.mxu0 0.0
  %v4375 = vand.u32 %v21, 4294901760
  %4376 = vmatpush1.msra.mxu0 %v4375
  %4377 = vmatprep.subr.mxu0 0.0
  %v4378 = vand.u32 %v22, 4294901760
  %4379 = vmatpush1.msra.mxu0 %v4378
  %4380 = vmatprep.subr.mxu0 0.0
  %v4381 = vand.u32 %v23, 4294901760
  %4382 = vmatpush1.msra.mxu0 %v4381
  %4383 = vmatprep.subr.mxu0 0.0
  %v4384 = vand.u32 %v24, 4294901760
  %4385 = vmatpush1.msra.mxu0 %v4384
  %4386 = vmatprep.subr.mxu0 0.0
  %v4387 = vand.u32 %v25, 4294901760
  %4388 = vmatpush1.msra.mxu0 %v4387
  %4389 = vmatprep.subr.mxu0 0.0
  %v4390 = vand.u32 %v26, 4294901760
  %4391 = vmatpush1.msra.mxu0 %v4390
  %4392 = vmatprep.subr.mxu0 0.0
  %v4393 = vand.u32 %v27, 4294901760
  %4394 = vmatpush1.msra.mxu0 %v4393
  %4395 = vmatprep.subr.mxu0 0.0
  %v4396 = vand.u32 %v28, 4294901760
  %4397 = vmatpush1.msra.mxu0 %v4396
  %4398 = vmatprep.subr.mxu0 0.0
  %v4399 = vand.u32 %v29, 4294901760
  %4400 = vmatpush1.msra.mxu0 %v4399
  %4401 = vmatprep.subr.mxu0 0.0
  %4402 = vmatpush1.msra.mxu0 0.0
  %4403 = vmatprep.subr.mxu0 0.0
  %4404 = vmatpush1.msra.mxu0 0.0
  %4405 = vmatprep.subr.mxu0 0.0
  %4406 = vmatpush1.msra.mxu0 0.0
  %4407 = vmatprep.subr.mxu0 0.0
  %4408 = vmatpush1.msra.mxu0 0.0
  %4409 = vmatprep.subr.mxu0 0.0
  %4410 = vmatpush1.msra.mxu0 0.0
  %4411 = vmatprep.subr.mxu0 0.0
  %4412 = vmatpush1.msra.mxu0 0.0
  %4413 = vmatprep.subr.mxu0 0.0
  %4414 = vmatpush1.msra.mxu0 0.0
  %4415 = vmatprep.subr.mxu0 0.0
  %4416 = vmatpush1.msra.mxu0 0.0
  %4417 = vmatprep.subr.mxu0 0.0
  %4418 = vmatpush1.msra.mxu0 0.0
  %4419 = vmatprep.subr.mxu0 0.0
  %4420 = vmatpush1.msra.mxu0 0.0
  %4421 = vmatprep.subr.mxu0 0.0
  %4422 = vmatpush1.msra.mxu0 0.0
  %4423 = vmatprep.subr.mxu0 0.0
  %4424 = vmatpush1.msra.mxu0 0.0
  %4425 = vmatprep.subr.mxu0 0.0
  %4426 = vmatpush1.msra.mxu0 0.0
  %4427 = vmatprep.subr.mxu0 0.0
  %4428 = vmatpush1.msra.mxu0 0.0
  %4429 = vmatprep.subr.mxu0 0.0
  %4430 = vmatpush1.msra.mxu0 0.0
  %4431 = vmatprep.subr.mxu0 0.0
  %4432 = vmatpush1.msra.mxu0 0.0
  %4433 = vmatprep.mubr.f32.mxu0 0.0
  %v4434 = vand.u32 %v4004, 4294901760
  %v4435 = vsub.f32 %v4004, %v4434
  %v4436 = vand.u32 %v4435, 4294901760
  %4437 = vmatmul.mubr.f32.gmra.mrb[0].mxu0 %v4436
  %v4438 = vpop.f32.mrb[0].mxu0
  %v4439 = vadd.f32 %v4350, %v4438
  %v4440 = vpop.f32.mrb[0].mxu0
  %4441 = vdwg.mxu0
  %4442 = vmatprep.subr.mxu0 0.0
  %v4443 = vand.u32 %v14, 4294901760
  %v4444 = vsub.f32 %v14, %v4443
  %v4445 = vand.u32 %v4444, 4294901760
  %4446 = vmatpush1.msra.mxu0 %v4445
  %4447 = vmatprep.subr.mxu0 0.0
  %v4448 = vand.u32 %v15, 4294901760
  %v4449 = vsub.f32 %v15, %v4448
  %v4450 = vand.u32 %v4449, 4294901760
  %4451 = vmatpush1.msra.mxu0 %v4450
  %4452 = vmatprep.subr.mxu0 0.0
  %v4453 = vand.u32 %v16, 4294901760
  %v4454 = vsub.f32 %v16, %v4453
  %v4455 = vand.u32 %v4454, 4294901760
  %4456 = vmatpush1.msra.mxu0 %v4455
  %4457 = vmatprep.subr.mxu0 0.0
  %v4458 = vand.u32 %v17, 4294901760
  %v4459 = vsub.f32 %v17, %v4458
  %v4460 = vand.u32 %v4459, 4294901760
  %4461 = vmatpush1.msra.mxu0 %v4460
  %4462 = vmatprep.subr.mxu0 0.0
  %v4463 = vand.u32 %v18, 4294901760
  %v4464 = vsub.f32 %v18, %v4463
  %v4465 = vand.u32 %v4464, 4294901760
  %4466 = vmatpush1.msra.mxu0 %v4465
  %4467 = vmatprep.subr.mxu0 0.0
  %v4468 = vand.u32 %v19, 4294901760
  %v4469 = vsub.f32 %v19, %v4468
  %v4470 = vand.u32 %v4469, 4294901760
  %4471 = vmatpush1.msra.mxu0 %v4470
  %4472 = vmatprep.subr.mxu0 0.0
  %v4473 = vand.u32 %v20, 4294901760
  %v4474 = vsub.f32 %v20, %v4473
  %v4475 = vand.u32 %v4474, 4294901760
  %4476 = vmatpush1.msra.mxu0 %v4475
  %4477 = vmatprep.subr.mxu0 0.0
  %v4478 = vand.u32 %v21, 4294901760
  %v4479 = vsub.f32 %v21, %v4478
  %v4480 = vand.u32 %v4479, 4294901760
  %4481 = vmatpush1.msra.mxu0 %v4480
  %4482 = vmatprep.subr.mxu0 0.0
  %v4483 = vand.u32 %v22, 4294901760
  %v4484 = vsub.f32 %v22, %v4483
  %v4485 = vand.u32 %v4484, 4294901760
  %4486 = vmatpush1.msra.mxu0 %v4485
  %4487 = vmatprep.subr.mxu0 0.0
  %v4488 = vand.u32 %v23, 4294901760
  %v4489 = vsub.f32 %v23, %v4488
  %v4490 = vand.u32 %v4489, 4294901760
  %4491 = vmatpush1.msra.mxu0 %v4490
  %4492 = vmatprep.subr.mxu0 0.0
  %v4493 = vand.u32 %v24, 4294901760
  %v4494 = vsub.f32 %v24, %v4493
  %v4495 = vand.u32 %v4494, 4294901760
  %4496 = vmatpush1.msra.mxu0 %v4495
  %4497 = vmatprep.subr.mxu0 0.0
  %v4498 = vand.u32 %v25, 4294901760
  %v4499 = vsub.f32 %v25, %v4498
  %v4500 = vand.u32 %v4499, 4294901760
  %4501 = vmatpush1.msra.mxu0 %v4500
  %4502 = vmatprep.subr.mxu0 0.0
  %v4503 = vand.u32 %v26, 4294901760
  %v4504 = vsub.f32 %v26, %v4503
  %v4505 = vand.u32 %v4504, 4294901760
  %4506 = vmatpush1.msra.mxu0 %v4505
  %4507 = vmatprep.subr.mxu0 0.0
  %v4508 = vand.u32 %v27, 4294901760
  %v4509 = vsub.f32 %v27, %v4508
  %v4510 = vand.u32 %v4509, 4294901760
  %4511 = vmatpush1.msra.mxu0 %v4510
  %4512 = vmatprep.subr.mxu0 0.0
  %v4513 = vand.u32 %v28, 4294901760
  %v4514 = vsub.f32 %v28, %v4513
  %v4515 = vand.u32 %v4514, 4294901760
  %4516 = vmatpush1.msra.mxu0 %v4515
  %4517 = vmatprep.subr.mxu0 0.0
  %v4518 = vand.u32 %v29, 4294901760
  %v4519 = vsub.f32 %v29, %v4518
  %v4520 = vand.u32 %v4519, 4294901760
  %4521 = vmatpush1.msra.mxu0 %v4520
  %4522 = vmatprep.subr.mxu0 0.0
  %4523 = vmatpush1.msra.mxu0 0.0
  %4524 = vmatprep.subr.mxu0 0.0
  %4525 = vmatpush1.msra.mxu0 0.0
  %4526 = vmatprep.subr.mxu0 0.0
  %4527 = vmatpush1.msra.mxu0 0.0
  %4528 = vmatprep.subr.mxu0 0.0
  %4529 = vmatpush1.msra.mxu0 0.0
  %4530 = vmatprep.subr.mxu0 0.0
  %4531 = vmatpush1.msra.mxu0 0.0
  %4532 = vmatprep.subr.mxu0 0.0
  %4533 = vmatpush1.msra.mxu0 0.0
  %4534 = vmatprep.subr.mxu0 0.0
  %4535 = vmatpush1.msra.mxu0 0.0
  %4536 = vmatprep.subr.mxu0 0.0
  %4537 = vmatpush1.msra.mxu0 0.0
  %4538 = vmatprep.subr.mxu0 0.0
  %4539 = vmatpush1.msra.mxu0 0.0
  %4540 = vmatprep.subr.mxu0 0.0
  %4541 = vmatpush1.msra.mxu0 0.0
  %4542 = vmatprep.subr.mxu0 0.0
  %4543 = vmatpush1.msra.mxu0 0.0
  %4544 = vmatprep.subr.mxu0 0.0
  %4545 = vmatpush1.msra.mxu0 0.0
  %4546 = vmatprep.subr.mxu0 0.0
  %4547 = vmatpush1.msra.mxu0 0.0
  %4548 = vmatprep.subr.mxu0 0.0
  %4549 = vmatpush1.msra.mxu0 0.0
  %4550 = vmatprep.subr.mxu0 0.0
  %4551 = vmatpush1.msra.mxu0 0.0
  %4552 = vmatprep.subr.mxu0 0.0
  %4553 = vmatpush1.msra.mxu0 0.0
  %4554 = vmatprep.mubr.f32.mxu0 0.0
  %v4555 = vand.u32 %v4004, 4294901760
  %4556 = vmatmul.mubr.f32.gmra.mrb[0].mxu0 %v4555
  %v4557 = vpop.f32.mrb[0].mxu0
  %v4558 = vadd.f32 %v4439, %v4557
  %v4559 = vpop.f32.mrb[0].mxu0
  %4560 = vdwg.mxu0
  %4561 = vmatprep.subr.mxu0 0.0
  %v4562 = vand.u32 %v14, 4294901760
  %4563 = vmatpush1.msra.mxu0 %v4562
  %4564 = vmatprep.subr.mxu0 0.0
  %v4565 = vand.u32 %v15, 4294901760
  %4566 = vmatpush1.msra.mxu0 %v4565
  %4567 = vmatprep.subr.mxu0 0.0
  %v4568 = vand.u32 %v16, 4294901760
  %4569 = vmatpush1.msra.mxu0 %v4568
  %4570 = vmatprep.subr.mxu0 0.0
  %v4571 = vand.u32 %v17, 4294901760
  %4572 = vmatpush1.msra.mxu0 %v4571
  %4573 = vmatprep.subr.mxu0 0.0
  %v4574 = vand.u32 %v18, 4294901760
  %4575 = vmatpush1.msra.mxu0 %v4574
  %4576 = vmatprep.subr.mxu0 0.0
  %v4577 = vand.u32 %v19, 4294901760
  %4578 = vmatpush1.msra.mxu0 %v4577
  %4579 = vmatprep.subr.mxu0 0.0
  %v4580 = vand.u32 %v20, 4294901760
  %4581 = vmatpush1.msra.mxu0 %v4580
  %4582 = vmatprep.subr.mxu0 0.0
  %v4583 = vand.u32 %v21, 4294901760
  %4584 = vmatpush1.msra.mxu0 %v4583
  %4585 = vmatprep.subr.mxu0 0.0
  %v4586 = vand.u32 %v22, 4294901760
  %4587 = vmatpush1.msra.mxu0 %v4586
  %4588 = vmatprep.subr.mxu0 0.0
  %v4589 = vand.u32 %v23, 4294901760
  %4590 = vmatpush1.msra.mxu0 %v4589
  %4591 = vmatprep.subr.mxu0 0.0
  %v4592 = vand.u32 %v24, 4294901760
  %4593 = vmatpush1.msra.mxu0 %v4592
  %4594 = vmatprep.subr.mxu0 0.0
  %v4595 = vand.u32 %v25, 4294901760
  %4596 = vmatpush1.msra.mxu0 %v4595
  %4597 = vmatprep.subr.mxu0 0.0
  %v4598 = vand.u32 %v26, 4294901760
  %4599 = vmatpush1.msra.mxu0 %v4598
  %4600 = vmatprep.subr.mxu0 0.0
  %v4601 = vand.u32 %v27, 4294901760
  %4602 = vmatpush1.msra.mxu0 %v4601
  %4603 = vmatprep.subr.mxu0 0.0
  %v4604 = vand.u32 %v28, 4294901760
  %4605 = vmatpush1.msra.mxu0 %v4604
  %4606 = vmatprep.subr.mxu0 0.0
  %v4607 = vand.u32 %v29, 4294901760
  %4608 = vmatpush1.msra.mxu0 %v4607
  %4609 = vmatprep.subr.mxu0 0.0
  %4610 = vmatpush1.msra.mxu0 0.0
  %4611 = vmatprep.subr.mxu0 0.0
  %4612 = vmatpush1.msra.mxu0 0.0
  %4613 = vmatprep.subr.mxu0 0.0
  %4614 = vmatpush1.msra.mxu0 0.0
  %4615 = vmatprep.subr.mxu0 0.0
  %4616 = vmatpush1.msra.mxu0 0.0
  %4617 = vmatprep.subr.mxu0 0.0
  %4618 = vmatpush1.msra.mxu0 0.0
  %4619 = vmatprep.subr.mxu0 0.0
  %4620 = vmatpush1.msra.mxu0 0.0
  %4621 = vmatprep.subr.mxu0 0.0
  %4622 = vmatpush1.msra.mxu0 0.0
  %4623 = vmatprep.subr.mxu0 0.0
  %4624 = vmatpush1.msra.mxu0 0.0
  %4625 = vmatprep.subr.mxu0 0.0
  %4626 = vmatpush1.msra.mxu0 0.0
  %4627 = vmatprep.subr.mxu0 0.0
  %4628 = vmatpush1.msra.mxu0 0.0
  %4629 = vmatprep.subr.mxu0 0.0
  %4630 = vmatpush1.msra.mxu0 0.0
  %4631 = vmatprep.subr.mxu0 0.0
  %4632 = vmatpush1.msra.mxu0 0.0
  %4633 = vmatprep.subr.mxu0 0.0
  %4634 = vmatpush1.msra.mxu0 0.0
  %4635 = vmatprep.subr.mxu0 0.0
  %4636 = vmatpush1.msra.mxu0 0.0
  %4637 = vmatprep.subr.mxu0 0.0
  %4638 = vmatpush1.msra.mxu0 0.0
  %4639 = vmatprep.subr.mxu0 0.0
  %4640 = vmatpush1.msra.mxu0 0.0
  %4641 = vmatprep.mubr.f32.mxu0 0.0
  %v4642 = vand.u32 %v4004, 4294901760
  %4643 = vmatmul.mubr.f32.gmra.mrb[0].mxu0 %v4642
  %v4644 = vpop.f32.mrb[0].mxu0
  %v4645 = vadd.f32 %v4558, %v4644
  %v4646 = vpop.f32.mrb[0].mxu0
  %4647 = vdwg.mxu0
  %v4648 = vadd.f32 %v4006, %v4645
  %v4649 = vmul.f32 %v4648, %v33
  %v4650 = vtanh.pop %v4649
  %v4651 = vmul.f32 %v4650, %v33
  %v4652 = vadd.f32 %v4651, %v34
  %4653 = vrot.lane.b32.xlu0 %v4652, 96
  %v4654 = vpop.permute.xlu0 %4653
  %4655 = vrot.lane.b32.xlu0 %v4652, 64
  %v4656 = vpop.permute.xlu0 %4655
  %4657 = vrot.lane.b32.xlu0 %v4652, 32
  %v4658 = vpop.permute.xlu0 %4657
  %v4659 = vmul.f32 %v4654, %v4002
  %v4660 = vmul.f32 %v4652, %v4658
  %v4661 = vadd.f32 %v4659, %v4660
  %v4662 = vtanh.pop %v4661
  %v4663 = vmul.f32 %v4656, %v4662
  %vm4664 = vcmask 261120
  %v4665 = vsel %vm4664, %v4663, 0.0
  %4666 = vadd.xlane.f32.xlu0 %v4665
  %v4667 = vpop.xlane.xlu0 %4666
  %v4668 = vrcp.pop 32.0
  %v4669 = vmul.f32 %v4667, %v4668
  %v4670 = vsub.f32 %v4663, %v4669
  %v4671 = vmul.f32 %v4670, %v4670
  %v4672 = vsel %vm4664, %v4671, 0.0
  %4673 = vadd.xlane.f32.xlu0 %v4672
  %v4674 = vpop.xlane.xlu0 %4673
  %v4675 = vmul.f32 %v4674, %v4668
  %v4676 = vld [vmem:[%s2] sm:$0x1]
  %v4677 = vld [vmem:[%s2 + $0x1] sm:$0x1]
  %v4678 = vadd.f32 %v4675, 1e-05
  %v4679 = vrsqrt.pop %v4678
  %v4680 = vmul.f32 %v4670, %v4679
  %v4681 = vlaneseq
  %v4682 = vshrl.u32 %v4681, 7
  %v4683 = vsub.s32 0, %v4682
  %v4684 = vrot.slane %v4676, %v4683
  %v4685 = vmul.f32 %v4680, %v4684
  %v4686 = vlaneseq
  %v4687 = vshrl.u32 %v4686, 7
  %v4688 = vsub.s32 0, %v4687
  %v4689 = vrot.slane %v4677, %v4688
  %v4690 = vadd.f32 %v4685, %v4689
  %v4691 = vmax.f32 %v4690, 0.0
  %v4692 = vld [vmem:[%s2 + $0x3] sm:$0x3]
  %v4693 = vld [vmem:[%s2 + $0x2] sm:$0x1]
  %v4694 = vlaneseq
  %v4695 = vshrl.u32 %v4694, 7
  %v4696 = vsub.s32 0, %v4695
  %v4697 = vrot.slane %v4693, %v4696
  %v4699 = vsel %vm4664, %v4691, 0
  %v4702 = vsel %vm4664, %v4692, 0
  %4704 = vmatprep.subr.mxu0 0.0
  %v4705 = vand.u32 %v4702, 4294901760
  %4706 = vmatpush1.xpose.msra.mxu0 %v4705
  %4707 = vmatprep.subr.mxu0 0.0
  %4708 = vmatpush1.xpose.msra.mxu0 0.0
  %4709 = vmatprep.subr.mxu0 0.0
  %4710 = vmatpush1.xpose.msra.mxu0 0.0
  %4711 = vmatprep.subr.mxu0 0.0
  %4712 = vmatpush1.xpose.msra.mxu0 0.0
  %4713 = vmatprep.subr.mxu0 0.0
  %4714 = vmatpush1.xpose.msra.mxu0 0.0
  %4715 = vmatprep.subr.mxu0 0.0
  %4716 = vmatpush1.xpose.msra.mxu0 0.0
  %4717 = vmatprep.subr.mxu0 0.0
  %4718 = vmatpush1.xpose.msra.mxu0 0.0
  %4719 = vmatprep.subr.mxu0 0.0
  %4720 = vmatpush1.xpose.msra.mxu0 0.0
  %4721 = vmatprep.subr.mxu0 0.0
  %4722 = vmatpush1.xpose.msra.mxu0 0.0
  %4723 = vmatprep.subr.mxu0 0.0
  %4724 = vmatpush1.xpose.msra.mxu0 0.0
  %4725 = vmatprep.subr.mxu0 0.0
  %4726 = vmatpush1.xpose.msra.mxu0 0.0
  %4727 = vmatprep.subr.mxu0 0.0
  %4728 = vmatpush1.xpose.msra.mxu0 0.0
  %4729 = vmatprep.subr.mxu0 0.0
  %4730 = vmatpush1.xpose.msra.mxu0 0.0
  %4731 = vmatprep.subr.mxu0 0.0
  %4732 = vmatpush1.xpose.msra.mxu0 0.0
  %4733 = vmatprep.subr.mxu0 0.0
  %4734 = vmatpush1.xpose.msra.mxu0 0.0
  %4735 = vmatprep.subr.mxu0 0.0
  %4736 = vmatpush1.xpose.msra.mxu0 0.0
  %4737 = vmatprep.subr.mxu0 0.0
  %4738 = vmatpush1.xpose.msra.mxu0 0.0
  %4739 = vmatprep.subr.mxu0 0.0
  %4740 = vmatpush1.xpose.msra.mxu0 0.0
  %4741 = vmatprep.subr.mxu0 0.0
  %4742 = vmatpush1.xpose.msra.mxu0 0.0
  %4743 = vmatprep.subr.mxu0 0.0
  %4744 = vmatpush1.xpose.msra.mxu0 0.0
  %4745 = vmatprep.subr.mxu0 0.0
  %4746 = vmatpush1.xpose.msra.mxu0 0.0
  %4747 = vmatprep.subr.mxu0 0.0
  %4748 = vmatpush1.xpose.msra.mxu0 0.0
  %4749 = vmatprep.subr.mxu0 0.0
  %4750 = vmatpush1.xpose.msra.mxu0 0.0
  %4751 = vmatprep.subr.mxu0 0.0
  %4752 = vmatpush1.xpose.msra.mxu0 0.0
  %4753 = vmatprep.subr.mxu0 0.0
  %4754 = vmatpush1.xpose.msra.mxu0 0.0
  %4755 = vmatprep.subr.mxu0 0.0
  %4756 = vmatpush1.xpose.msra.mxu0 0.0
  %4757 = vmatprep.subr.mxu0 0.0
  %4758 = vmatpush1.xpose.msra.mxu0 0.0
  %4759 = vmatprep.subr.mxu0 0.0
  %4760 = vmatpush1.xpose.msra.mxu0 0.0
  %4761 = vmatprep.subr.mxu0 0.0
  %4762 = vmatpush1.xpose.msra.mxu0 0.0
  %4763 = vmatprep.subr.mxu0 0.0
  %4764 = vmatpush1.xpose.msra.mxu0 0.0
  %4765 = vmatprep.subr.mxu0 0.0
  %4766 = vmatpush1.xpose.msra.mxu0 0.0
  %4767 = vmatprep.subr.mxu0 0.0
  %4768 = vmatpush1.xpose.msra.mxu0 0.0
  %4769 = vmatprep.mubr.f32.mxu0 0.0
  %v4770 = vand.u32 %v4699, 4294901760
  %v4771 = vsub.f32 %v4699, %v4770
  %v4772 = vand.u32 %v4771, 4294901760
  %v4773 = vsub.f32 %v4771, %v4772
  %v4774 = vand.u32 %v4773, 4294901760
  %4775 = vmatmul.mubr.f32.gmra.mrb[0].mxu0 %v4774
  %v4776 = vpop.f32.mrb[0].mxu0
  %v4777 = vadd.f32 %v4697, %v4776
  %v4778 = vpop.f32.mrb[0].mxu0
  %4779 = vdwg.mxu0
  %4780 = vmatprep.subr.mxu0 0.0
  %v4781 = vand.u32 %v4702, 4294901760
  %v4782 = vsub.f32 %v4702, %v4781
  %v4783 = vand.u32 %v4782, 4294901760
  %v4784 = vsub.f32 %v4782, %v4783
  %v4785 = vand.u32 %v4784, 4294901760
  %4786 = vmatpush1.xpose.msra.mxu0 %v4785
  %4787 = vmatprep.subr.mxu0 0.0
  %4788 = vmatpush1.xpose.msra.mxu0 0.0
  %4789 = vmatprep.subr.mxu0 0.0
  %4790 = vmatpush1.xpose.msra.mxu0 0.0
  %4791 = vmatprep.subr.mxu0 0.0
  %4792 = vmatpush1.xpose.msra.mxu0 0.0
  %4793 = vmatprep.subr.mxu0 0.0
  %4794 = vmatpush1.xpose.msra.mxu0 0.0
  %4795 = vmatprep.subr.mxu0 0.0
  %4796 = vmatpush1.xpose.msra.mxu0 0.0
  %4797 = vmatprep.subr.mxu0 0.0
  %4798 = vmatpush1.xpose.msra.mxu0 0.0
  %4799 = vmatprep.subr.mxu0 0.0
  %4800 = vmatpush1.xpose.msra.mxu0 0.0
  %4801 = vmatprep.subr.mxu0 0.0
  %4802 = vmatpush1.xpose.msra.mxu0 0.0
  %4803 = vmatprep.subr.mxu0 0.0
  %4804 = vmatpush1.xpose.msra.mxu0 0.0
  %4805 = vmatprep.subr.mxu0 0.0
  %4806 = vmatpush1.xpose.msra.mxu0 0.0
  %4807 = vmatprep.subr.mxu0 0.0
  %4808 = vmatpush1.xpose.msra.mxu0 0.0
  %4809 = vmatprep.subr.mxu0 0.0
  %4810 = vmatpush1.xpose.msra.mxu0 0.0
  %4811 = vmatprep.subr.mxu0 0.0
  %4812 = vmatpush1.xpose.msra.mxu0 0.0
  %4813 = vmatprep.subr.mxu0 0.0
  %4814 = vmatpush1.xpose.msra.mxu0 0.0
  %4815 = vmatprep.subr.mxu0 0.0
  %4816 = vmatpush1.xpose.msra.mxu0 0.0
  %4817 = vmatprep.subr.mxu0 0.0
  %4818 = vmatpush1.xpose.msra.mxu0 0.0
  %4819 = vmatprep.subr.mxu0 0.0
  %4820 = vmatpush1.xpose.msra.mxu0 0.0
  %4821 = vmatprep.subr.mxu0 0.0
  %4822 = vmatpush1.xpose.msra.mxu0 0.0
  %4823 = vmatprep.subr.mxu0 0.0
  %4824 = vmatpush1.xpose.msra.mxu0 0.0
  %4825 = vmatprep.subr.mxu0 0.0
  %4826 = vmatpush1.xpose.msra.mxu0 0.0
  %4827 = vmatprep.subr.mxu0 0.0
  %4828 = vmatpush1.xpose.msra.mxu0 0.0
  %4829 = vmatprep.subr.mxu0 0.0
  %4830 = vmatpush1.xpose.msra.mxu0 0.0
  %4831 = vmatprep.subr.mxu0 0.0
  %4832 = vmatpush1.xpose.msra.mxu0 0.0
  %4833 = vmatprep.subr.mxu0 0.0
  %4834 = vmatpush1.xpose.msra.mxu0 0.0
  %4835 = vmatprep.subr.mxu0 0.0
  %4836 = vmatpush1.xpose.msra.mxu0 0.0
  %4837 = vmatprep.subr.mxu0 0.0
  %4838 = vmatpush1.xpose.msra.mxu0 0.0
  %4839 = vmatprep.subr.mxu0 0.0
  %4840 = vmatpush1.xpose.msra.mxu0 0.0
  %4841 = vmatprep.subr.mxu0 0.0
  %4842 = vmatpush1.xpose.msra.mxu0 0.0
  %4843 = vmatprep.subr.mxu0 0.0
  %4844 = vmatpush1.xpose.msra.mxu0 0.0
  %4845 = vmatprep.subr.mxu0 0.0
  %4846 = vmatpush1.xpose.msra.mxu0 0.0
  %4847 = vmatprep.subr.mxu0 0.0
  %4848 = vmatpush1.xpose.msra.mxu0 0.0
  %4849 = vmatprep.mubr.f32.mxu0 0.0
  %v4850 = vand.u32 %v4699, 4294901760
  %4851 = vmatmul.mubr.f32.gmra.mrb[0].mxu0 %v4850
  %v4852 = vpop.f32.mrb[0].mxu0
  %v4853 = vadd.f32 %v4777, %v4852
  %v4854 = vpop.f32.mrb[0].mxu0
  %4855 = vdwg.mxu0
  %4856 = vmatprep.subr.mxu0 0.0
  %v4857 = vand.u32 %v4702, 4294901760
  %v4858 = vsub.f32 %v4702, %v4857
  %4859 = vmatpush1.xpose.msra.mxu0 %v4858
  %4860 = vmatprep.subr.mxu0 0.0
  %4861 = vmatpush1.xpose.msra.mxu0 0.0
  %4862 = vmatprep.subr.mxu0 0.0
  %4863 = vmatpush1.xpose.msra.mxu0 0.0
  %4864 = vmatprep.subr.mxu0 0.0
  %4865 = vmatpush1.xpose.msra.mxu0 0.0
  %4866 = vmatprep.subr.mxu0 0.0
  %4867 = vmatpush1.xpose.msra.mxu0 0.0
  %4868 = vmatprep.subr.mxu0 0.0
  %4869 = vmatpush1.xpose.msra.mxu0 0.0
  %4870 = vmatprep.subr.mxu0 0.0
  %4871 = vmatpush1.xpose.msra.mxu0 0.0
  %4872 = vmatprep.subr.mxu0 0.0
  %4873 = vmatpush1.xpose.msra.mxu0 0.0
  %4874 = vmatprep.subr.mxu0 0.0
  %4875 = vmatpush1.xpose.msra.mxu0 0.0
  %4876 = vmatprep.subr.mxu0 0.0
  %4877 = vmatpush1.xpose.msra.mxu0 0.0
  %4878 = vmatprep.subr.mxu0 0.0
  %4879 = vmatpush1.xpose.msra.mxu0 0.0
  %4880 = vmatprep.subr.mxu0 0.0
  %4881 = vmatpush1.xpose.msra.mxu0 0.0
  %4882 = vmatprep.subr.mxu0 0.0
  %4883 = vmatpush1.xpose.msra.mxu0 0.0
  %4884 = vmatprep.subr.mxu0 0.0
  %4885 = vmatpush1.xpose.msra.mxu0 0.0
  %4886 = vmatprep.subr.mxu0 0.0
  %4887 = vmatpush1.xpose.msra.mxu0 0.0
  %4888 = vmatprep.subr.mxu0 0.0
  %4889 = vmatpush1.xpose.msra.mxu0 0.0
  %4890 = vmatprep.subr.mxu0 0.0
  %4891 = vmatpush1.xpose.msra.mxu0 0.0
  %4892 = vmatprep.subr.mxu0 0.0
  %4893 = vmatpush1.xpose.msra.mxu0 0.0
  %4894 = vmatprep.subr.mxu0 0.0
  %4895 = vmatpush1.xpose.msra.mxu0 0.0
  %4896 = vmatprep.subr.mxu0 0.0
  %4897 = vmatpush1.xpose.msra.mxu0 0.0
  %4898 = vmatprep.subr.mxu0 0.0
  %4899 = vmatpush1.xpose.msra.mxu0 0.0
  %4900 = vmatprep.subr.mxu0 0.0
  %4901 = vmatpush1.xpose.msra.mxu0 0.0
  %4902 = vmatprep.subr.mxu0 0.0
  %4903 = vmatpush1.xpose.msra.mxu0 0.0
  %4904 = vmatprep.subr.mxu0 0.0
  %4905 = vmatpush1.xpose.msra.mxu0 0.0
  %4906 = vmatprep.subr.mxu0 0.0
  %4907 = vmatpush1.xpose.msra.mxu0 0.0
  %4908 = vmatprep.subr.mxu0 0.0
  %4909 = vmatpush1.xpose.msra.mxu0 0.0
  %4910 = vmatprep.subr.mxu0 0.0
  %4911 = vmatpush1.xpose.msra.mxu0 0.0
  %4912 = vmatprep.subr.mxu0 0.0
  %4913 = vmatpush1.xpose.msra.mxu0 0.0
  %4914 = vmatprep.subr.mxu0 0.0
  %4915 = vmatpush1.xpose.msra.mxu0 0.0
  %4916 = vmatprep.subr.mxu0 0.0
  %4917 = vmatpush1.xpose.msra.mxu0 0.0
  %4918 = vmatprep.subr.mxu0 0.0
  %4919 = vmatpush1.xpose.msra.mxu0 0.0
  %4920 = vmatprep.subr.mxu0 0.0
  %4921 = vmatpush1.xpose.msra.mxu0 0.0
  %4922 = vmatprep.mubr.f32.mxu0 0.0
  %v4923 = vand.u32 %v4699, 4294901760
  %v4924 = vsub.f32 %v4699, %v4923
  %4925 = vmatmul.mubr.f32.gmra.mrb[0].mxu0 %v4924
  %v4926 = vpop.f32.mrb[0].mxu0
  %v4927 = vadd.f32 %v4853, %v4926
  %v4928 = vpop.f32.mrb[0].mxu0
  %4929 = vdwg.mxu0
  %4930 = vmatprep.subr.mxu0 0.0
  %v4931 = vand.u32 %v4702, 4294901760
  %4932 = vmatpush1.xpose.msra.mxu0 %v4931
  %4933 = vmatprep.subr.mxu0 0.0
  %4934 = vmatpush1.xpose.msra.mxu0 0.0
  %4935 = vmatprep.subr.mxu0 0.0
  %4936 = vmatpush1.xpose.msra.mxu0 0.0
  %4937 = vmatprep.subr.mxu0 0.0
  %4938 = vmatpush1.xpose.msra.mxu0 0.0
  %4939 = vmatprep.subr.mxu0 0.0
  %4940 = vmatpush1.xpose.msra.mxu0 0.0
  %4941 = vmatprep.subr.mxu0 0.0
  %4942 = vmatpush1.xpose.msra.mxu0 0.0
  %4943 = vmatprep.subr.mxu0 0.0
  %4944 = vmatpush1.xpose.msra.mxu0 0.0
  %4945 = vmatprep.subr.mxu0 0.0
  %4946 = vmatpush1.xpose.msra.mxu0 0.0
  %4947 = vmatprep.subr.mxu0 0.0
  %4948 = vmatpush1.xpose.msra.mxu0 0.0
  %4949 = vmatprep.subr.mxu0 0.0
  %4950 = vmatpush1.xpose.msra.mxu0 0.0
  %4951 = vmatprep.subr.mxu0 0.0
  %4952 = vmatpush1.xpose.msra.mxu0 0.0
  %4953 = vmatprep.subr.mxu0 0.0
  %4954 = vmatpush1.xpose.msra.mxu0 0.0
  %4955 = vmatprep.subr.mxu0 0.0
  %4956 = vmatpush1.xpose.msra.mxu0 0.0
  %4957 = vmatprep.subr.mxu0 0.0
  %4958 = vmatpush1.xpose.msra.mxu0 0.0
  %4959 = vmatprep.subr.mxu0 0.0
  %4960 = vmatpush1.xpose.msra.mxu0 0.0
  %4961 = vmatprep.subr.mxu0 0.0
  %4962 = vmatpush1.xpose.msra.mxu0 0.0
  %4963 = vmatprep.subr.mxu0 0.0
  %4964 = vmatpush1.xpose.msra.mxu0 0.0
  %4965 = vmatprep.subr.mxu0 0.0
  %4966 = vmatpush1.xpose.msra.mxu0 0.0
  %4967 = vmatprep.subr.mxu0 0.0
  %4968 = vmatpush1.xpose.msra.mxu0 0.0
  %4969 = vmatprep.subr.mxu0 0.0
  %4970 = vmatpush1.xpose.msra.mxu0 0.0
  %4971 = vmatprep.subr.mxu0 0.0
  %4972 = vmatpush1.xpose.msra.mxu0 0.0
  %4973 = vmatprep.subr.mxu0 0.0
  %4974 = vmatpush1.xpose.msra.mxu0 0.0
  %4975 = vmatprep.subr.mxu0 0.0
  %4976 = vmatpush1.xpose.msra.mxu0 0.0
  %4977 = vmatprep.subr.mxu0 0.0
  %4978 = vmatpush1.xpose.msra.mxu0 0.0
  %4979 = vmatprep.subr.mxu0 0.0
  %4980 = vmatpush1.xpose.msra.mxu0 0.0
  %4981 = vmatprep.subr.mxu0 0.0
  %4982 = vmatpush1.xpose.msra.mxu0 0.0
  %4983 = vmatprep.subr.mxu0 0.0
  %4984 = vmatpush1.xpose.msra.mxu0 0.0
  %4985 = vmatprep.subr.mxu0 0.0
  %4986 = vmatpush1.xpose.msra.mxu0 0.0
  %4987 = vmatprep.subr.mxu0 0.0
  %4988 = vmatpush1.xpose.msra.mxu0 0.0
  %4989 = vmatprep.subr.mxu0 0.0
  %4990 = vmatpush1.xpose.msra.mxu0 0.0
  %4991 = vmatprep.subr.mxu0 0.0
  %4992 = vmatpush1.xpose.msra.mxu0 0.0
  %4993 = vmatprep.subr.mxu0 0.0
  %4994 = vmatpush1.xpose.msra.mxu0 0.0
  %4995 = vmatprep.mubr.f32.mxu0 0.0
  %v4996 = vand.u32 %v4699, 4294901760
  %v4997 = vsub.f32 %v4699, %v4996
  %v4998 = vand.u32 %v4997, 4294901760
  %4999 = vmatmul.mubr.f32.gmra.mrb[0].mxu0 %v4998
  %v5000 = vpop.f32.mrb[0].mxu0
  %v5001 = vadd.f32 %v4927, %v5000
  %v5002 = vpop.f32.mrb[0].mxu0
  %5003 = vdwg.mxu0
  %5004 = vmatprep.subr.mxu0 0.0
  %v5005 = vand.u32 %v4702, 4294901760
  %v5006 = vsub.f32 %v4702, %v5005
  %v5007 = vand.u32 %v5006, 4294901760
  %5008 = vmatpush1.xpose.msra.mxu0 %v5007
  %5009 = vmatprep.subr.mxu0 0.0
  %5010 = vmatpush1.xpose.msra.mxu0 0.0
  %5011 = vmatprep.subr.mxu0 0.0
  %5012 = vmatpush1.xpose.msra.mxu0 0.0
  %5013 = vmatprep.subr.mxu0 0.0
  %5014 = vmatpush1.xpose.msra.mxu0 0.0
  %5015 = vmatprep.subr.mxu0 0.0
  %5016 = vmatpush1.xpose.msra.mxu0 0.0
  %5017 = vmatprep.subr.mxu0 0.0
  %5018 = vmatpush1.xpose.msra.mxu0 0.0
  %5019 = vmatprep.subr.mxu0 0.0
  %5020 = vmatpush1.xpose.msra.mxu0 0.0
  %5021 = vmatprep.subr.mxu0 0.0
  %5022 = vmatpush1.xpose.msra.mxu0 0.0
  %5023 = vmatprep.subr.mxu0 0.0
  %5024 = vmatpush1.xpose.msra.mxu0 0.0
  %5025 = vmatprep.subr.mxu0 0.0
  %5026 = vmatpush1.xpose.msra.mxu0 0.0
  %5027 = vmatprep.subr.mxu0 0.0
  %5028 = vmatpush1.xpose.msra.mxu0 0.0
  %5029 = vmatprep.subr.mxu0 0.0
  %5030 = vmatpush1.xpose.msra.mxu0 0.0
  %5031 = vmatprep.subr.mxu0 0.0
  %5032 = vmatpush1.xpose.msra.mxu0 0.0
  %5033 = vmatprep.subr.mxu0 0.0
  %5034 = vmatpush1.xpose.msra.mxu0 0.0
  %5035 = vmatprep.subr.mxu0 0.0
  %5036 = vmatpush1.xpose.msra.mxu0 0.0
  %5037 = vmatprep.subr.mxu0 0.0
  %5038 = vmatpush1.xpose.msra.mxu0 0.0
  %5039 = vmatprep.subr.mxu0 0.0
  %5040 = vmatpush1.xpose.msra.mxu0 0.0
  %5041 = vmatprep.subr.mxu0 0.0
  %5042 = vmatpush1.xpose.msra.mxu0 0.0
  %5043 = vmatprep.subr.mxu0 0.0
  %5044 = vmatpush1.xpose.msra.mxu0 0.0
  %5045 = vmatprep.subr.mxu0 0.0
  %5046 = vmatpush1.xpose.msra.mxu0 0.0
  %5047 = vmatprep.subr.mxu0 0.0
  %5048 = vmatpush1.xpose.msra.mxu0 0.0
  %5049 = vmatprep.subr.mxu0 0.0
  %5050 = vmatpush1.xpose.msra.mxu0 0.0
  %5051 = vmatprep.subr.mxu0 0.0
  %5052 = vmatpush1.xpose.msra.mxu0 0.0
  %5053 = vmatprep.subr.mxu0 0.0
  %5054 = vmatpush1.xpose.msra.mxu0 0.0
  %5055 = vmatprep.subr.mxu0 0.0
  %5056 = vmatpush1.xpose.msra.mxu0 0.0
  %5057 = vmatprep.subr.mxu0 0.0
  %5058 = vmatpush1.xpose.msra.mxu0 0.0
  %5059 = vmatprep.subr.mxu0 0.0
  %5060 = vmatpush1.xpose.msra.mxu0 0.0
  %5061 = vmatprep.subr.mxu0 0.0
  %5062 = vmatpush1.xpose.msra.mxu0 0.0
  %5063 = vmatprep.subr.mxu0 0.0
  %5064 = vmatpush1.xpose.msra.mxu0 0.0
  %5065 = vmatprep.subr.mxu0 0.0
  %5066 = vmatpush1.xpose.msra.mxu0 0.0
  %5067 = vmatprep.subr.mxu0 0.0
  %5068 = vmatpush1.xpose.msra.mxu0 0.0
  %5069 = vmatprep.subr.mxu0 0.0
  %5070 = vmatpush1.xpose.msra.mxu0 0.0
  %5071 = vmatprep.mubr.f32.mxu0 0.0
  %v5072 = vand.u32 %v4699, 4294901760
  %5073 = vmatmul.mubr.f32.gmra.mrb[0].mxu0 %v5072
  %v5074 = vpop.f32.mrb[0].mxu0
  %v5075 = vadd.f32 %v5001, %v5074
  %v5076 = vpop.f32.mrb[0].mxu0
  %5077 = vdwg.mxu0
  %5078 = vmatprep.subr.mxu0 0.0
  %v5079 = vand.u32 %v4702, 4294901760
  %5080 = vmatpush1.xpose.msra.mxu0 %v5079
  %5081 = vmatprep.subr.mxu0 0.0
  %5082 = vmatpush1.xpose.msra.mxu0 0.0
  %5083 = vmatprep.subr.mxu0 0.0
  %5084 = vmatpush1.xpose.msra.mxu0 0.0
  %5085 = vmatprep.subr.mxu0 0.0
  %5086 = vmatpush1.xpose.msra.mxu0 0.0
  %5087 = vmatprep.subr.mxu0 0.0
  %5088 = vmatpush1.xpose.msra.mxu0 0.0
  %5089 = vmatprep.subr.mxu0 0.0
  %5090 = vmatpush1.xpose.msra.mxu0 0.0
  %5091 = vmatprep.subr.mxu0 0.0
  %5092 = vmatpush1.xpose.msra.mxu0 0.0
  %5093 = vmatprep.subr.mxu0 0.0
  %5094 = vmatpush1.xpose.msra.mxu0 0.0
  %5095 = vmatprep.subr.mxu0 0.0
  %5096 = vmatpush1.xpose.msra.mxu0 0.0
  %5097 = vmatprep.subr.mxu0 0.0
  %5098 = vmatpush1.xpose.msra.mxu0 0.0
  %5099 = vmatprep.subr.mxu0 0.0
  %5100 = vmatpush1.xpose.msra.mxu0 0.0
  %5101 = vmatprep.subr.mxu0 0.0
  %5102 = vmatpush1.xpose.msra.mxu0 0.0
  %5103 = vmatprep.subr.mxu0 0.0
  %5104 = vmatpush1.xpose.msra.mxu0 0.0
  %5105 = vmatprep.subr.mxu0 0.0
  %5106 = vmatpush1.xpose.msra.mxu0 0.0
  %5107 = vmatprep.subr.mxu0 0.0
  %5108 = vmatpush1.xpose.msra.mxu0 0.0
  %5109 = vmatprep.subr.mxu0 0.0
  %5110 = vmatpush1.xpose.msra.mxu0 0.0
  %5111 = vmatprep.subr.mxu0 0.0
  %5112 = vmatpush1.xpose.msra.mxu0 0.0
  %5113 = vmatprep.subr.mxu0 0.0
  %5114 = vmatpush1.xpose.msra.mxu0 0.0
  %5115 = vmatprep.subr.mxu0 0.0
  %5116 = vmatpush1.xpose.msra.mxu0 0.0
  %5117 = vmatprep.subr.mxu0 0.0
  %5118 = vmatpush1.xpose.msra.mxu0 0.0
  %5119 = vmatprep.subr.mxu0 0.0
  %5120 = vmatpush1.xpose.msra.mxu0 0.0
  %5121 = vmatprep.subr.mxu0 0.0
  %5122 = vmatpush1.xpose.msra.mxu0 0.0
  %5123 = vmatprep.subr.mxu0 0.0
  %5124 = vmatpush1.xpose.msra.mxu0 0.0
  %5125 = vmatprep.subr.mxu0 0.0
  %5126 = vmatpush1.xpose.msra.mxu0 0.0
  %5127 = vmatprep.subr.mxu0 0.0
  %5128 = vmatpush1.xpose.msra.mxu0 0.0
  %5129 = vmatprep.subr.mxu0 0.0
  %5130 = vmatpush1.xpose.msra.mxu0 0.0
  %5131 = vmatprep.subr.mxu0 0.0
  %5132 = vmatpush1.xpose.msra.mxu0 0.0
  %5133 = vmatprep.subr.mxu0 0.0
  %5134 = vmatpush1.xpose.msra.mxu0 0.0
  %5135 = vmatprep.subr.mxu0 0.0
  %5136 = vmatpush1.xpose.msra.mxu0 0.0
  %5137 = vmatprep.subr.mxu0 0.0
  %5138 = vmatpush1.xpose.msra.mxu0 0.0
  %5139 = vmatprep.subr.mxu0 0.0
  %5140 = vmatpush1.xpose.msra.mxu0 0.0
  %5141 = vmatprep.subr.mxu0 0.0
  %5142 = vmatpush1.xpose.msra.mxu0 0.0
  %5143 = vmatprep.mubr.f32.mxu0 0.0
  %v5144 = vand.u32 %v4699, 4294901760
  %5145 = vmatmul.mubr.f32.gmra.mrb[0].mxu0 %v5144
  %v5146 = vpop.f32.mrb[0].mxu0
  %v5147 = vadd.f32 %v5075, %v5146
  %v5148 = vpop.f32.mrb[0].mxu0
  %5149 = vdwg.mxu0
  %vm5150 = vcmask 15360
  %5151 = vst.msk [vmem:[%s3] sm:$0xff] %vm5150, %v5147
  // Predicated region
  $region14: #{eye_state_lstm_32.1} parent=0 // pred_check
    _
  $region15: #{eye_state_lstm_32.1} parent=0 // pred_check_branch
    %5153 = sbr.rel (0) target = $region17
  $region16: #{eye_state_lstm_32.1} parent=0 // pred_region
    _
  $region17: #{eye_state_lstm_32.1} parent=0 // pred_fallthru
    _
  // Predicated region
  $region18: #{eye_state_lstm_32.1} parent=0 // pred_check
    _
  $region19: #{eye_state_lstm_32.1} parent=0 // pred_check_branch
    %5155 = sbr.rel (0) target = $region21
  $region20: #{eye_state_lstm_32.1} parent=0 // pred_region
    _
  $region21: #{eye_state_lstm_32.1} parent=0 // pred_fallthru
    _

</llo_original>
